<compile_context>
chip_gen: v7x
topology: tpu7x:2x2x1
jax: 0.10.0
libtpu: 0.0.40
codegen_flags: <defaults>
</compile_context>

<pallas_src>
import jax
import jax.numpy as jnp
from jax.experimental import pallas as pl
from jax.experimental.pallas import tpu as pltpu

# ssg.ATTACKER_FEATURE_SIZE is external to the module; pick a small value.
ATTACKER_FEATURE_SIZE = 4
TARGET_NUM = 4

_LANE = 128


def _round_up(n, m):
    return ((n + m - 1) // m) * m


def _oracle_kernel(x_ref,                 # (TB, IN)            f32
                   w0_ref, b0_ref,        # (IN, H1P)  bf16,  (1, H1P)  f32
                   w1_ref, b1_ref,        # (H1P, H2P) bf16,  (1, H2P)  f32
                   w2_ref, b2_ref,        # (H2P, H1P) bf16,  (1, H1P)  f32
                   w3_ref,                # (1, H1P)   f32  -- final weight row
                   scal_ref,              # (2,) f32 SMEM: [alpha, b3]
                   out_ref):              # (TB, 1)             f32
    alpha = scal_ref[0]                   # PReLU slope (scalar from SMEM)
    b3 = scal_ref[1]                      # output bias
    cd = w0_ref.dtype                     # bf16: MXU-input / elementwise dtype
    alpha_c = alpha.astype(cd)

    def prelu_c(v):
        # PReLU as max(v, alpha*v): 2 VALU ops instead of cmp+mul+select.
        # Only valid for 0 <= alpha <= 1 (nn.PReLU default 0.25).
        # Done in bf16 so v6e/v7x pack 2 elems/lane on the (TB, 896) stage.
        vc = v.astype(cd)
        return jnp.maximum(vc, alpha_c * vc)

    x = x_ref[...].astype(cd)                                       # (TB, IN)
    h = prelu_c(jnp.dot(x, w0_ref[...],
                        preferred_element_type=jnp.float32) + b0_ref[...])
    h = prelu_c(jnp.dot(h, w1_ref[...],
                        preferred_element_type=jnp.float32) + b1_ref[...])
    a2 = jnp.dot(h, w2_ref[...],
                 preferred_element_type=jnp.float32) + b2_ref[...]  # (TB, H1P) f32
    h2 = jnp.maximum(a2, alpha * a2)                                # f32 PReLU
    # Final Linear has a single real output column: elementwise multiply by
    # the f32 weight row + lane-sum reduction (VPU + XLU, MXU-free), producing
    # the narrow (TB, 1) result directly.
    out_ref[...] = jnp.sum(h2 * w3_ref[...], axis=-1, keepdims=True) + b3


def init_params(key, target_num=TARGET_NUM, feature_count=ATTACKER_FEATURE_SIZE):
    """Init mirroring AttackerOracle's nn.Linear shapes, zero-padded to
    lane-dense sizes; hidden weights stored (in, out) bf16, final layer as an
    f32 row vector, biases f32.  Padding zeros keep the math identical
    (PReLU(0) == 0, zero rows/cols contribute nothing)."""
    observation_dim = target_num * feature_count
    input_size = observation_dim + target_num          # 20
    h1 = input_size * feature_count                    # 80
    h2 = 10 * input_size * feature_count               # 800
    h1p = _round_up(h1, _LANE)                         # 128
    h2p = _round_up(h2, _LANE)                         # 896

    def linear(k, fan_in, fan_out):
        kw, kb = jax.random.split(k)
        bound = 1.0 / (fan_in ** 0.5)
        w = jax.random.uniform(kw, (fan_in, fan_out), jnp.float32, -bound, bound)
        b = jax.random.uniform(kb, (fan_out,), jnp.float32, -bound, bound)
        return w, b

    k0, k1, k2, k3 = jax.random.split(key, 4)
    params = {}

    w0, b0 = linear(k0, input_size, h1)
    params["w0"] = (jnp.zeros((input_size, h1p), jnp.float32)
                    .at[:, :h1].set(w0).astype(jnp.bfloat16))
    params["b0"] = jnp.zeros((1, h1p), jnp.float32).at[0, :h1].set(b0)

    w1, b1 = linear(k1, h1, h2)
    params["w1"] = (jnp.zeros((h1p, h2p), jnp.float32)
                    .at[:h1, :h2].set(w1).astype(jnp.bfloat16))
    params["b1"] = jnp.zeros((1, h2p), jnp.float32).at[0, :h2].set(b1)

    w2, b2 = linear(k2, h2, h1)
    params["w2"] = (jnp.zeros((h2p, h1p), jnp.float32)
                    .at[:h2, :h1].set(w2).astype(jnp.bfloat16))
    params["b2"] = jnp.zeros((1, h1p), jnp.float32).at[0, :h1].set(b2)

    w3, b3 = linear(k3, h1, 1)
    # Final layer as an f32 row vector: kernel does VPU mul + lane-sum.
    params["w3"] = jnp.zeros((1, h1p), jnp.float32).at[0, :h1].set(w3[:, 0])
    params["b3"] = jnp.asarray(b3[0], jnp.float32)            # scalar
    params["alpha"] = jnp.asarray(0.25, jnp.float32)          # nn.PReLU default
    return params


def _jnp_forward_batch(x, params):
    """Pure-JAX forward matching the kernel's numerics (bf16 weights and
    bf16 MXU-input activations, f32 accumulation).  Also serves as the fast
    path for tiny batches where a pallas_call launch is pure overhead."""
    cd = jnp.bfloat16
    alpha = params["alpha"]
    alpha_c = alpha.astype(cd)
    f32 = lambda a: a.astype(jnp.float32)

    def prelu_c(v):
        vc = v.astype(cd)
        return f32(jnp.maximum(vc, alpha_c * vc))

    h = f32(x.astype(jnp.float32).astype(cd)) @ f32(params["w0"]) + params["b0"]
    h = prelu_c(h) @ f32(params["w1"]) + params["b1"]
    h = prelu_c(h) @ f32(params["w2"]) + params["b2"]
    h = jnp.maximum(h, alpha * h)
    return jnp.sum(h * params["w3"], axis=-1) + params["b3"]


def attacker_oracle_forward_batch(x, params, *, min_pallas_batch=64):
    """Batched Linear branch: x (B, input_size) -> scores (B,)."""
    x = x.astype(jnp.float32)
    B, in_size = x.shape

    # Tiny batches: launch latency + weight DMA dwarf the work; plain jnp.
    if B < min_pallas_batch:
        return _jnp_forward_batch(x, params)

    # Adaptive batch tile: large tiles amortize the ~0.35 us/step pipeline
    # overhead and weight re-streaming.  Keep the grid length even so the
    # "parallel" batch axis splits cleanly across v7x's two TensorCores.
    if B >= 1024:
        TB = 512
    elif B >= 256:
        TB = 256
    else:
        TB = _round_up(B, 8)
    Bp = _round_up(B, TB)
    nb = Bp // TB
    if nb > 1 and nb % 2:
        Bp = _round_up(B, 2 * TB)
        nb = Bp // TB
    if Bp != B:
        x = jnp.pad(x, ((0, Bp - B), (0, 0)))

    # [alpha, b3] as SMEM scalars: no per-step VMEM block / vector load.
    scal = jnp.stack([params["alpha"], params["b3"]]).astype(jnp.float32)

    def const_block(arr):
        # Full-array block with a constant index map: DMA'd once, resident in
        # VMEM across all batch tiles (~0.5 MB bf16 total).
        return pl.BlockSpec(arr.shape, lambda i: (0, 0))

    grid_spec = pltpu.PrefetchScalarGridSpec(
        num_scalar_prefetch=0,
        grid=(nb,),
        in_specs=[
            pl.BlockSpec((TB, in_size), lambda i: (i, 0)),
            const_block(params["w0"]), const_block(params["b0"]),
            const_block(params["w1"]), const_block(params["b1"]),
            const_block(params["w2"]), const_block(params["b2"]),
            const_block(params["w3"]),
            pl.BlockSpec(memory_space=pltpu.MemorySpace.SMEM),   # [alpha, b3]
        ],
        out_specs=pl.BlockSpec((TB, 1), lambda i: (i, 0)),       # narrow output
    )

    out = pl.pallas_call(
        _oracle_kernel,
        out_shape=jax.ShapeDtypeStruct((Bp, 1), jnp.float32),
        grid_spec=grid_spec,
        compiler_params=pltpu.CompilerParams(
            dimension_semantics=("parallel",)),   # megacore batch sharding
    )(x,
      params["w0"], params["b0"],
      params["w1"], params["b1"],
      params["w2"], params["b2"],
      params["w3"], scal)

    return out[:B, 0]


def attacker_oracle_forward(observation, action, params):
    """Single-sample Linear branch of AttackerOracle.forward (type='Linear').
    Returns shape (1,), matching the PyTorch module's `output[0]`."""
    x = jnp.concatenate(
        [observation.astype(jnp.float32), action.astype(jnp.float32)], axis=0
    ).reshape(1, -1)
    return attacker_oracle_forward_batch(x, params)[:1]


if __name__ == "__main__":
    key = jax.random.PRNGKey(0)
    key_p, key_obs, key_act = jax.random.split(key, 3)

    params = init_params(key_p)

    observation_dim = TARGET_NUM * ATTACKER_FEATURE_SIZE   # 16
    B = 512                                                # 2 batch tiles of 256

    observations = jax.random.normal(key_obs, (B, observation_dim), jnp.float32)
    actions = jax.random.normal(key_act, (B, TARGET_NUM), jnp.float32)
    x = jnp.concatenate([observations, actions], axis=1)   # (B, 20)

    scores = attacker_oracle_forward_batch(x, params)      # Pallas kernel path
    scores = jax.block_until_ready(scores)

    ref = _jnp_forward_batch(x, params)
    assert scores.shape == (B,)
    assert jnp.allclose(scores, ref, atol=1e-2, rtol=1e-2), (scores[:4], ref[:4])

    # Single-sample semantics of the original PyTorch module: returns output[0]
    # (B=1 takes the jnp fast path -- launch latency, not kernel efficiency).
    single = attacker_oracle_forward(observations[0], actions[0], params)
    single = jax.block_until_ready(single)
    assert single.shape == (1,)
    assert jnp.allclose(single, ref[0], atol=1e-2, rtol=1e-2), (single, ref[0])

    # TODO(synk): LSTM branch (type != 'Linear') depends on the external
    # getInputTensor helper and torch.nn.LSTM; only the default Linear branch
    # is implemented here.
    print("KERNEL_OK")
</pallas_src>

<mosaic_0001>
module attributes {stable_mosaic.version = 11 : i64} {
  func.func @_oracle_kernel(%arg0: i32, %arg1: memref<256x20xf32, #tpu.memory_space<vmem>>, %arg2: memref<20x128xbf16, #tpu.memory_space<vmem>>, %arg3: memref<1x128xf32, #tpu.memory_space<vmem>>, %arg4: memref<128x896xbf16, #tpu.memory_space<vmem>>, %arg5: memref<1x896xf32, #tpu.memory_space<vmem>>, %arg6: memref<896x128xbf16, #tpu.memory_space<vmem>>, %arg7: memref<1x128xf32, #tpu.memory_space<vmem>>, %arg8: memref<1x128xf32, #tpu.memory_space<vmem>>, %arg9: memref<2xf32, #tpu.memory_space<smem>>, %arg10: memref<256x1xf32, #tpu.memory_space<vmem>>) attributes {dimension_semantics = [#tpu.dimension_semantics<parallel>], iteration_bounds = array<i64: 2>, scalar_prefetch = 0 : i64, scratch_operands = 0 : i64, tpu.core_type = #tpu.core_type<tc>, window_params = [{transform_indices = @transform_0, window_bounds = array<i64: 256, 20>}, {pipeline_mode = #tpu.pipeline_mode<synchronous>, transform_indices = @transform_1, window_bounds = array<i64: 20, 128>}, {pipeline_mode = #tpu.pipeline_mode<synchronous>, transform_indices = @transform_2, window_bounds = array<i64: 1, 128>}, {pipeline_mode = #tpu.pipeline_mode<synchronous>, transform_indices = @transform_3, window_bounds = array<i64: 128, 896>}, {pipeline_mode = #tpu.pipeline_mode<synchronous>, transform_indices = @transform_4, window_bounds = array<i64: 1, 896>}, {pipeline_mode = #tpu.pipeline_mode<synchronous>, transform_indices = @transform_5, window_bounds = array<i64: 896, 128>}, {pipeline_mode = #tpu.pipeline_mode<synchronous>, transform_indices = @transform_6, window_bounds = array<i64: 1, 128>}, {pipeline_mode = #tpu.pipeline_mode<synchronous>, transform_indices = @transform_7, window_bounds = array<i64: 1, 128>}, {transform_indices = @transform_8, window_bounds = array<i64: 2>}, {transform_indices = @transform_9, window_bounds = array<i64: 256, 1>}]} {
    %c0 = arith.constant 0 : index
    %0 = memref.load %arg9[%c0] : memref<2xf32, #tpu.memory_space<smem>>
    %c1 = arith.constant 1 : index
    %1 = memref.load %arg9[%c1] : memref<2xf32, #tpu.memory_space<smem>>
    %2 = arith.truncf %0 : f32 to bf16
    %c0_0 = arith.constant 0 : index
    %c0_1 = arith.constant 0 : index
    %3 = vector.load %arg1[%c0_0, %c0_1] : memref<256x20xf32, #tpu.memory_space<vmem>>, vector<256x20xf32>
    %4 = arith.truncf %3 : vector<256x20xf32> to vector<256x20xbf16>
    %c0_2 = arith.constant 0 : index
    %c0_3 = arith.constant 0 : index
    %5 = vector.load %arg2[%c0_2, %c0_3] : memref<20x128xbf16, #tpu.memory_space<vmem>>, vector<20x128xbf16>
    %cst = arith.constant dense<0.000000e+00> : vector<256x128xf32>
    %6 = tpu.matmul %4, %5, %cst {dimension_numbers = #tpu.dot_dimension_numbers<[1], [0], [0], [1], [0, 0, 1, 1], [], []>} : vector<256x20xbf16>, vector<20x128xbf16>, vector<256x128xf32> -> vector<256x128xf32>
    %c0_4 = arith.constant 0 : index
    %c0_5 = arith.constant 0 : index
    %7 = vector.load %arg3[%c0_4, %c0_5] : memref<1x128xf32, #tpu.memory_space<vmem>>, vector<1x128xf32>
    %8 = vector.broadcast %7 : vector<1x128xf32> to vector<256x128xf32>
    %9 = arith.addf %6, %8 : vector<256x128xf32>
    %10 = arith.truncf %9 : vector<256x128xf32> to vector<256x128xbf16>
    %11 = vector.broadcast %2 : bf16 to vector<256x128xbf16>
    %12 = arith.mulf %11, %10 : vector<256x128xbf16>
    %13 = arith.maximumf %10, %12 : vector<256x128xbf16>
    %c0_6 = arith.constant 0 : index
    %c0_7 = arith.constant 0 : index
    %14 = vector.load %arg4[%c0_6, %c0_7] : memref<128x896xbf16, #tpu.memory_space<vmem>>, vector<128x896xbf16>
    %cst_8 = arith.constant dense<0.000000e+00> : vector<256x896xf32>
    %15 = tpu.matmul %13, %14, %cst_8 {dimension_numbers = #tpu.dot_dimension_numbers<[1], [0], [0], [1], [0, 0, 1, 1], [], []>} : vector<256x128xbf16>, vector<128x896xbf16>, vector<256x896xf32> -> vector<256x896xf32>
    %c0_9 = arith.constant 0 : index
    %c0_10 = arith.constant 0 : index
    %16 = vector.load %arg5[%c0_9, %c0_10] : memref<1x896xf32, #tpu.memory_space<vmem>>, vector<1x896xf32>
    %17 = vector.broadcast %16 : vector<1x896xf32> to vector<256x896xf32>
    %18 = arith.addf %15, %17 : vector<256x896xf32>
    %19 = arith.truncf %18 : vector<256x896xf32> to vector<256x896xbf16>
    %20 = vector.broadcast %2 : bf16 to vector<256x896xbf16>
    %21 = arith.mulf %20, %19 : vector<256x896xbf16>
    %22 = arith.maximumf %19, %21 : vector<256x896xbf16>
    %c0_11 = arith.constant 0 : index
    %c0_12 = arith.constant 0 : index
    %23 = vector.load %arg6[%c0_11, %c0_12] : memref<896x128xbf16, #tpu.memory_space<vmem>>, vector<896x128xbf16>
    %cst_13 = arith.constant dense<0.000000e+00> : vector<256x128xf32>
    %24 = tpu.matmul %22, %23, %cst_13 {dimension_numbers = #tpu.dot_dimension_numbers<[1], [0], [0], [1], [0, 0, 1, 1], [], []>} : vector<256x896xbf16>, vector<896x128xbf16>, vector<256x128xf32> -> vector<256x128xf32>
    %c0_14 = arith.constant 0 : index
    %c0_15 = arith.constant 0 : index
    %25 = vector.load %arg7[%c0_14, %c0_15] : memref<1x128xf32, #tpu.memory_space<vmem>>, vector<1x128xf32>
    %26 = vector.broadcast %25 : vector<1x128xf32> to vector<256x128xf32>
    %27 = arith.addf %24, %26 : vector<256x128xf32>
    %28 = vector.broadcast %0 : f32 to vector<256x128xf32>
    %29 = arith.mulf %28, %27 : vector<256x128xf32>
    %30 = arith.maximumf %27, %29 : vector<256x128xf32>
    %c0_16 = arith.constant 0 : index
    %c0_17 = arith.constant 0 : index
    %31 = vector.load %arg8[%c0_16, %c0_17] : memref<1x128xf32, #tpu.memory_space<vmem>>, vector<1x128xf32>
    %32 = vector.broadcast %31 : vector<1x128xf32> to vector<256x128xf32>
    %33 = arith.mulf %30, %32 : vector<256x128xf32>
    %cst_18 = arith.constant dense<0.000000e+00> : vector<256xf32>
    %34 = vector.multi_reduction <add>, %33, %cst_18 [1] : vector<256x128xf32> to vector<256xf32>
    %35 = vector.shape_cast %34 : vector<256xf32> to vector<256x1xf32>
    %36 = vector.broadcast %1 : f32 to vector<256x1xf32>
    %37 = arith.addf %35, %36 : vector<256x1xf32>
    %c0_19 = arith.constant 0 : index
    %c0_20 = arith.constant 0 : index
    %38 = vector.load %arg10[%c0_19, %c0_20] : memref<256x1xf32, #tpu.memory_space<vmem>>, vector<256x1xf32>
    tpu.vector_store %arg10[%c0_19, %c0_20], %37 {strides = array<i32>} : memref<256x1xf32, #tpu.memory_space<vmem>>, vector<256x1xf32>,
    return
  }
  func.func @transform_0(%arg0: i32) -> (i32, i32) {
    %c0_i32 = arith.constant 0 : i32
    %c0_i32_0 = arith.constant 0 : i32
    return %arg0, %c0_i32 : i32, i32
  }
  func.func @transform_1(%arg0: i32) -> (i32, i32) {
    %c0_i32 = arith.constant 0 : i32
    %c0_i32_0 = arith.constant 0 : i32
    %c0_i32_1 = arith.constant 0 : i32
    return %c0_i32, %c0_i32_0 : i32, i32
  }
  func.func @transform_2(%arg0: i32) -> (i32, i32) {
    %c0_i32 = arith.constant 0 : i32
    %c0_i32_0 = arith.constant 0 : i32
    %c0_i32_1 = arith.constant 0 : i32
    return %c0_i32, %c0_i32_0 : i32, i32
  }
  func.func @transform_3(%arg0: i32) -> (i32, i32) {
    %c0_i32 = arith.constant 0 : i32
    %c0_i32_0 = arith.constant 0 : i32
    %c0_i32_1 = arith.constant 0 : i32
    return %c0_i32, %c0_i32_0 : i32, i32
  }
  func.func @transform_4(%arg0: i32) -> (i32, i32) {
    %c0_i32 = arith.constant 0 : i32
    %c0_i32_0 = arith.constant 0 : i32
    %c0_i32_1 = arith.constant 0 : i32
    return %c0_i32, %c0_i32_0 : i32, i32
  }
  func.func @transform_5(%arg0: i32) -> (i32, i32) {
    %c0_i32 = arith.constant 0 : i32
    %c0_i32_0 = arith.constant 0 : i32
    %c0_i32_1 = arith.constant 0 : i32
    return %c0_i32, %c0_i32_0 : i32, i32
  }
  func.func @transform_6(%arg0: i32) -> (i32, i32) {
    %c0_i32 = arith.constant 0 : i32
    %c0_i32_0 = arith.constant 0 : i32
    %c0_i32_1 = arith.constant 0 : i32
    return %c0_i32, %c0_i32_0 : i32, i32
  }
  func.func @transform_7(%arg0: i32) -> (i32, i32) {
    %c0_i32 = arith.constant 0 : i32
    %c0_i32_0 = arith.constant 0 : i32
    %c0_i32_1 = arith.constant 0 : i32
    return %c0_i32, %c0_i32_0 : i32, i32
  }
  func.func @transform_8(%arg0: i32) -> i32 {
    %c0_i32 = arith.constant 0 : i32
    %c0_i32_0 = arith.constant 0 : i32
    return %c0_i32 : i32
  }
  func.func @transform_9(%arg0: i32) -> (i32, i32) {
    %c0_i32 = arith.constant 0 : i32
    %c0_i32_0 = arith.constant 0 : i32
    return %arg0, %c0_i32 : i32, i32
  }
}

</mosaic_0001>

<llo_original>
// kernel: tpu_custom_call.1
$region0: #{tpu_custom_call.1}
  #allocation0 [shape = 'u32[]', space=smem, size = 0x4, offset = 0x4, fixed_abs, tag = 'smem constant byte address 0x4 - core index']
  #allocation1 [shape = 'u32[144,128]{1,0:T(1,128)}', space=vmem, size = 0x12000, scoped, tag = 'internal scratch']
  %s0 = inlined_call_operand.vmem [shape: f32[512,20], index: 0, kind: input, shape index: {}]
  %s1 = inlined_call_operand.vmem [shape: bf16[20,128], index: 1, kind: input, shape index: {}]
  %s2 = inlined_call_operand.vmem [shape: f32[1,128], index: 2, kind: input, shape index: {}]
  %s3 = inlined_call_operand.vmem [shape: bf16[128,896], index: 3, kind: input, shape index: {}]
  %s4 = inlined_call_operand.vmem [shape: f32[1,896], index: 4, kind: input, shape index: {}]
  %s5 = inlined_call_operand.hbm [shape: bf16[896,128], index: 5, kind: input, shape index: {}]
  %s6 = inlined_call_operand.vmem [shape: f32[1,128], index: 6, kind: input, shape index: {}]
  %s7 = inlined_call_operand.vmem [shape: f32[1,128], index: 7, kind: input, shape index: {}]
  %s8 = inlined_call_operand.vmem [shape: f32[2], index: 8, kind: input, shape index: {}]
  %s9 = inlined_call_operand.vmem [shape: f32[512,1], index: 9, kind: output, shape index: {}]
  %s10 = sld [smem:[#allocation0]]
  $region77: #{tpu_custom_call.1} parent=0
    _
  %s12 = ssub.s32 1, %s10
  %s13 = scalar_select 0, %s12, %s10
  $region1: #{tpu_custom_call.1} parent=0
    #allocation2 [shape = 'u8[229376]{0}', space=vmem, size = 0x38000, scoped, tag = 'input window, operand 5, single buffered']
    #allocation3 [shape = 's32[2]{0}', space=sflag, size = 0x8, scoped, tag = 'scoped memory for tpu_custom_call.1']
    #allocation4 [shape = 's32[2]{0}', space=sflag, size = 0x8, scoped, tag = 'scoped memory for tpu_custom_call.1']
    #allocation5 [shape = 'u8[512]{0}', space=smem, size = 0x200, scoped, tag = 'input window, operand 8, single buffered']
    %14 = vsyncpa [#allocation3], 0
    %15 = vsyncpa [#allocation4], 0
    loop: start=0, step=1, limit=4
    $region2: #{tpu_custom_call.1} parent=1 // loop_pre_header
      _
    $region3: #{tpu_custom_call.1} parent=1 // loop_header
      %s17 = sphi 0, %s21
      %p18 = scmp.ge.s32.totalorder %s17, 4
      %s27 = sphi 0, %s29
      %s30 = sphi 0, %s27
      %s31 = sphi 0, %s30
      %s47 = sphi 0, %s31
      %s51 = sphi 0, %s51
      %s53 = sphi 0, %s51
      %s54 = sphi 0, %s53
      %s68 = sphi 0, %s54
      %s72 = sphi 0, %s72
      %s74 = sphi 0, %s72
      %s75 = sphi 0, %s74
      %s89 = sphi 0, %s75
      %s93 = sphi 0, %s93
      %s95 = sphi 0, %s93
      %s96 = sphi 0, %s95
      %s110 = sphi 0, %s96
      %s114 = sphi 0, %s114
      %s116 = sphi 0, %s114
      %s117 = sphi 0, %s116
      %s131 = sphi 0, %s117
      %s135 = sphi 0, %s135
      %s137 = sphi 0, %s135
      %s138 = sphi 0, %s137
      %s152 = sphi 0, %s138
      %s156 = sphi 0, %s156
      %s158 = sphi 0, %s156
      %s159 = sphi 0, %s158
      %s173 = sphi 0, %s159
      %s177 = sphi 0, %s177
      %s179 = sphi 0, %s177
      %s180 = sphi 0, %s179
      %s194 = sphi 0, %s180
      %s198 = sphi 0, %s198
      %s200 = sphi 0, %s198
      %s201 = sphi 0, %s200
      %s215 = sphi 0, %s201
      %s221 = sphi 0, %s223
      %s224 = sphi 0, %s221
      %s225 = sphi 0, %s224
      %s241 = sphi 0, %s225
    $region4: #{tpu_custom_call.1} parent=1 // loop_header_branch
      %20 = sbr.rel (%p18) target = $region8
    $region5: #{tpu_custom_call.1} parent=1 // loop_body
      %s22 = ssub.s32 %s17, 1
      %s23 = ssub.s32 %s17, 2
      %s24 = sadd.s32 %s17, 1
      %s25 = ssub.s32 %s17, %s24
      %p26 = scmp.eq.s32.totalorder %s25, 0
      %s28 = sadd.s32 %s27, 1
      %s29 = scalar_select %p26, %s27, %s28
      %p32 = pneg %p26
      %p33 = scmp.eq.s32.totalorder %s17, 1
      %p34 = por %p32, %p33
      %p35 = scmp.ne.s32.totalorder %s27, %s30
      %p36 = scmp.eq.s32.totalorder %s17, 0
      %p37 = por %p35, %p36
      %p38 = scmp.ne.s32.totalorder %s27, %s30
      %p39 = scmp.eq.s32.totalorder %s22, 1
      %p40 = por %p38, %p39
      %p41 = scmp.ne.s32.totalorder %s30, %s31
      %p42 = scmp.eq.s32.totalorder %s22, 0
      %p43 = por %p41, %p42
      %p44 = scmp.ne.s32.totalorder %s30, %s31
      %p45 = scmp.eq.s32.totalorder %s23, 1
      %p46 = por %p44, %p45
      %p48 = scmp.ne.s32.totalorder %s31, %s47
      %p49 = scmp.eq.s32.totalorder %s23, 0
      %p50 = por %p48, %p49
      %s52 = sadd.s32 %s51, 1
      %p55 = scmp.eq.s32.totalorder %s17, 1
      %p56 = scmp.ne.s32.totalorder %s51, %s53
      %p57 = scmp.eq.s32.totalorder %s17, 0
      %p58 = por %p56, %p57
      %p59 = scmp.ne.s32.totalorder %s51, %s53
      %p60 = scmp.eq.s32.totalorder %s22, 1
      %p61 = por %p59, %p60
      %p62 = scmp.ne.s32.totalorder %s53, %s54
      %p63 = scmp.eq.s32.totalorder %s22, 0
      %p64 = por %p62, %p63
      %p65 = scmp.ne.s32.totalorder %s53, %s54
      %p66 = scmp.eq.s32.totalorder %s23, 1
      %p67 = por %p65, %p66
      %p69 = scmp.ne.s32.totalorder %s54, %s68
      %p70 = scmp.eq.s32.totalorder %s23, 0
      %p71 = por %p69, %p70
      %s73 = sadd.s32 %s72, 1
      %p76 = scmp.eq.s32.totalorder %s17, 1
      %p77 = scmp.ne.s32.totalorder %s72, %s74
      %p78 = scmp.eq.s32.totalorder %s17, 0
      %p79 = por %p77, %p78
      %p80 = scmp.ne.s32.totalorder %s72, %s74
      %p81 = scmp.eq.s32.totalorder %s22, 1
      %p82 = por %p80, %p81
      %p83 = scmp.ne.s32.totalorder %s74, %s75
      %p84 = scmp.eq.s32.totalorder %s22, 0
      %p85 = por %p83, %p84
      %p86 = scmp.ne.s32.totalorder %s74, %s75
      %p87 = scmp.eq.s32.totalorder %s23, 1
      %p88 = por %p86, %p87
      %p90 = scmp.ne.s32.totalorder %s75, %s89
      %p91 = scmp.eq.s32.totalorder %s23, 0
      %p92 = por %p90, %p91
      %s94 = sadd.s32 %s93, 1
      %p97 = scmp.eq.s32.totalorder %s17, 1
      %p98 = scmp.ne.s32.totalorder %s93, %s95
      %p99 = scmp.eq.s32.totalorder %s17, 0
      %p100 = por %p98, %p99
      %p101 = scmp.ne.s32.totalorder %s93, %s95
      %p102 = scmp.eq.s32.totalorder %s22, 1
      %p103 = por %p101, %p102
      %p104 = scmp.ne.s32.totalorder %s95, %s96
      %p105 = scmp.eq.s32.totalorder %s22, 0
      %p106 = por %p104, %p105
      %p107 = scmp.ne.s32.totalorder %s95, %s96
      %p108 = scmp.eq.s32.totalorder %s23, 1
      %p109 = por %p107, %p108
      %p111 = scmp.ne.s32.totalorder %s96, %s110
      %p112 = scmp.eq.s32.totalorder %s23, 0
      %p113 = por %p111, %p112
      %s115 = sadd.s32 %s114, 1
      %p118 = scmp.eq.s32.totalorder %s17, 1
      %p119 = scmp.ne.s32.totalorder %s114, %s116
      %p120 = scmp.eq.s32.totalorder %s17, 0
      %p121 = por %p119, %p120
      %p122 = scmp.ne.s32.totalorder %s114, %s116
      %p123 = scmp.eq.s32.totalorder %s22, 1
      %p124 = por %p122, %p123
      %p125 = scmp.ne.s32.totalorder %s116, %s117
      %p126 = scmp.eq.s32.totalorder %s22, 0
      %p127 = por %p125, %p126
      %p128 = scmp.ne.s32.totalorder %s116, %s117
      %p129 = scmp.eq.s32.totalorder %s23, 1
      %p130 = por %p128, %p129
      %p132 = scmp.ne.s32.totalorder %s117, %s131
      %p133 = scmp.eq.s32.totalorder %s23, 0
      %p134 = por %p132, %p133
      %s136 = sadd.s32 %s135, 1
      %p139 = scmp.eq.s32.totalorder %s17, 1
      %p140 = scmp.ne.s32.totalorder %s135, %s137
      %p141 = scmp.eq.s32.totalorder %s17, 0
      %p142 = por %p140, %p141
      %p143 = scmp.ne.s32.totalorder %s135, %s137
      %p144 = scmp.eq.s32.totalorder %s22, 1
      %p145 = por %p143, %p144
      %p146 = scmp.ne.s32.totalorder %s137, %s138
      %p147 = scmp.eq.s32.totalorder %s22, 0
      %p148 = por %p146, %p147
      %p149 = scmp.ne.s32.totalorder %s137, %s138
      %p150 = scmp.eq.s32.totalorder %s23, 1
      %p151 = por %p149, %p150
      %p153 = scmp.ne.s32.totalorder %s138, %s152
      %p154 = scmp.eq.s32.totalorder %s23, 0
      %p155 = por %p153, %p154
      %s157 = sadd.s32 %s156, 1
      %p160 = scmp.eq.s32.totalorder %s17, 1
      %p161 = scmp.ne.s32.totalorder %s156, %s158
      %p162 = scmp.eq.s32.totalorder %s17, 0
      %p163 = por %p161, %p162
      %p164 = scmp.ne.s32.totalorder %s156, %s158
      %p165 = scmp.eq.s32.totalorder %s22, 1
      %p166 = por %p164, %p165
      %p167 = scmp.ne.s32.totalorder %s158, %s159
      %p168 = scmp.eq.s32.totalorder %s22, 0
      %p169 = por %p167, %p168
      %p170 = scmp.ne.s32.totalorder %s158, %s159
      %p171 = scmp.eq.s32.totalorder %s23, 1
      %p172 = por %p170, %p171
      %p174 = scmp.ne.s32.totalorder %s159, %s173
      %p175 = scmp.eq.s32.totalorder %s23, 0
      %p176 = por %p174, %p175
      %s178 = sadd.s32 %s177, 1
      %p181 = scmp.eq.s32.totalorder %s17, 1
      %p182 = scmp.ne.s32.totalorder %s177, %s179
      %p183 = scmp.eq.s32.totalorder %s17, 0
      %p184 = por %p182, %p183
      %p185 = scmp.ne.s32.totalorder %s177, %s179
      %p186 = scmp.eq.s32.totalorder %s22, 1
      %p187 = por %p185, %p186
      %p188 = scmp.ne.s32.totalorder %s179, %s180
      %p189 = scmp.eq.s32.totalorder %s22, 0
      %p190 = por %p188, %p189
      %p191 = scmp.ne.s32.totalorder %s179, %s180
      %p192 = scmp.eq.s32.totalorder %s23, 1
      %p193 = por %p191, %p192
      %p195 = scmp.ne.s32.totalorder %s180, %s194
      %p196 = scmp.eq.s32.totalorder %s23, 0
      %p197 = por %p195, %p196
      %s199 = sadd.s32 %s198, 1
      %p202 = scmp.eq.s32.totalorder %s17, 1
      %p203 = scmp.ne.s32.totalorder %s198, %s200
      %p204 = scmp.eq.s32.totalorder %s17, 0
      %p205 = por %p203, %p204
      %p206 = scmp.ne.s32.totalorder %s198, %s200
      %p207 = scmp.eq.s32.totalorder %s22, 1
      %p208 = por %p206, %p207
      %p209 = scmp.ne.s32.totalorder %s200, %s201
      %p210 = scmp.eq.s32.totalorder %s22, 0
      %p211 = por %p209, %p210
      %p212 = scmp.ne.s32.totalorder %s200, %s201
      %p213 = scmp.eq.s32.totalorder %s23, 1
      %p214 = por %p212, %p213
      %p216 = scmp.ne.s32.totalorder %s201, %s215
      %p217 = scmp.eq.s32.totalorder %s23, 0
      %p218 = por %p216, %p217
      %s219 = ssub.s32 %s17, %s24
      %p220 = scmp.eq.s32.totalorder %s219, 0
      %s222 = sadd.s32 %s221, 1
      %s223 = scalar_select %p220, %s221, %s222
      %p226 = pneg %p220
      %p227 = scmp.eq.s32.totalorder %s17, 1
      %p228 = por %p226, %p227
      %p229 = scmp.ne.s32.totalorder %s221, %s224
      %p230 = scmp.eq.s32.totalorder %s17, 0
      %p231 = por %p229, %p230
      %p232 = scmp.ne.s32.totalorder %s221, %s224
      %p233 = scmp.eq.s32.totalorder %s22, 1
      %p234 = por %p232, %p233
      %p235 = scmp.ne.s32.totalorder %s224, %s225
      %p236 = scmp.eq.s32.totalorder %s22, 0
      %p237 = por %p235, %p236
      %p238 = scmp.ne.s32.totalorder %s224, %s225
      %p239 = scmp.eq.s32.totalorder %s23, 1
      %p240 = por %p238, %p239
      %p242 = scmp.ne.s32.totalorder %s225, %s241
      %p243 = scmp.eq.s32.totalorder %s23, 0
      %p244 = por %p242, %p243
      %p245 = scmp.le.s32.totalorder 1, %s17
      %p246 = scmp.lt.s32.totalorder %s17, 3
      %p247 = pnand %p245, %p246
      %p248 = pneg %p247
      // Predicated region
      $region9: #{tpu_custom_call.1} parent=5 // pred_check
        _
      $region10: #{tpu_custom_call.1} parent=5 // pred_check_branch
        %250 = sbr.rel (%p247) target = $region12
      $region11: #{tpu_custom_call.1} parent=5 // pred_region
        %s251 = ssub.s32 %s17, 1
        // Predicated region
        $region13: #{tpu_custom_call.1} parent=11 // pred_check
          %p252 = pneg %p64
        $region14: #{tpu_custom_call.1} parent=11 // pred_check_branch
          %254 = sbr.rel (%p252) target = $region16
        $region15: #{tpu_custom_call.1} parent=11 // pred_region
          _
        $region16: #{tpu_custom_call.1} parent=11 // pred_fallthru
          _
        // Predicated region
        $region17: #{tpu_custom_call.1} parent=11 // pred_check
          %p255 = pneg %p85
        $region18: #{tpu_custom_call.1} parent=11 // pred_check_branch
          %257 = sbr.rel (%p255) target = $region20
        $region19: #{tpu_custom_call.1} parent=11 // pred_region
          _
        $region20: #{tpu_custom_call.1} parent=11 // pred_fallthru
          _
        // Predicated region
        $region21: #{tpu_custom_call.1} parent=11 // pred_check
          %p258 = pneg %p106
        $region22: #{tpu_custom_call.1} parent=11 // pred_check_branch
          %260 = sbr.rel (%p258) target = $region24
        $region23: #{tpu_custom_call.1} parent=11 // pred_region
          _
        $region24: #{tpu_custom_call.1} parent=11 // pred_fallthru
          _
        // Predicated region
        $region25: #{tpu_custom_call.1} parent=11 // pred_check
          %p261 = pneg %p127
        $region26: #{tpu_custom_call.1} parent=11 // pred_check_branch
          %263 = sbr.rel (%p261) target = $region28
        $region27: #{tpu_custom_call.1} parent=11 // pred_region
          _
        $region28: #{tpu_custom_call.1} parent=11 // pred_fallthru
          _
        // Predicated region
        $region29: #{tpu_custom_call.1} parent=11 // pred_check
          %p264 = pneg %p148
        $region30: #{tpu_custom_call.1} parent=11 // pred_check_branch
          %266 = sbr.rel (%p264) target = $region32
        $region31: #{tpu_custom_call.1} parent=11 // pred_region
          %s268 = ssub.s32 7168, 7168
          %269 = vsyncadd [#allocation3], %s268
          %s270 = sshll.u32 [#allocation2], 4
          %s271 = int_to_ptr.vmem [resolvable:$true] %s270
          %276 = dma.hbm_to_vmem [thread:$0]  %s5, 7168, %s271, [#allocation3], 64, 64, 4
        $region32: #{tpu_custom_call.1} parent=11 // pred_fallthru
          _
        // Predicated region
        $region33: #{tpu_custom_call.1} parent=11 // pred_check
          %p277 = pneg %p169
        $region34: #{tpu_custom_call.1} parent=11 // pred_check_branch
          %279 = sbr.rel (%p277) target = $region36
        $region35: #{tpu_custom_call.1} parent=11 // pred_region
          _
        $region36: #{tpu_custom_call.1} parent=11 // pred_fallthru
          _
        // Predicated region
        $region37: #{tpu_custom_call.1} parent=11 // pred_check
          %p280 = pneg %p190
        $region38: #{tpu_custom_call.1} parent=11 // pred_check_branch
          %282 = sbr.rel (%p280) target = $region40
        $region39: #{tpu_custom_call.1} parent=11 // pred_region
          _
        $region40: #{tpu_custom_call.1} parent=11 // pred_fallthru
          _
        // Predicated region
        $region41: #{tpu_custom_call.1} parent=11 // pred_check
          %p283 = pneg %p211
        $region42: #{tpu_custom_call.1} parent=11 // pred_check_branch
          %285 = sbr.rel (%p283) target = $region44
        $region43: #{tpu_custom_call.1} parent=11 // pred_region
          %s287 = ssub.s32 16, 16
          %288 = vsyncadd [#allocation4], %s287
          %s290 = sshll.u32 %s8, 4
          %s291 = int_to_ptr.vmem [resolvable:$true] %s290
          %293 = dma.vmem_to_smem %s291, 16, [#allocation5], [#allocation4]
        $region44: #{tpu_custom_call.1} parent=11 // pred_fallthru
          _
      $region12: #{tpu_custom_call.1} parent=5 // pred_fallthru
        _
      %p294 = scmp.lt.s32.totalorder %s17, 2
      // Predicated region
      $region45: #{tpu_custom_call.1} parent=5 // pred_check
        %p295 = pneg %p294
      $region46: #{tpu_custom_call.1} parent=5 // pred_check_branch
        %297 = sbr.rel (%p295) target = $region48
      $region47: #{tpu_custom_call.1} parent=5 // pred_region
        // Predicated region
        $region49: #{tpu_custom_call.1} parent=47 // pred_check
          %p298 = pneg %p37
        $region50: #{tpu_custom_call.1} parent=47 // pred_check_branch
          %300 = sbr.rel (%p298) target = $region52
        $region51: #{tpu_custom_call.1} parent=47 // pred_region
          %s301 = smul.u32 32, %s17
          %p302 = scmp.lt.s32.totalorder %s301, 63
          %s303 = scalar_select %p302, %s301, 63
          %s304 = smul.addr %s303, 8
          %s305 = scalar_lea.vmem %s0, %s304
          %s306 = smul.u32 32, %s17
        $region52: #{tpu_custom_call.1} parent=47 // pred_fallthru
          _
      $region48: #{tpu_custom_call.1} parent=5 // pred_fallthru
        _
      %p307 = scmp.le.s32.totalorder 1, %s17
      %p308 = scmp.lt.s32.totalorder %s17, 3
      %p309 = pnand %p307, %p308
      %p310 = pneg %p309
      // Predicated region
      $region53: #{tpu_custom_call.1} parent=5 // pred_check
        _
      $region54: #{tpu_custom_call.1} parent=5 // pred_check_branch
        %312 = sbr.rel (%p309) target = $region56
      $region55: #{tpu_custom_call.1} parent=5 // pred_region
        %s313 = ssub.s32 %s17, 1
        // Predicated region
        $region57: #{tpu_custom_call.1} parent=55 // pred_check
          %p314 = pneg %p148
        $region58: #{tpu_custom_call.1} parent=55 // pred_check_branch
          %316 = sbr.rel (%p314) target = $region60
        $region59: #{tpu_custom_call.1} parent=55 // pred_region
          %317 = dma.done [#allocation3], 7168
        $region60: #{tpu_custom_call.1} parent=55 // pred_fallthru
          _
        // Predicated region
        $region61: #{tpu_custom_call.1} parent=55 // pred_check
          %p318 = pneg %p211
        $region62: #{tpu_custom_call.1} parent=55 // pred_check_branch
          %320 = sbr.rel (%p318) target = $region64
        $region63: #{tpu_custom_call.1} parent=55 // pred_region
          %321 = dma.done [#allocation4], 16
        $region64: #{tpu_custom_call.1} parent=55 // pred_fallthru
          _
        %322 = sfence
        %s323 = smul.u32 32, %s22
        %p324 = scmp.lt.s32.totalorder %s323, 63
        %s325 = scalar_select %p324, %s323, 63
        %s326 = smul.addr %s325, 8
        %s327 = scalar_lea.vmem %s0, %s326
        %p328 = pneg %p43
        %p329 = pneg %p40
        %p330 = pneg %p64
        %p331 = pneg %p61
        %p332 = pneg %p85
        %p333 = pneg %p82
        %p334 = pneg %p106
        %p335 = pneg %p103
        %p336 = pneg %p127
        %p337 = pneg %p124
        %p338 = pneg %p148
        %p339 = pneg %p145
        %p340 = pneg %p169
        %p341 = pneg %p166
        %p342 = pneg %p190
        %p343 = pneg %p187
        %p344 = pneg %p211
        %p345 = pneg %p208
        %p346 = pneg %p237
        %p347 = pneg %p234
        %s348 = smul.u32 32, %s22
        %p349 = scmp.lt.s32.totalorder %s348, 63
        %s350 = scalar_select %p349, %s348, 63
        %s351 = smul.addr %s350, 8
        %s352 = scalar_lea.vmem %s9, %s351
        %s353 = smul.u32 32, %s22
        %p354 = scmp.lt.s32.totalorder %s353, 63
        %s355 = scalar_select %p354, %s353, 63
        %s356 = smul.addr %s355, 8
        %s357 = scalar_lea.vmem %s0, %s356
        %s358 = smul.u32 32, %s22
        %s359 = smul.u32 32, %s22
        %p360 = scmp.lt.s32.totalorder %s359, 63
        %s361 = scalar_select %p360, %s359, 63
        %s362 = smul.addr %s361, 8
        %s363 = scalar_lea.vmem %s9, %s362
        %s364 = smul.u32 32, %s22
        %s366 = sld [smem:[#allocation5]]
        %s367 = sld [smem:[#allocation5 + $0x1]]
        %p369 = scmp.ne.f32.partialorder %s366, %s366
        %s370 = sshrl.u32 %s366, 16
        %s371 = sand.u32 %s370, 1
        %s372 = sadd.s32 32767, %s371
        %s373 = sadd.s32 %s366, %s372
        %s374 = sand.u32 %s373, 4294901760
        %s375 = scalar_select %p369, 2143289344, %s374
        %s377 = sshrl.u32 %s375, 16
        %v378 = vld [vmem:[%s357] sm:$0xff]
        %v379 = vld [vmem:[%s357 + $0x8] sm:$0xff]
        %v380 = vld [vmem:[%s357 + $0x10] sm:$0xff]
        %v381 = vld [vmem:[%s357 + $0x18] sm:$0xff]
        %v382 = vld [vmem:[%s357 + $0x20] sm:$0xff]
        %v383 = vld [vmem:[%s357 + $0x28] sm:$0xff]
        %v384 = vld [vmem:[%s357 + $0x30] sm:$0xff]
        %v385 = vld [vmem:[%s357 + $0x38] sm:$0xff]
        %v386 = vld [vmem:[%s357 + $0x40] sm:$0xff]
        %v387 = vld [vmem:[%s357 + $0x48] sm:$0xff]
        %v388 = vld [vmem:[%s357 + $0x50] sm:$0xff]
        %v389 = vld [vmem:[%s357 + $0x58] sm:$0xff]
        %v390 = vld [vmem:[%s357 + $0x60] sm:$0xff]
        %v391 = vld [vmem:[%s357 + $0x68] sm:$0xff]
        %v392 = vld [vmem:[%s357 + $0x70] sm:$0xff]
        %v393 = vld [vmem:[%s357 + $0x78] sm:$0xff]
        %v394 = vld [vmem:[%s357 + $0x80] sm:$0xff]
        %v395 = vld [vmem:[%s357 + $0x88] sm:$0xff]
        %v396 = vld [vmem:[%s357 + $0x90] sm:$0xff]
        %v397 = vld [vmem:[%s357 + $0x98] sm:$0xff]
        %v398 = vld [vmem:[%s357 + $0xa0] sm:$0xff]
        %v399 = vld [vmem:[%s357 + $0xa8] sm:$0xff]
        %v400 = vld [vmem:[%s357 + $0xb0] sm:$0xff]
        %v401 = vld [vmem:[%s357 + $0xb8] sm:$0xff]
        %v402 = vld [vmem:[%s357 + $0xc0] sm:$0xff]
        %v403 = vld [vmem:[%s357 + $0xc8] sm:$0xff]
        %v404 = vld [vmem:[%s357 + $0xd0] sm:$0xff]
        %v405 = vld [vmem:[%s357 + $0xd8] sm:$0xff]
        %v406 = vld [vmem:[%s357 + $0xe0] sm:$0xff]
        %v407 = vld [vmem:[%s357 + $0xe8] sm:$0xff]
        %v408 = vld [vmem:[%s357 + $0xf0] sm:$0xff]
        %v409 = vld [vmem:[%s357 + $0xf8] sm:$0xff]
        %v410 = vpack.c.bf16 %v379, %v378
        %v411 = vpack.c.bf16 %v381, %v380
        %v412 = vpack.c.bf16 %v383, %v382
        %v413 = vpack.c.bf16 %v385, %v384
        %v414 = vpack.c.bf16 %v387, %v386
        %v415 = vpack.c.bf16 %v389, %v388
        %v416 = vpack.c.bf16 %v391, %v390
        %v417 = vpack.c.bf16 %v393, %v392
        %v418 = vpack.c.bf16 %v395, %v394
        %v419 = vpack.c.bf16 %v397, %v396
        %v420 = vpack.c.bf16 %v399, %v398
        %v421 = vpack.c.bf16 %v401, %v400
        %v422 = vpack.c.bf16 %v403, %v402
        %v423 = vpack.c.bf16 %v405, %v404
        %v424 = vpack.c.bf16 %v407, %v406
        %v425 = vpack.c.bf16 %v409, %v408
        %v426 = vld [vmem:[%s1] sm:$0xf]
        %v427 = vld [vmem:[%s1 + $0x4] sm:$0xf]
        %v428 = vld [vmem:[%s1 + $0x8] sm:$0x3]
        %v429 = vld [vmem:[%s2] sm:$0x1]
        %v431 = vlaneseq
        %v432 = vshrl.u32 %v431, 7
        %v433 = vsub.s32 0, %v432
        %v434 = vrot.slane %v429, %v433
        %v439 = vunpack.c.l.b16 %v426
        %v440 = vunpack.c.l.b16 %v427
        %v441 = vunpack.c.l.b16 %v428
        %v442 = vpack.c.b16 %v440, %v439
        %v443 = vpack.c.b16 %v441, %v441
        %vm445 = vcmask 162816
        %v447 = vsel %vm445, %v410, 0
        %v450 = vsel %vm445, %v411, 0
        %v453 = vsel %vm445, %v412, 0
        %v456 = vsel %vm445, %v413, 0
        %v459 = vsel %vm445, %v414, 0
        %v462 = vsel %vm445, %v415, 0
        %v465 = vsel %vm445, %v416, 0
        %v468 = vsel %vm445, %v417, 0
        %v471 = vsel %vm445, %v418, 0
        %v474 = vsel %vm445, %v419, 0
        %v477 = vsel %vm445, %v420, 0
        %v480 = vsel %vm445, %v421, 0
        %v483 = vsel %vm445, %v422, 0
        %v486 = vsel %vm445, %v423, 0
        %v489 = vsel %vm445, %v424, 0
        %v492 = vsel %vm445, %v425, 0
        %vm494 = vcmask 1041408
        %v496 = vsel %vm494, %v443, 0
        %498 = vmatprep.subr.bf16.mxu0 0
        %499 = vmatpush1.bf16.msra.mxu0 %v442
        %500 = vmatprep.subr.bf16.mxu0 0
        %501 = vmatpush1.bf16.msra.mxu0 %v496
        %502 = vmatprep.subr.bf16.mxu0 0
        %503 = vmatpush1.bf16.msra.mxu0 0
        %504 = vmatprep.subr.bf16.mxu0 0
        %505 = vmatpush1.bf16.msra.mxu0 0
        %506 = vmatprep.subr.bf16.mxu0 0
        %507 = vmatpush1.bf16.msra.mxu0 0
        %508 = vmatprep.subr.bf16.mxu0 0
        %509 = vmatpush1.bf16.msra.mxu0 0
        %510 = vmatprep.subr.bf16.mxu0 0
        %511 = vmatpush1.bf16.msra.mxu0 0
        %512 = vmatprep.subr.bf16.mxu0 0
        %513 = vmatpush1.bf16.msra.mxu0 0
        %514 = vmatprep.subr.bf16.mxu0 0
        %515 = vmatpush1.bf16.msra.mxu0 0
        %516 = vmatprep.subr.bf16.mxu0 0
        %517 = vmatpush1.bf16.msra.mxu0 0
        %518 = vmatprep.subr.bf16.mxu0 0
        %519 = vmatpush1.bf16.msra.mxu0 0
        %520 = vmatprep.subr.bf16.mxu0 0
        %521 = vmatpush1.bf16.msra.mxu0 0
        %522 = vmatprep.subr.bf16.mxu0 0
        %523 = vmatpush1.bf16.msra.mxu0 0
        %524 = vmatprep.subr.bf16.mxu0 0
        %525 = vmatpush1.bf16.msra.mxu0 0
        %526 = vmatprep.subr.bf16.mxu0 0
        %527 = vmatpush1.bf16.msra.mxu0 0
        %528 = vmatprep.subr.bf16.mxu0 0
        %529 = vmatpush1.bf16.msra.mxu0 0
        %530 = vmatprep.mubr.bf16.mxu0 0
        %531 = vmatmul.mubr.bf16.gmra.mrb[0].mxu0 %v447
        %v532 = vpop.f32.mrb[0].mxu0
        %v533 = vadd.f32 %v434, %v532
        %v534 = vpop.f32.mrb[0].mxu0
        %v535 = vpop.f32.mrb[0].mxu0
        %v536 = vadd.f32 %v434, %v535
        %v537 = vpop.f32.mrb[0].mxu0
        %538 = vmatprep.mubr.bf16.mxu0 0
        %539 = vmatmul.mubr.bf16.gmra.mrb[0].mxu0 %v450
        %v540 = vpop.f32.mrb[0].mxu0
        %v541 = vadd.f32 %v434, %v540
        %v542 = vpop.f32.mrb[0].mxu0
        %v543 = vpop.f32.mrb[0].mxu0
        %v544 = vadd.f32 %v434, %v543
        %v545 = vpop.f32.mrb[0].mxu0
        %546 = vmatprep.mubr.bf16.mxu0 0
        %547 = vmatmul.mubr.bf16.gmra.mrb[0].mxu0 %v453
        %v548 = vpop.f32.mrb[0].mxu0
        %v549 = vadd.f32 %v434, %v548
        %v550 = vpop.f32.mrb[0].mxu0
        %v551 = vpop.f32.mrb[0].mxu0
        %v552 = vadd.f32 %v434, %v551
        %v553 = vpop.f32.mrb[0].mxu0
        %554 = vmatprep.mubr.bf16.mxu0 0
        %555 = vmatmul.mubr.bf16.gmra.mrb[0].mxu0 %v456
        %v556 = vpop.f32.mrb[0].mxu0
        %v557 = vadd.f32 %v434, %v556
        %v558 = vpop.f32.mrb[0].mxu0
        %v559 = vpop.f32.mrb[0].mxu0
        %v560 = vadd.f32 %v434, %v559
        %v561 = vpop.f32.mrb[0].mxu0
        %562 = vmatprep.mubr.bf16.mxu0 0
        %563 = vmatmul.mubr.bf16.gmra.mrb[0].mxu0 %v459
        %v564 = vpop.f32.mrb[0].mxu0
        %v565 = vadd.f32 %v434, %v564
        %v566 = vpop.f32.mrb[0].mxu0
        %v567 = vpop.f32.mrb[0].mxu0
        %v568 = vadd.f32 %v434, %v567
        %v569 = vpop.f32.mrb[0].mxu0
        %570 = vmatprep.mubr.bf16.mxu0 0
        %571 = vmatmul.mubr.bf16.gmra.mrb[0].mxu0 %v462
        %v572 = vpop.f32.mrb[0].mxu0
        %v573 = vadd.f32 %v434, %v572
        %v574 = vpop.f32.mrb[0].mxu0
        %v575 = vpop.f32.mrb[0].mxu0
        %v576 = vadd.f32 %v434, %v575
        %v577 = vpop.f32.mrb[0].mxu0
        %578 = vmatprep.mubr.bf16.mxu0 0
        %579 = vmatmul.mubr.bf16.gmra.mrb[0].mxu0 %v465
        %v580 = vpop.f32.mrb[0].mxu0
        %v581 = vadd.f32 %v434, %v580
        %v582 = vpop.f32.mrb[0].mxu0
        %v583 = vpop.f32.mrb[0].mxu0
        %v584 = vadd.f32 %v434, %v583
        %v585 = vpop.f32.mrb[0].mxu0
        %586 = vmatprep.mubr.bf16.mxu0 0
        %587 = vmatmul.mubr.bf16.gmra.mrb[0].mxu0 %v468
        %v588 = vpop.f32.mrb[0].mxu0
        %v589 = vadd.f32 %v434, %v588
        %v590 = vpop.f32.mrb[0].mxu0
        %v591 = vpop.f32.mrb[0].mxu0
        %v592 = vadd.f32 %v434, %v591
        %v593 = vpop.f32.mrb[0].mxu0
        %594 = vmatprep.mubr.bf16.mxu0 0
        %595 = vmatmul.mubr.bf16.gmra.mrb[0].mxu0 %v471
        %v596 = vpop.f32.mrb[0].mxu0
        %v597 = vadd.f32 %v434, %v596
        %v598 = vpop.f32.mrb[0].mxu0
        %v599 = vpop.f32.mrb[0].mxu0
        %v600 = vadd.f32 %v434, %v599
        %v601 = vpop.f32.mrb[0].mxu0
        %602 = vmatprep.mubr.bf16.mxu0 0
        %603 = vmatmul.mubr.bf16.gmra.mrb[0].mxu0 %v474
        %v604 = vpop.f32.mrb[0].mxu0
        %v605 = vadd.f32 %v434, %v604
        %v606 = vpop.f32.mrb[0].mxu0
        %v607 = vpop.f32.mrb[0].mxu0
        %v608 = vadd.f32 %v434, %v607
        %v609 = vpop.f32.mrb[0].mxu0
        %610 = vmatprep.mubr.bf16.mxu0 0
        %611 = vmatmul.mubr.bf16.gmra.mrb[0].mxu0 %v477
        %v612 = vpop.f32.mrb[0].mxu0
        %v613 = vadd.f32 %v434, %v612
        %v614 = vpop.f32.mrb[0].mxu0
        %v615 = vpop.f32.mrb[0].mxu0
        %v616 = vadd.f32 %v434, %v615
        %v617 = vpop.f32.mrb[0].mxu0
        %618 = vmatprep.mubr.bf16.mxu0 0
        %619 = vmatmul.mubr.bf16.gmra.mrb[0].mxu0 %v480
        %v620 = vpop.f32.mrb[0].mxu0
        %v621 = vadd.f32 %v434, %v620
        %v622 = vpop.f32.mrb[0].mxu0
        %v623 = vpop.f32.mrb[0].mxu0
        %v624 = vadd.f32 %v434, %v623
        %v625 = vpop.f32.mrb[0].mxu0
        %626 = vmatprep.mubr.bf16.mxu0 0
        %627 = vmatmul.mubr.bf16.gmra.mrb[0].mxu0 %v483
        %v628 = vpop.f32.mrb[0].mxu0
        %v629 = vadd.f32 %v434, %v628
        %v630 = vpop.f32.mrb[0].mxu0
        %v631 = vpop.f32.mrb[0].mxu0
        %v632 = vadd.f32 %v434, %v631
        %v633 = vpop.f32.mrb[0].mxu0
        %634 = vmatprep.mubr.bf16.mxu0 0
        %635 = vmatmul.mubr.bf16.gmra.mrb[0].mxu0 %v486
        %v636 = vpop.f32.mrb[0].mxu0
        %v637 = vadd.f32 %v434, %v636
        %v638 = vpop.f32.mrb[0].mxu0
        %v639 = vpop.f32.mrb[0].mxu0
        %v640 = vadd.f32 %v434, %v639
        %v641 = vpop.f32.mrb[0].mxu0
        %642 = vmatprep.mubr.bf16.mxu0 0
        %643 = vmatmul.mubr.bf16.gmra.mrb[0].mxu0 %v489
        %v644 = vpop.f32.mrb[0].mxu0
        %v645 = vadd.f32 %v434, %v644
        %v646 = vpop.f32.mrb[0].mxu0
        %v647 = vpop.f32.mrb[0].mxu0
        %v648 = vadd.f32 %v434, %v647
        %v649 = vpop.f32.mrb[0].mxu0
        %650 = vmatprep.mubr.bf16.mxu0 0
        %651 = vmatmul.mubr.bf16.gmra.mrb[0].mxu0 %v492
        %v652 = vpop.f32.mrb[0].mxu0
        %v653 = vadd.f32 %v434, %v652
        %v654 = vpop.f32.mrb[0].mxu0
        %v655 = vpop.f32.mrb[0].mxu0
        %v656 = vadd.f32 %v434, %v655
        %v657 = vpop.f32.mrb[0].mxu0
        %658 = vdwg.mxu0
        %v659 = vpack.c.bf16 %v536, %v533
        %v660 = vpack.c.bf16 %v544, %v541
        %v661 = vpack.c.bf16 %v552, %v549
        %v662 = vpack.c.bf16 %v560, %v557
        %v663 = vpack.c.bf16 %v568, %v565
        %v664 = vpack.c.bf16 %v576, %v573
        %v665 = vpack.c.bf16 %v584, %v581
        %v666 = vpack.c.bf16 %v592, %v589
        %v667 = vpack.c.bf16 %v600, %v597
        %v668 = vpack.c.bf16 %v608, %v605
        %v669 = vpack.c.bf16 %v616, %v613
        %v670 = vpack.c.bf16 %v624, %v621
        %v671 = vpack.c.bf16 %v632, %v629
        %v672 = vpack.c.bf16 %v640, %v637
        %v673 = vpack.c.bf16 %v648, %v645
        %v674 = vpack.c.bf16 %v656, %v653
        %s675 = sshll.u32 %s377, 16
        %s676 = sor.u32 %s377, %s675
        %v677 = vstv %s676
        %v679 = vmul.bf16 %v677, %v659
        %v680 = vmul.bf16 %v677, %v660
        %v681 = vmul.bf16 %v677, %v661
        %v682 = vmul.bf16 %v677, %v662
        %v683 = vmul.bf16 %v677, %v663
        %v684 = vmul.bf16 %v677, %v664
        %v685 = vmul.bf16 %v677, %v665
        %v686 = vmul.bf16 %v677, %v666
        %v687 = vmul.bf16 %v677, %v667
        %v688 = vmul.bf16 %v677, %v668
        %v689 = vmul.bf16 %v677, %v669
        %v690 = vmul.bf16 %v677, %v670
        %v691 = vmul.bf16 %v677, %v671
        %v692 = vmul.bf16 %v677, %v672
        %v693 = vmul.bf16 %v677, %v673
        %v694 = vmul.bf16 %v677, %v674
        %v695 = vmax.bf16 %v659, %v679
        %v696 = vmax.bf16 %v660, %v680
        %v697 = vmax.bf16 %v661, %v681
        %v698 = vmax.bf16 %v662, %v682
        %v699 = vmax.bf16 %v663, %v683
        %v700 = vmax.bf16 %v664, %v684
        %v701 = vmax.bf16 %v665, %v685
        %v702 = vmax.bf16 %v666, %v686
        %v703 = vmax.bf16 %v667, %v687
        %v704 = vmax.bf16 %v668, %v688
        %v705 = vmax.bf16 %v669, %v689
        %v706 = vmax.bf16 %v670, %v690
        %v707 = vmax.bf16 %v671, %v691
        %v708 = vmax.bf16 %v672, %v692
        %v709 = vmax.bf16 %v673, %v693
        %v710 = vmax.bf16 %v674, %v694
        %v711 = vld [vmem:[%s3] sm:$0xff]
        %v712 = vld [vmem:[%s3 + $0x8] sm:$0xff]
        %v713 = vld [vmem:[%s3 + $0x10] sm:$0xff]
        %v714 = vld [vmem:[%s3 + $0x18] sm:$0xf]
        %v715 = vld [vmem:[%s3 + $0x1c] sm:$0xff]
        %v716 = vld [vmem:[%s3 + $0x24] sm:$0xff]
        %v717 = vld [vmem:[%s3 + $0x2c] sm:$0xff]
        %v718 = vld [vmem:[%s3 + $0x34] sm:$0xf]
        %v719 = vld [vmem:[%s3 + $0x38] sm:$0xff]
        %v720 = vld [vmem:[%s3 + $0x40] sm:$0xff]
        %v721 = vld [vmem:[%s3 + $0x48] sm:$0xff]
        %v722 = vld [vmem:[%s3 + $0x50] sm:$0xf]
        %v723 = vld [vmem:[%s3 + $0x54] sm:$0xff]
        %v724 = vld [vmem:[%s3 + $0x5c] sm:$0xff]
        %v725 = vld [vmem:[%s3 + $0x64] sm:$0xff]
        %v726 = vld [vmem:[%s3 + $0x6c] sm:$0xf]
        %v727 = vld [vmem:[%s3 + $0x70] sm:$0xff]
        %v728 = vld [vmem:[%s3 + $0x78] sm:$0xff]
        %v729 = vld [vmem:[%s3 + $0x80] sm:$0xff]
        %v730 = vld [vmem:[%s3 + $0x88] sm:$0xf]
        %v731 = vld [vmem:[%s3 + $0x8c] sm:$0xff]
        %v732 = vld [vmem:[%s3 + $0x94] sm:$0xff]
        %v733 = vld [vmem:[%s3 + $0x9c] sm:$0xff]
        %v734 = vld [vmem:[%s3 + $0xa4] sm:$0xf]
        %v735 = vld [vmem:[%s3 + $0xa8] sm:$0xff]
        %v736 = vld [vmem:[%s3 + $0xb0] sm:$0xff]
        %v737 = vld [vmem:[%s3 + $0xb8] sm:$0xff]
        %v738 = vld [vmem:[%s3 + $0xc0] sm:$0xf]
        %v739 = vld [vmem:[%s3 + $0xc4] sm:$0xff]
        %v740 = vld [vmem:[%s3 + $0xcc] sm:$0xff]
        %v741 = vld [vmem:[%s3 + $0xd4] sm:$0xff]
        %v742 = vld [vmem:[%s3 + $0xdc] sm:$0xf]
        %v743 = vld [vmem:[%s3 + $0xe0] sm:$0xff]
        %v744 = vld [vmem:[%s3 + $0xe8] sm:$0xff]
        %v745 = vld [vmem:[%s3 + $0xf0] sm:$0xff]
        %v746 = vld [vmem:[%s3 + $0xf8] sm:$0xf]
        %v747 = vld [vmem:[%s3 + $0xfc] sm:$0xff]
        %v748 = vld [vmem:[%s3 + $0x104] sm:$0xff]
        %v749 = vld [vmem:[%s3 + $0x10c] sm:$0xff]
        %v750 = vld [vmem:[%s3 + $0x114] sm:$0xf]
        %v751 = vld [vmem:[%s3 + $0x118] sm:$0xff]
        %v752 = vld [vmem:[%s3 + $0x120] sm:$0xff]
        %v753 = vld [vmem:[%s3 + $0x128] sm:$0xff]
        %v754 = vld [vmem:[%s3 + $0x130] sm:$0xf]
        %v755 = vld [vmem:[%s3 + $0x134] sm:$0xff]
        %v756 = vld [vmem:[%s3 + $0x13c] sm:$0xff]
        %v757 = vld [vmem:[%s3 + $0x144] sm:$0xff]
        %v758 = vld [vmem:[%s3 + $0x14c] sm:$0xf]
        %v759 = vld [vmem:[%s3 + $0x150] sm:$0xff]
        %v760 = vld [vmem:[%s3 + $0x158] sm:$0xff]
        %v761 = vld [vmem:[%s3 + $0x160] sm:$0xff]
        %v762 = vld [vmem:[%s3 + $0x168] sm:$0xf]
        %v763 = vld [vmem:[%s3 + $0x16c] sm:$0xff]
        %v764 = vld [vmem:[%s3 + $0x174] sm:$0xff]
        %v765 = vld [vmem:[%s3 + $0x17c] sm:$0xff]
        %v766 = vld [vmem:[%s3 + $0x184] sm:$0xf]
        %v767 = vld [vmem:[%s3 + $0x188] sm:$0xff]
        %v768 = vld [vmem:[%s3 + $0x190] sm:$0xff]
        %v769 = vld [vmem:[%s3 + $0x198] sm:$0xff]
        %v770 = vld [vmem:[%s3 + $0x1a0] sm:$0xf]
        %v771 = vld [vmem:[%s3 + $0x1a4] sm:$0xff]
        %v772 = vld [vmem:[%s3 + $0x1ac] sm:$0xff]
        %v773 = vld [vmem:[%s3 + $0x1b4] sm:$0xff]
        %v774 = vld [vmem:[%s3 + $0x1bc] sm:$0xf]
        %v775 = vld [vmem:[%s4] sm:$0xff]
        %v777 = vlaneseq
        %v778 = vshrl.u32 %v777, 7
        %v779 = vsub.s32 0, %v778
        %v780 = vrot.slane %v775, %v779
        %v781 = vlaneseq
        %v782 = vshrl.u32 %v781, 7
        %v783 = vsub.s32 1, %v782
        %v784 = vrot.slane %v775, %v783
        %v785 = vlaneseq
        %v786 = vshrl.u32 %v785, 7
        %v787 = vsub.s32 2, %v786
        %v788 = vrot.slane %v775, %v787
        %v789 = vlaneseq
        %v790 = vshrl.u32 %v789, 7
        %v791 = vsub.s32 3, %v790
        %v792 = vrot.slane %v775, %v791
        %v793 = vlaneseq
        %v794 = vshrl.u32 %v793, 7
        %v795 = vsub.s32 4, %v794
        %v796 = vrot.slane %v775, %v795
        %v797 = vlaneseq
        %v798 = vshrl.u32 %v797, 7
        %v799 = vsub.s32 5, %v798
        %v800 = vrot.slane %v775, %v799
        %v801 = vlaneseq
        %v802 = vshrl.u32 %v801, 7
        %v803 = vsub.s32 6, %v802
        %v804 = vrot.slane %v775, %v803
        %v876 = vunpack.c.l.b16 %v711
        %v877 = vunpack.c.h.b16 %v711
        %v878 = vunpack.c.l.b16 %v712
        %v879 = vunpack.c.h.b16 %v712
        %v880 = vunpack.c.l.b16 %v713
        %v881 = vunpack.c.h.b16 %v713
        %v882 = vunpack.c.l.b16 %v714
        %v883 = vunpack.c.l.b16 %v715
        %v884 = vunpack.c.h.b16 %v715
        %v885 = vunpack.c.l.b16 %v716
        %v886 = vunpack.c.h.b16 %v716
        %v887 = vunpack.c.l.b16 %v717
        %v888 = vunpack.c.h.b16 %v717
        %v889 = vunpack.c.l.b16 %v718
        %v890 = vunpack.c.l.b16 %v719
        %v891 = vunpack.c.h.b16 %v719
        %v892 = vunpack.c.l.b16 %v720
        %v893 = vunpack.c.h.b16 %v720
        %v894 = vunpack.c.l.b16 %v721
        %v895 = vunpack.c.h.b16 %v721
        %v896 = vunpack.c.l.b16 %v722
        %v897 = vunpack.c.l.b16 %v723
        %v898 = vunpack.c.h.b16 %v723
        %v899 = vunpack.c.l.b16 %v724
        %v900 = vunpack.c.h.b16 %v724
        %v901 = vunpack.c.l.b16 %v725
        %v902 = vunpack.c.h.b16 %v725
        %v903 = vunpack.c.l.b16 %v726
        %v904 = vunpack.c.l.b16 %v727
        %v905 = vunpack.c.h.b16 %v727
        %v906 = vunpack.c.l.b16 %v728
        %v907 = vunpack.c.h.b16 %v728
        %v908 = vunpack.c.l.b16 %v729
        %v909 = vunpack.c.h.b16 %v729
        %v910 = vunpack.c.l.b16 %v730
        %v911 = vunpack.c.l.b16 %v731
        %v912 = vunpack.c.h.b16 %v731
        %v913 = vunpack.c.l.b16 %v732
        %v914 = vunpack.c.h.b16 %v732
        %v915 = vunpack.c.l.b16 %v733
        %v916 = vunpack.c.h.b16 %v733
        %v917 = vunpack.c.l.b16 %v734
        %v918 = vunpack.c.l.b16 %v735
        %v919 = vunpack.c.h.b16 %v735
        %v920 = vunpack.c.l.b16 %v736
        %v921 = vunpack.c.h.b16 %v736
        %v922 = vunpack.c.l.b16 %v737
        %v923 = vunpack.c.h.b16 %v737
        %v924 = vunpack.c.l.b16 %v738
        %v925 = vunpack.c.l.b16 %v739
        %v926 = vunpack.c.h.b16 %v739
        %v927 = vunpack.c.l.b16 %v740
        %v928 = vunpack.c.h.b16 %v740
        %v929 = vunpack.c.l.b16 %v741
        %v930 = vunpack.c.h.b16 %v741
        %v931 = vunpack.c.l.b16 %v742
        %v932 = vunpack.c.l.b16 %v743
        %v933 = vunpack.c.h.b16 %v743
        %v934 = vunpack.c.l.b16 %v744
        %v935 = vunpack.c.h.b16 %v744
        %v936 = vunpack.c.l.b16 %v745
        %v937 = vunpack.c.h.b16 %v745
        %v938 = vunpack.c.l.b16 %v746
        %v939 = vunpack.c.l.b16 %v747
        %v940 = vunpack.c.h.b16 %v747
        %v941 = vunpack.c.l.b16 %v748
        %v942 = vunpack.c.h.b16 %v748
        %v943 = vunpack.c.l.b16 %v749
        %v944 = vunpack.c.h.b16 %v749
        %v945 = vunpack.c.l.b16 %v750
        %v946 = vunpack.c.l.b16 %v751
        %v947 = vunpack.c.h.b16 %v751
        %v948 = vunpack.c.l.b16 %v752
        %v949 = vunpack.c.h.b16 %v752
        %v950 = vunpack.c.l.b16 %v753
        %v951 = vunpack.c.h.b16 %v753
        %v952 = vunpack.c.l.b16 %v754
        %v953 = vunpack.c.l.b16 %v755
        %v954 = vunpack.c.h.b16 %v755
        %v955 = vunpack.c.l.b16 %v756
        %v956 = vunpack.c.h.b16 %v756
        %v957 = vunpack.c.l.b16 %v757
        %v958 = vunpack.c.h.b16 %v757
        %v959 = vunpack.c.l.b16 %v758
        %v960 = vunpack.c.l.b16 %v759
        %v961 = vunpack.c.h.b16 %v759
        %v962 = vunpack.c.l.b16 %v760
        %v963 = vunpack.c.h.b16 %v760
        %v964 = vunpack.c.l.b16 %v761
        %v965 = vunpack.c.h.b16 %v761
        %v966 = vunpack.c.l.b16 %v762
        %v967 = vunpack.c.l.b16 %v763
        %v968 = vunpack.c.h.b16 %v763
        %v969 = vunpack.c.l.b16 %v764
        %v970 = vunpack.c.h.b16 %v764
        %v971 = vunpack.c.l.b16 %v765
        %v972 = vunpack.c.h.b16 %v765
        %v973 = vunpack.c.l.b16 %v766
        %v974 = vunpack.c.l.b16 %v767
        %v975 = vunpack.c.h.b16 %v767
        %v976 = vunpack.c.l.b16 %v768
        %v977 = vunpack.c.h.b16 %v768
        %v978 = vunpack.c.l.b16 %v769
        %v979 = vunpack.c.h.b16 %v769
        %v980 = vunpack.c.l.b16 %v770
        %v981 = vunpack.c.l.b16 %v771
        %v982 = vunpack.c.h.b16 %v771
        %v983 = vunpack.c.l.b16 %v772
        %v984 = vunpack.c.h.b16 %v772
        %v985 = vunpack.c.l.b16 %v773
        %v986 = vunpack.c.h.b16 %v773
        %v987 = vunpack.c.l.b16 %v774
        %v988 = vpack.c.b16 %v883, %v876
        %v989 = vpack.c.b16 %v884, %v877
        %v990 = vpack.c.b16 %v885, %v878
        %v991 = vpack.c.b16 %v886, %v879
        %v992 = vpack.c.b16 %v887, %v880
        %v993 = vpack.c.b16 %v888, %v881
        %v994 = vpack.c.b16 %v889, %v882
        %v995 = vpack.c.b16 %v897, %v890
        %v996 = vpack.c.b16 %v898, %v891
        %v997 = vpack.c.b16 %v899, %v892
        %v998 = vpack.c.b16 %v900, %v893
        %v999 = vpack.c.b16 %v901, %v894
        %v1000 = vpack.c.b16 %v902, %v895
        %v1001 = vpack.c.b16 %v903, %v896
        %v1002 = vpack.c.b16 %v911, %v904
        %v1003 = vpack.c.b16 %v912, %v905
        %v1004 = vpack.c.b16 %v913, %v906
        %v1005 = vpack.c.b16 %v914, %v907
        %v1006 = vpack.c.b16 %v915, %v908
        %v1007 = vpack.c.b16 %v916, %v909
        %v1008 = vpack.c.b16 %v917, %v910
        %v1009 = vpack.c.b16 %v925, %v918
        %v1010 = vpack.c.b16 %v926, %v919
        %v1011 = vpack.c.b16 %v927, %v920
        %v1012 = vpack.c.b16 %v928, %v921
        %v1013 = vpack.c.b16 %v929, %v922
        %v1014 = vpack.c.b16 %v930, %v923
        %v1015 = vpack.c.b16 %v931, %v924
        %v1016 = vpack.c.b16 %v939, %v932
        %v1017 = vpack.c.b16 %v940, %v933
        %v1018 = vpack.c.b16 %v941, %v934
        %v1019 = vpack.c.b16 %v942, %v935
        %v1020 = vpack.c.b16 %v943, %v936
        %v1021 = vpack.c.b16 %v944, %v937
        %v1022 = vpack.c.b16 %v945, %v938
        %v1023 = vpack.c.b16 %v953, %v946
        %v1024 = vpack.c.b16 %v954, %v947
        %v1025 = vpack.c.b16 %v955, %v948
        %v1026 = vpack.c.b16 %v956, %v949
        %v1027 = vpack.c.b16 %v957, %v950
        %v1028 = vpack.c.b16 %v958, %v951
        %v1029 = vpack.c.b16 %v959, %v952
        %v1030 = vpack.c.b16 %v967, %v960
        %v1031 = vpack.c.b16 %v968, %v961
        %v1032 = vpack.c.b16 %v969, %v962
        %v1033 = vpack.c.b16 %v970, %v963
        %v1034 = vpack.c.b16 %v971, %v964
        %v1035 = vpack.c.b16 %v972, %v965
        %v1036 = vpack.c.b16 %v973, %v966
        %v1037 = vpack.c.b16 %v981, %v974
        %v1038 = vpack.c.b16 %v982, %v975
        %v1039 = vpack.c.b16 %v983, %v976
        %v1040 = vpack.c.b16 %v984, %v977
        %v1041 = vpack.c.b16 %v985, %v978
        %v1042 = vpack.c.b16 %v986, %v979
        %v1043 = vpack.c.b16 %v987, %v980
        %1100 = vmatprep.subr.bf16.mxu0 %v989
        %1101 = vmatpush1.bf16.msra.mxu0 %v988
        %1102 = vmatprep.subr.bf16.mxu0 %v996
        %1103 = vmatpush1.bf16.msra.mxu0 %v995
        %1104 = vmatprep.subr.bf16.mxu0 %v1003
        %1105 = vmatpush1.bf16.msra.mxu0 %v1002
        %1106 = vmatprep.subr.bf16.mxu0 %v1010
        %1107 = vmatpush1.bf16.msra.mxu0 %v1009
        %1108 = vmatprep.subr.bf16.mxu0 %v1017
        %1109 = vmatpush1.bf16.msra.mxu0 %v1016
        %1110 = vmatprep.subr.bf16.mxu0 %v1024
        %1111 = vmatpush1.bf16.msra.mxu0 %v1023
        %1112 = vmatprep.subr.bf16.mxu0 %v1031
        %1113 = vmatpush1.bf16.msra.mxu0 %v1030
        %1114 = vmatprep.subr.bf16.mxu0 %v1038
        %1115 = vmatpush1.bf16.msra.mxu0 %v1037
        %1116 = vmatprep.subr.bf16.mxu0 0
        %1117 = vmatpush1.bf16.msra.mxu0 0
        %1118 = vmatprep.subr.bf16.mxu0 0
        %1119 = vmatpush1.bf16.msra.mxu0 0
        %1120 = vmatprep.subr.bf16.mxu0 0
        %1121 = vmatpush1.bf16.msra.mxu0 0
        %1122 = vmatprep.subr.bf16.mxu0 0
        %1123 = vmatpush1.bf16.msra.mxu0 0
        %1124 = vmatprep.subr.bf16.mxu0 0
        %1125 = vmatpush1.bf16.msra.mxu0 0
        %1126 = vmatprep.subr.bf16.mxu0 0
        %1127 = vmatpush1.bf16.msra.mxu0 0
        %1128 = vmatprep.subr.bf16.mxu0 0
        %1129 = vmatpush1.bf16.msra.mxu0 0
        %1130 = vmatprep.subr.bf16.mxu0 0
        %1131 = vmatpush1.bf16.msra.mxu0 0
        %1132 = vmatprep.mubr.bf16.mxu0 0
        %1133 = vmatmul.mubr.bf16.gmra.mrb[0].mxu0 %v695
        %v1134 = vpop.f32.mrb[0].mxu0
        %v1135 = vadd.f32 %v780, %v1134
        %v1136 = vpop.f32.mrb[0].mxu0
        %v1137 = vadd.f32 %v784, %v1136
        %v1138 = vpop.f32.mrb[0].mxu0
        %v1139 = vadd.f32 %v780, %v1138
        %v1140 = vpop.f32.mrb[0].mxu0
        %v1141 = vadd.f32 %v784, %v1140
        %1142 = vmatprep.mubr.bf16.mxu0 0
        %1143 = vmatmul.mubr.bf16.gmra.mrb[0].mxu0 %v696
        %v1144 = vpop.f32.mrb[0].mxu0
        %v1145 = vadd.f32 %v780, %v1144
        %v1146 = vpop.f32.mrb[0].mxu0
        %v1147 = vadd.f32 %v784, %v1146
        %v1148 = vpop.f32.mrb[0].mxu0
        %v1149 = vadd.f32 %v780, %v1148
        %v1150 = vpop.f32.mrb[0].mxu0
        %v1151 = vadd.f32 %v784, %v1150
        %1152 = vmatprep.mubr.bf16.mxu0 0
        %1153 = vmatmul.mubr.bf16.gmra.mrb[0].mxu0 %v697
        %v1154 = vpop.f32.mrb[0].mxu0
        %v1155 = vadd.f32 %v780, %v1154
        %v1156 = vpop.f32.mrb[0].mxu0
        %v1157 = vadd.f32 %v784, %v1156
        %v1158 = vpop.f32.mrb[0].mxu0
        %v1159 = vadd.f32 %v780, %v1158
        %v1160 = vpop.f32.mrb[0].mxu0
        %v1161 = vadd.f32 %v784, %v1160
        %1162 = vmatprep.mubr.bf16.mxu0 0
        %1163 = vmatmul.mubr.bf16.gmra.mrb[0].mxu0 %v698
        %v1164 = vpop.f32.mrb[0].mxu0
        %v1165 = vadd.f32 %v780, %v1164
        %v1166 = vpop.f32.mrb[0].mxu0
        %v1167 = vadd.f32 %v784, %v1166
        %v1168 = vpop.f32.mrb[0].mxu0
        %v1169 = vadd.f32 %v780, %v1168
        %v1170 = vpop.f32.mrb[0].mxu0
        %v1171 = vadd.f32 %v784, %v1170
        %1172 = vmatprep.mubr.bf16.mxu0 0
        %1173 = vmatmul.mubr.bf16.gmra.mrb[0].mxu0 %v699
        %v1174 = vpop.f32.mrb[0].mxu0
        %v1175 = vadd.f32 %v780, %v1174
        %v1176 = vpop.f32.mrb[0].mxu0
        %v1177 = vadd.f32 %v784, %v1176
        %v1178 = vpop.f32.mrb[0].mxu0
        %v1179 = vadd.f32 %v780, %v1178
        %v1180 = vpop.f32.mrb[0].mxu0
        %v1181 = vadd.f32 %v784, %v1180
        %1182 = vmatprep.mubr.bf16.mxu0 0
        %1183 = vmatmul.mubr.bf16.gmra.mrb[0].mxu0 %v700
        %v1184 = vpop.f32.mrb[0].mxu0
        %v1185 = vadd.f32 %v780, %v1184
        %v1186 = vpop.f32.mrb[0].mxu0
        %v1187 = vadd.f32 %v784, %v1186
        %v1188 = vpop.f32.mrb[0].mxu0
        %v1189 = vadd.f32 %v780, %v1188
        %v1190 = vpop.f32.mrb[0].mxu0
        %v1191 = vadd.f32 %v784, %v1190
        %1192 = vmatprep.mubr.bf16.mxu0 0
        %1193 = vmatmul.mubr.bf16.gmra.mrb[0].mxu0 %v701
        %v1194 = vpop.f32.mrb[0].mxu0
        %v1195 = vadd.f32 %v780, %v1194
        %v1196 = vpop.f32.mrb[0].mxu0
        %v1197 = vadd.f32 %v784, %v1196
        %v1198 = vpop.f32.mrb[0].mxu0
        %v1199 = vadd.f32 %v780, %v1198
        %v1200 = vpop.f32.mrb[0].mxu0
        %v1201 = vadd.f32 %v784, %v1200
        %1202 = vmatprep.mubr.bf16.mxu0 0
        %1203 = vmatmul.mubr.bf16.gmra.mrb[0].mxu0 %v702
        %v1204 = vpop.f32.mrb[0].mxu0
        %v1205 = vadd.f32 %v780, %v1204
        %v1206 = vpop.f32.mrb[0].mxu0
        %v1207 = vadd.f32 %v784, %v1206
        %v1208 = vpop.f32.mrb[0].mxu0
        %v1209 = vadd.f32 %v780, %v1208
        %v1210 = vpop.f32.mrb[0].mxu0
        %v1211 = vadd.f32 %v784, %v1210
        %1212 = vmatprep.mubr.bf16.mxu0 0
        %1213 = vmatmul.mubr.bf16.gmra.mrb[0].mxu0 %v703
        %v1214 = vpop.f32.mrb[0].mxu0
        %v1215 = vadd.f32 %v780, %v1214
        %v1216 = vpop.f32.mrb[0].mxu0
        %v1217 = vadd.f32 %v784, %v1216
        %v1218 = vpop.f32.mrb[0].mxu0
        %v1219 = vadd.f32 %v780, %v1218
        %v1220 = vpop.f32.mrb[0].mxu0
        %v1221 = vadd.f32 %v784, %v1220
        %1222 = vmatprep.mubr.bf16.mxu0 0
        %1223 = vmatmul.mubr.bf16.gmra.mrb[0].mxu0 %v704
        %v1224 = vpop.f32.mrb[0].mxu0
        %v1225 = vadd.f32 %v780, %v1224
        %v1226 = vpop.f32.mrb[0].mxu0
        %v1227 = vadd.f32 %v784, %v1226
        %v1228 = vpop.f32.mrb[0].mxu0
        %v1229 = vadd.f32 %v780, %v1228
        %v1230 = vpop.f32.mrb[0].mxu0
        %v1231 = vadd.f32 %v784, %v1230
        %1232 = vmatprep.mubr.bf16.mxu0 0
        %1233 = vmatmul.mubr.bf16.gmra.mrb[0].mxu0 %v705
        %v1234 = vpop.f32.mrb[0].mxu0
        %v1235 = vadd.f32 %v780, %v1234
        %v1236 = vpop.f32.mrb[0].mxu0
        %v1237 = vadd.f32 %v784, %v1236
        %v1238 = vpop.f32.mrb[0].mxu0
        %v1239 = vadd.f32 %v780, %v1238
        %v1240 = vpop.f32.mrb[0].mxu0
        %v1241 = vadd.f32 %v784, %v1240
        %1242 = vmatprep.mubr.bf16.mxu0 0
        %1243 = vmatmul.mubr.bf16.gmra.mrb[0].mxu0 %v706
        %v1244 = vpop.f32.mrb[0].mxu0
        %v1245 = vadd.f32 %v780, %v1244
        %v1246 = vpop.f32.mrb[0].mxu0
        %v1247 = vadd.f32 %v784, %v1246
        %v1248 = vpop.f32.mrb[0].mxu0
        %v1249 = vadd.f32 %v780, %v1248
        %v1250 = vpop.f32.mrb[0].mxu0
        %v1251 = vadd.f32 %v784, %v1250
        %1252 = vmatprep.mubr.bf16.mxu0 0
        %1253 = vmatmul.mubr.bf16.gmra.mrb[0].mxu0 %v707
        %v1254 = vpop.f32.mrb[0].mxu0
        %v1255 = vadd.f32 %v780, %v1254
        %v1256 = vpop.f32.mrb[0].mxu0
        %v1257 = vadd.f32 %v784, %v1256
        %v1258 = vpop.f32.mrb[0].mxu0
        %v1259 = vadd.f32 %v780, %v1258
        %v1260 = vpop.f32.mrb[0].mxu0
        %v1261 = vadd.f32 %v784, %v1260
        %1262 = vmatprep.mubr.bf16.mxu0 0
        %1263 = vmatmul.mubr.bf16.gmra.mrb[0].mxu0 %v708
        %v1264 = vpop.f32.mrb[0].mxu0
        %v1265 = vadd.f32 %v780, %v1264
        %v1266 = vpop.f32.mrb[0].mxu0
        %v1267 = vadd.f32 %v784, %v1266
        %v1268 = vpop.f32.mrb[0].mxu0
        %v1269 = vadd.f32 %v780, %v1268
        %v1270 = vpop.f32.mrb[0].mxu0
        %v1271 = vadd.f32 %v784, %v1270
        %1272 = vmatprep.mubr.bf16.mxu0 0
        %1273 = vmatmul.mubr.bf16.gmra.mrb[0].mxu0 %v709
        %v1274 = vpop.f32.mrb[0].mxu0
        %v1275 = vadd.f32 %v780, %v1274
        %v1276 = vpop.f32.mrb[0].mxu0
        %v1277 = vadd.f32 %v784, %v1276
        %v1278 = vpop.f32.mrb[0].mxu0
        %v1279 = vadd.f32 %v780, %v1278
        %v1280 = vpop.f32.mrb[0].mxu0
        %v1281 = vadd.f32 %v784, %v1280
        %1282 = vmatprep.mubr.bf16.mxu0 0
        %1283 = vmatmul.mubr.bf16.gmra.mrb[0].mxu0 %v710
        %v1284 = vpop.f32.mrb[0].mxu0
        %v1285 = vadd.f32 %v780, %v1284
        %v1286 = vpop.f32.mrb[0].mxu0
        %v1287 = vadd.f32 %v784, %v1286
        %v1288 = vpop.f32.mrb[0].mxu0
        %v1289 = vadd.f32 %v780, %v1288
        %v1290 = vpop.f32.mrb[0].mxu0
        %v1291 = vadd.f32 %v784, %v1290
        %1292 = vdwg.mxu0
        %1293 = vmatprep.subr.bf16.mxu0 %v991
        %1294 = vmatpush1.bf16.msra.mxu0 %v990
        %1295 = vmatprep.subr.bf16.mxu0 %v998
        %1296 = vmatpush1.bf16.msra.mxu0 %v997
        %1297 = vmatprep.subr.bf16.mxu0 %v1005
        %1298 = vmatpush1.bf16.msra.mxu0 %v1004
        %1299 = vmatprep.subr.bf16.mxu0 %v1012
        %1300 = vmatpush1.bf16.msra.mxu0 %v1011
        %1301 = vmatprep.subr.bf16.mxu0 %v1019
        %1302 = vmatpush1.bf16.msra.mxu0 %v1018
        %1303 = vmatprep.subr.bf16.mxu0 %v1026
        %1304 = vmatpush1.bf16.msra.mxu0 %v1025
        %1305 = vmatprep.subr.bf16.mxu0 %v1033
        %1306 = vmatpush1.bf16.msra.mxu0 %v1032
        %1307 = vmatprep.subr.bf16.mxu0 %v1040
        %1308 = vmatpush1.bf16.msra.mxu0 %v1039
        %1309 = vmatprep.subr.bf16.mxu0 0
        %1310 = vmatpush1.bf16.msra.mxu0 0
        %1311 = vmatprep.subr.bf16.mxu0 0
        %1312 = vmatpush1.bf16.msra.mxu0 0
        %1313 = vmatprep.subr.bf16.mxu0 0
        %1314 = vmatpush1.bf16.msra.mxu0 0
        %1315 = vmatprep.subr.bf16.mxu0 0
        %1316 = vmatpush1.bf16.msra.mxu0 0
        %1317 = vmatprep.subr.bf16.mxu0 0
        %1318 = vmatpush1.bf16.msra.mxu0 0
        %1319 = vmatprep.subr.bf16.mxu0 0
        %1320 = vmatpush1.bf16.msra.mxu0 0
        %1321 = vmatprep.subr.bf16.mxu0 0
        %1322 = vmatpush1.bf16.msra.mxu0 0
        %1323 = vmatprep.subr.bf16.mxu0 0
        %1324 = vmatpush1.bf16.msra.mxu0 0
        %1325 = vmatprep.mubr.bf16.mxu0 0
        %1326 = vmatmul.mubr.bf16.gmra.mrb[0].mxu0 %v695
        %v1327 = vpop.f32.mrb[0].mxu0
        %v1328 = vadd.f32 %v788, %v1327
        %v1329 = vpop.f32.mrb[0].mxu0
        %v1330 = vadd.f32 %v792, %v1329
        %v1331 = vpop.f32.mrb[0].mxu0
        %v1332 = vadd.f32 %v788, %v1331
        %v1333 = vpop.f32.mrb[0].mxu0
        %v1334 = vadd.f32 %v792, %v1333
        %1335 = vmatprep.mubr.bf16.mxu0 0
        %1336 = vmatmul.mubr.bf16.gmra.mrb[0].mxu0 %v696
        %v1337 = vpop.f32.mrb[0].mxu0
        %v1338 = vadd.f32 %v788, %v1337
        %v1339 = vpop.f32.mrb[0].mxu0
        %v1340 = vadd.f32 %v792, %v1339
        %v1341 = vpop.f32.mrb[0].mxu0
        %v1342 = vadd.f32 %v788, %v1341
        %v1343 = vpop.f32.mrb[0].mxu0
        %v1344 = vadd.f32 %v792, %v1343
        %1345 = vmatprep.mubr.bf16.mxu0 0
        %1346 = vmatmul.mubr.bf16.gmra.mrb[0].mxu0 %v697
        %v1347 = vpop.f32.mrb[0].mxu0
        %v1348 = vadd.f32 %v788, %v1347
        %v1349 = vpop.f32.mrb[0].mxu0
        %v1350 = vadd.f32 %v792, %v1349
        %v1351 = vpop.f32.mrb[0].mxu0
        %v1352 = vadd.f32 %v788, %v1351
        %v1353 = vpop.f32.mrb[0].mxu0
        %v1354 = vadd.f32 %v792, %v1353
        %1355 = vmatprep.mubr.bf16.mxu0 0
        %1356 = vmatmul.mubr.bf16.gmra.mrb[0].mxu0 %v698
        %v1357 = vpop.f32.mrb[0].mxu0
        %v1358 = vadd.f32 %v788, %v1357
        %v1359 = vpop.f32.mrb[0].mxu0
        %v1360 = vadd.f32 %v792, %v1359
        %v1361 = vpop.f32.mrb[0].mxu0
        %v1362 = vadd.f32 %v788, %v1361
        %v1363 = vpop.f32.mrb[0].mxu0
        %v1364 = vadd.f32 %v792, %v1363
        %1365 = vmatprep.mubr.bf16.mxu0 0
        %1366 = vmatmul.mubr.bf16.gmra.mrb[0].mxu0 %v699
        %v1367 = vpop.f32.mrb[0].mxu0
        %v1368 = vadd.f32 %v788, %v1367
        %v1369 = vpop.f32.mrb[0].mxu0
        %v1370 = vadd.f32 %v792, %v1369
        %v1371 = vpop.f32.mrb[0].mxu0
        %v1372 = vadd.f32 %v788, %v1371
        %v1373 = vpop.f32.mrb[0].mxu0
        %v1374 = vadd.f32 %v792, %v1373
        %1375 = vmatprep.mubr.bf16.mxu0 0
        %1376 = vmatmul.mubr.bf16.gmra.mrb[0].mxu0 %v700
        %v1377 = vpop.f32.mrb[0].mxu0
        %v1378 = vadd.f32 %v788, %v1377
        %v1379 = vpop.f32.mrb[0].mxu0
        %v1380 = vadd.f32 %v792, %v1379
        %v1381 = vpop.f32.mrb[0].mxu0
        %v1382 = vadd.f32 %v788, %v1381
        %v1383 = vpop.f32.mrb[0].mxu0
        %v1384 = vadd.f32 %v792, %v1383
        %1385 = vmatprep.mubr.bf16.mxu0 0
        %1386 = vmatmul.mubr.bf16.gmra.mrb[0].mxu0 %v701
        %v1387 = vpop.f32.mrb[0].mxu0
        %v1388 = vadd.f32 %v788, %v1387
        %v1389 = vpop.f32.mrb[0].mxu0
        %v1390 = vadd.f32 %v792, %v1389
        %v1391 = vpop.f32.mrb[0].mxu0
        %v1392 = vadd.f32 %v788, %v1391
        %v1393 = vpop.f32.mrb[0].mxu0
        %v1394 = vadd.f32 %v792, %v1393
        %1395 = vmatprep.mubr.bf16.mxu0 0
        %1396 = vmatmul.mubr.bf16.gmra.mrb[0].mxu0 %v702
        %v1397 = vpop.f32.mrb[0].mxu0
        %v1398 = vadd.f32 %v788, %v1397
        %v1399 = vpop.f32.mrb[0].mxu0
        %v1400 = vadd.f32 %v792, %v1399
        %v1401 = vpop.f32.mrb[0].mxu0
        %v1402 = vadd.f32 %v788, %v1401
        %v1403 = vpop.f32.mrb[0].mxu0
        %v1404 = vadd.f32 %v792, %v1403
        %1405 = vmatprep.mubr.bf16.mxu0 0
        %1406 = vmatmul.mubr.bf16.gmra.mrb[0].mxu0 %v703
        %v1407 = vpop.f32.mrb[0].mxu0
        %v1408 = vadd.f32 %v788, %v1407
        %v1409 = vpop.f32.mrb[0].mxu0
        %v1410 = vadd.f32 %v792, %v1409
        %v1411 = vpop.f32.mrb[0].mxu0
        %v1412 = vadd.f32 %v788, %v1411
        %v1413 = vpop.f32.mrb[0].mxu0
        %v1414 = vadd.f32 %v792, %v1413
        %1415 = vmatprep.mubr.bf16.mxu0 0
        %1416 = vmatmul.mubr.bf16.gmra.mrb[0].mxu0 %v704
        %v1417 = vpop.f32.mrb[0].mxu0
        %v1418 = vadd.f32 %v788, %v1417
        %v1419 = vpop.f32.mrb[0].mxu0
        %v1420 = vadd.f32 %v792, %v1419
        %v1421 = vpop.f32.mrb[0].mxu0
        %v1422 = vadd.f32 %v788, %v1421
        %v1423 = vpop.f32.mrb[0].mxu0
        %v1424 = vadd.f32 %v792, %v1423
        %1425 = vmatprep.mubr.bf16.mxu0 0
        %1426 = vmatmul.mubr.bf16.gmra.mrb[0].mxu0 %v705
        %v1427 = vpop.f32.mrb[0].mxu0
        %v1428 = vadd.f32 %v788, %v1427
        %v1429 = vpop.f32.mrb[0].mxu0
        %v1430 = vadd.f32 %v792, %v1429
        %v1431 = vpop.f32.mrb[0].mxu0
        %v1432 = vadd.f32 %v788, %v1431
        %v1433 = vpop.f32.mrb[0].mxu0
        %v1434 = vadd.f32 %v792, %v1433
        %1435 = vmatprep.mubr.bf16.mxu0 0
        %1436 = vmatmul.mubr.bf16.gmra.mrb[0].mxu0 %v706
        %v1437 = vpop.f32.mrb[0].mxu0
        %v1438 = vadd.f32 %v788, %v1437
        %v1439 = vpop.f32.mrb[0].mxu0
        %v1440 = vadd.f32 %v792, %v1439
        %v1441 = vpop.f32.mrb[0].mxu0
        %v1442 = vadd.f32 %v788, %v1441
        %v1443 = vpop.f32.mrb[0].mxu0
        %v1444 = vadd.f32 %v792, %v1443
        %1445 = vmatprep.mubr.bf16.mxu0 0
        %1446 = vmatmul.mubr.bf16.gmra.mrb[0].mxu0 %v707
        %v1447 = vpop.f32.mrb[0].mxu0
        %v1448 = vadd.f32 %v788, %v1447
        %v1449 = vpop.f32.mrb[0].mxu0
        %v1450 = vadd.f32 %v792, %v1449
        %v1451 = vpop.f32.mrb[0].mxu0
        %v1452 = vadd.f32 %v788, %v1451
        %v1453 = vpop.f32.mrb[0].mxu0
        %v1454 = vadd.f32 %v792, %v1453
        %1455 = vmatprep.mubr.bf16.mxu0 0
        %1456 = vmatmul.mubr.bf16.gmra.mrb[0].mxu0 %v708
        %v1457 = vpop.f32.mrb[0].mxu0
        %v1458 = vadd.f32 %v788, %v1457
        %v1459 = vpop.f32.mrb[0].mxu0
        %v1460 = vadd.f32 %v792, %v1459
        %v1461 = vpop.f32.mrb[0].mxu0
        %v1462 = vadd.f32 %v788, %v1461
        %v1463 = vpop.f32.mrb[0].mxu0
        %v1464 = vadd.f32 %v792, %v1463
        %1465 = vmatprep.mubr.bf16.mxu0 0
        %1466 = vmatmul.mubr.bf16.gmra.mrb[0].mxu0 %v709
        %v1467 = vpop.f32.mrb[0].mxu0
        %v1468 = vadd.f32 %v788, %v1467
        %v1469 = vpop.f32.mrb[0].mxu0
        %v1470 = vadd.f32 %v792, %v1469
        %v1471 = vpop.f32.mrb[0].mxu0
        %v1472 = vadd.f32 %v788, %v1471
        %v1473 = vpop.f32.mrb[0].mxu0
        %v1474 = vadd.f32 %v792, %v1473
        %1475 = vmatprep.mubr.bf16.mxu0 0
        %1476 = vmatmul.mubr.bf16.gmra.mrb[0].mxu0 %v710
        %v1477 = vpop.f32.mrb[0].mxu0
        %v1478 = vadd.f32 %v788, %v1477
        %v1479 = vpop.f32.mrb[0].mxu0
        %v1480 = vadd.f32 %v792, %v1479
        %v1481 = vpop.f32.mrb[0].mxu0
        %v1482 = vadd.f32 %v788, %v1481
        %v1483 = vpop.f32.mrb[0].mxu0
        %v1484 = vadd.f32 %v792, %v1483
        %1485 = vdwg.mxu0
        %1486 = vmatprep.subr.bf16.mxu0 %v993
        %1487 = vmatpush1.bf16.msra.mxu0 %v992
        %1488 = vmatprep.subr.bf16.mxu0 %v1000
        %1489 = vmatpush1.bf16.msra.mxu0 %v999
        %1490 = vmatprep.subr.bf16.mxu0 %v1007
        %1491 = vmatpush1.bf16.msra.mxu0 %v1006
        %1492 = vmatprep.subr.bf16.mxu0 %v1014
        %1493 = vmatpush1.bf16.msra.mxu0 %v1013
        %1494 = vmatprep.subr.bf16.mxu0 %v1021
        %1495 = vmatpush1.bf16.msra.mxu0 %v1020
        %1496 = vmatprep.subr.bf16.mxu0 %v1028
        %1497 = vmatpush1.bf16.msra.mxu0 %v1027
        %1498 = vmatprep.subr.bf16.mxu0 %v1035
        %1499 = vmatpush1.bf16.msra.mxu0 %v1034
        %1500 = vmatprep.subr.bf16.mxu0 %v1042
        %1501 = vmatpush1.bf16.msra.mxu0 %v1041
        %1502 = vmatprep.subr.bf16.mxu0 0
        %1503 = vmatpush1.bf16.msra.mxu0 0
        %1504 = vmatprep.subr.bf16.mxu0 0
        %1505 = vmatpush1.bf16.msra.mxu0 0
        %1506 = vmatprep.subr.bf16.mxu0 0
        %1507 = vmatpush1.bf16.msra.mxu0 0
        %1508 = vmatprep.subr.bf16.mxu0 0
        %1509 = vmatpush1.bf16.msra.mxu0 0
        %1510 = vmatprep.subr.bf16.mxu0 0
        %1511 = vmatpush1.bf16.msra.mxu0 0
        %1512 = vmatprep.subr.bf16.mxu0 0
        %1513 = vmatpush1.bf16.msra.mxu0 0
        %1514 = vmatprep.subr.bf16.mxu0 0
        %1515 = vmatpush1.bf16.msra.mxu0 0
        %1516 = vmatprep.subr.bf16.mxu0 0
        %1517 = vmatpush1.bf16.msra.mxu0 0
        %1518 = vmatprep.mubr.bf16.mxu0 0
        %1519 = vmatmul.mubr.bf16.gmra.mrb[0].mxu0 %v695
        %v1520 = vpop.f32.mrb[0].mxu0
        %v1521 = vadd.f32 %v796, %v1520
        %v1522 = vpop.f32.mrb[0].mxu0
        %v1523 = vadd.f32 %v800, %v1522
        %v1524 = vpop.f32.mrb[0].mxu0
        %v1525 = vadd.f32 %v796, %v1524
        %v1526 = vpop.f32.mrb[0].mxu0
        %v1527 = vadd.f32 %v800, %v1526
        %1528 = vmatprep.mubr.bf16.mxu0 0
        %1529 = vmatmul.mubr.bf16.gmra.mrb[0].mxu0 %v696
        %v1530 = vpop.f32.mrb[0].mxu0
        %v1531 = vadd.f32 %v796, %v1530
        %v1532 = vpop.f32.mrb[0].mxu0
        %v1533 = vadd.f32 %v800, %v1532
        %v1534 = vpop.f32.mrb[0].mxu0
        %v1535 = vadd.f32 %v796, %v1534
        %v1536 = vpop.f32.mrb[0].mxu0
        %v1537 = vadd.f32 %v800, %v1536
        %1538 = vmatprep.mubr.bf16.mxu0 0
        %1539 = vmatmul.mubr.bf16.gmra.mrb[0].mxu0 %v697
        %v1540 = vpop.f32.mrb[0].mxu0
        %v1541 = vadd.f32 %v796, %v1540
        %v1542 = vpop.f32.mrb[0].mxu0
        %v1543 = vadd.f32 %v800, %v1542
        %v1544 = vpop.f32.mrb[0].mxu0
        %v1545 = vadd.f32 %v796, %v1544
        %v1546 = vpop.f32.mrb[0].mxu0
        %v1547 = vadd.f32 %v800, %v1546
        %1548 = vmatprep.mubr.bf16.mxu0 0
        %1549 = vmatmul.mubr.bf16.gmra.mrb[0].mxu0 %v698
        %v1550 = vpop.f32.mrb[0].mxu0
        %v1551 = vadd.f32 %v796, %v1550
        %v1552 = vpop.f32.mrb[0].mxu0
        %v1553 = vadd.f32 %v800, %v1552
        %v1554 = vpop.f32.mrb[0].mxu0
        %v1555 = vadd.f32 %v796, %v1554
        %v1556 = vpop.f32.mrb[0].mxu0
        %v1557 = vadd.f32 %v800, %v1556
        %1558 = vmatprep.mubr.bf16.mxu0 0
        %1559 = vmatmul.mubr.bf16.gmra.mrb[0].mxu0 %v699
        %v1560 = vpop.f32.mrb[0].mxu0
        %v1561 = vadd.f32 %v796, %v1560
        %v1562 = vpop.f32.mrb[0].mxu0
        %v1563 = vadd.f32 %v800, %v1562
        %v1564 = vpop.f32.mrb[0].mxu0
        %v1565 = vadd.f32 %v796, %v1564
        %v1566 = vpop.f32.mrb[0].mxu0
        %v1567 = vadd.f32 %v800, %v1566
        %1568 = vmatprep.mubr.bf16.mxu0 0
        %1569 = vmatmul.mubr.bf16.gmra.mrb[0].mxu0 %v700
        %v1570 = vpop.f32.mrb[0].mxu0
        %v1571 = vadd.f32 %v796, %v1570
        %v1572 = vpop.f32.mrb[0].mxu0
        %v1573 = vadd.f32 %v800, %v1572
        %v1574 = vpop.f32.mrb[0].mxu0
        %v1575 = vadd.f32 %v796, %v1574
        %v1576 = vpop.f32.mrb[0].mxu0
        %v1577 = vadd.f32 %v800, %v1576
        %1578 = vmatprep.mubr.bf16.mxu0 0
        %1579 = vmatmul.mubr.bf16.gmra.mrb[0].mxu0 %v701
        %v1580 = vpop.f32.mrb[0].mxu0
        %v1581 = vadd.f32 %v796, %v1580
        %v1582 = vpop.f32.mrb[0].mxu0
        %v1583 = vadd.f32 %v800, %v1582
        %v1584 = vpop.f32.mrb[0].mxu0
        %v1585 = vadd.f32 %v796, %v1584
        %v1586 = vpop.f32.mrb[0].mxu0
        %v1587 = vadd.f32 %v800, %v1586
        %1588 = vmatprep.mubr.bf16.mxu0 0
        %1589 = vmatmul.mubr.bf16.gmra.mrb[0].mxu0 %v702
        %v1590 = vpop.f32.mrb[0].mxu0
        %v1591 = vadd.f32 %v796, %v1590
        %v1592 = vpop.f32.mrb[0].mxu0
        %v1593 = vadd.f32 %v800, %v1592
        %v1594 = vpop.f32.mrb[0].mxu0
        %v1595 = vadd.f32 %v796, %v1594
        %v1596 = vpop.f32.mrb[0].mxu0
        %v1597 = vadd.f32 %v800, %v1596
        %1598 = vmatprep.mubr.bf16.mxu0 0
        %1599 = vmatmul.mubr.bf16.gmra.mrb[0].mxu0 %v703
        %v1600 = vpop.f32.mrb[0].mxu0
        %v1601 = vadd.f32 %v796, %v1600
        %v1602 = vpop.f32.mrb[0].mxu0
        %v1603 = vadd.f32 %v800, %v1602
        %v1604 = vpop.f32.mrb[0].mxu0
        %v1605 = vadd.f32 %v796, %v1604
        %v1606 = vpop.f32.mrb[0].mxu0
        %v1607 = vadd.f32 %v800, %v1606
        %1608 = vmatprep.mubr.bf16.mxu0 0
        %1609 = vmatmul.mubr.bf16.gmra.mrb[0].mxu0 %v704
        %v1610 = vpop.f32.mrb[0].mxu0
        %v1611 = vadd.f32 %v796, %v1610
        %v1612 = vpop.f32.mrb[0].mxu0
        %v1613 = vadd.f32 %v800, %v1612
        %v1614 = vpop.f32.mrb[0].mxu0
        %v1615 = vadd.f32 %v796, %v1614
        %v1616 = vpop.f32.mrb[0].mxu0
        %v1617 = vadd.f32 %v800, %v1616
        %1618 = vmatprep.mubr.bf16.mxu0 0
        %1619 = vmatmul.mubr.bf16.gmra.mrb[0].mxu0 %v705
        %v1620 = vpop.f32.mrb[0].mxu0
        %v1621 = vadd.f32 %v796, %v1620
        %v1622 = vpop.f32.mrb[0].mxu0
        %v1623 = vadd.f32 %v800, %v1622
        %v1624 = vpop.f32.mrb[0].mxu0
        %v1625 = vadd.f32 %v796, %v1624
        %v1626 = vpop.f32.mrb[0].mxu0
        %v1627 = vadd.f32 %v800, %v1626
        %1628 = vmatprep.mubr.bf16.mxu0 0
        %1629 = vmatmul.mubr.bf16.gmra.mrb[0].mxu0 %v706
        %v1630 = vpop.f32.mrb[0].mxu0
        %v1631 = vadd.f32 %v796, %v1630
        %v1632 = vpop.f32.mrb[0].mxu0
        %v1633 = vadd.f32 %v800, %v1632
        %v1634 = vpop.f32.mrb[0].mxu0
        %v1635 = vadd.f32 %v796, %v1634
        %v1636 = vpop.f32.mrb[0].mxu0
        %v1637 = vadd.f32 %v800, %v1636
        %1638 = vmatprep.mubr.bf16.mxu0 0
        %1639 = vmatmul.mubr.bf16.gmra.mrb[0].mxu0 %v707
        %v1640 = vpop.f32.mrb[0].mxu0
        %v1641 = vadd.f32 %v796, %v1640
        %v1642 = vpop.f32.mrb[0].mxu0
        %v1643 = vadd.f32 %v800, %v1642
        %v1644 = vpop.f32.mrb[0].mxu0
        %v1645 = vadd.f32 %v796, %v1644
        %v1646 = vpop.f32.mrb[0].mxu0
        %v1647 = vadd.f32 %v800, %v1646
        %1648 = vmatprep.mubr.bf16.mxu0 0
        %1649 = vmatmul.mubr.bf16.gmra.mrb[0].mxu0 %v708
        %v1650 = vpop.f32.mrb[0].mxu0
        %v1651 = vadd.f32 %v796, %v1650
        %v1652 = vpop.f32.mrb[0].mxu0
        %v1653 = vadd.f32 %v800, %v1652
        %v1654 = vpop.f32.mrb[0].mxu0
        %v1655 = vadd.f32 %v796, %v1654
        %v1656 = vpop.f32.mrb[0].mxu0
        %v1657 = vadd.f32 %v800, %v1656
        %1658 = vmatprep.mubr.bf16.mxu0 0
        %1659 = vmatmul.mubr.bf16.gmra.mrb[0].mxu0 %v709
        %v1660 = vpop.f32.mrb[0].mxu0
        %v1661 = vadd.f32 %v796, %v1660
        %v1662 = vpop.f32.mrb[0].mxu0
        %v1663 = vadd.f32 %v800, %v1662
        %v1664 = vpop.f32.mrb[0].mxu0
        %v1665 = vadd.f32 %v796, %v1664
        %v1666 = vpop.f32.mrb[0].mxu0
        %v1667 = vadd.f32 %v800, %v1666
        %1668 = vmatprep.mubr.bf16.mxu0 0
        %1669 = vmatmul.mubr.bf16.gmra.mrb[0].mxu0 %v710
        %v1670 = vpop.f32.mrb[0].mxu0
        %v1671 = vadd.f32 %v796, %v1670
        %v1672 = vpop.f32.mrb[0].mxu0
        %v1673 = vadd.f32 %v800, %v1672
        %v1674 = vpop.f32.mrb[0].mxu0
        %v1675 = vadd.f32 %v796, %v1674
        %v1676 = vpop.f32.mrb[0].mxu0
        %v1677 = vadd.f32 %v800, %v1676
        %1678 = vdwg.mxu0
        %1679 = vmatprep.subr.bf16.mxu0 0
        %1680 = vmatpush1.bf16.msra.mxu0 %v994
        %1681 = vmatprep.subr.bf16.mxu0 0
        %1682 = vmatpush1.bf16.msra.mxu0 %v1001
        %1683 = vmatprep.subr.bf16.mxu0 0
        %1684 = vmatpush1.bf16.msra.mxu0 %v1008
        %1685 = vmatprep.subr.bf16.mxu0 0
        %1686 = vmatpush1.bf16.msra.mxu0 %v1015
        %1687 = vmatprep.subr.bf16.mxu0 0
        %1688 = vmatpush1.bf16.msra.mxu0 %v1022
        %1689 = vmatprep.subr.bf16.mxu0 0
        %1690 = vmatpush1.bf16.msra.mxu0 %v1029
        %1691 = vmatprep.subr.bf16.mxu0 0
        %1692 = vmatpush1.bf16.msra.mxu0 %v1036
        %1693 = vmatprep.subr.bf16.mxu0 0
        %1694 = vmatpush1.bf16.msra.mxu0 %v1043
        %1695 = vmatprep.subr.bf16.mxu0 0
        %1696 = vmatpush1.bf16.msra.mxu0 0
        %1697 = vmatprep.subr.bf16.mxu0 0
        %1698 = vmatpush1.bf16.msra.mxu0 0
        %1699 = vmatprep.subr.bf16.mxu0 0
        %1700 = vmatpush1.bf16.msra.mxu0 0
        %1701 = vmatprep.subr.bf16.mxu0 0
        %1702 = vmatpush1.bf16.msra.mxu0 0
        %1703 = vmatprep.subr.bf16.mxu0 0
        %1704 = vmatpush1.bf16.msra.mxu0 0
        %1705 = vmatprep.subr.bf16.mxu0 0
        %1706 = vmatpush1.bf16.msra.mxu0 0
        %1707 = vmatprep.subr.bf16.mxu0 0
        %1708 = vmatpush1.bf16.msra.mxu0 0
        %1709 = vmatprep.subr.bf16.mxu0 0
        %1710 = vmatpush1.bf16.msra.mxu0 0
        %1711 = vmatprep.mubr.bf16.mxu0 0
        %1712 = vmatmul.mubr.bf16.gmra.mrb[0].mxu0 %v695
        %v1713 = vpop.f32.mrb[0].mxu0
        %v1714 = vadd.f32 %v804, %v1713
        %v1715 = vpop.f32.mrb[0].mxu0
        %v1716 = vpop.f32.mrb[0].mxu0
        %v1717 = vadd.f32 %v804, %v1716
        %v1718 = vpop.f32.mrb[0].mxu0
        %1719 = vmatprep.mubr.bf16.mxu0 0
        %1720 = vmatmul.mubr.bf16.gmra.mrb[0].mxu0 %v696
        %v1721 = vpop.f32.mrb[0].mxu0
        %v1722 = vadd.f32 %v804, %v1721
        %v1723 = vpop.f32.mrb[0].mxu0
        %v1724 = vpop.f32.mrb[0].mxu0
        %v1725 = vadd.f32 %v804, %v1724
        %v1726 = vpop.f32.mrb[0].mxu0
        %1727 = vmatprep.mubr.bf16.mxu0 0
        %1728 = vmatmul.mubr.bf16.gmra.mrb[0].mxu0 %v697
        %v1729 = vpop.f32.mrb[0].mxu0
        %v1730 = vadd.f32 %v804, %v1729
        %v1731 = vpop.f32.mrb[0].mxu0
        %v1732 = vpop.f32.mrb[0].mxu0
        %v1733 = vadd.f32 %v804, %v1732
        %v1734 = vpop.f32.mrb[0].mxu0
        %1735 = vmatprep.mubr.bf16.mxu0 0
        %1736 = vmatmul.mubr.bf16.gmra.mrb[0].mxu0 %v698
        %v1737 = vpop.f32.mrb[0].mxu0
        %v1738 = vadd.f32 %v804, %v1737
        %v1739 = vpop.f32.mrb[0].mxu0
        %v1740 = vpop.f32.mrb[0].mxu0
        %v1741 = vadd.f32 %v804, %v1740
        %v1742 = vpop.f32.mrb[0].mxu0
        %1743 = vmatprep.mubr.bf16.mxu0 0
        %1744 = vmatmul.mubr.bf16.gmra.mrb[0].mxu0 %v699
        %v1745 = vpop.f32.mrb[0].mxu0
        %v1746 = vadd.f32 %v804, %v1745
        %v1747 = vpop.f32.mrb[0].mxu0
        %v1748 = vpop.f32.mrb[0].mxu0
        %v1749 = vadd.f32 %v804, %v1748
        %v1750 = vpop.f32.mrb[0].mxu0
        %1751 = vmatprep.mubr.bf16.mxu0 0
        %1752 = vmatmul.mubr.bf16.gmra.mrb[0].mxu0 %v700
        %v1753 = vpop.f32.mrb[0].mxu0
        %v1754 = vadd.f32 %v804, %v1753
        %v1755 = vpop.f32.mrb[0].mxu0
        %v1756 = vpop.f32.mrb[0].mxu0
        %v1757 = vadd.f32 %v804, %v1756
        %v1758 = vpop.f32.mrb[0].mxu0
        %1759 = vmatprep.mubr.bf16.mxu0 0
        %1760 = vmatmul.mubr.bf16.gmra.mrb[0].mxu0 %v701
        %v1761 = vpop.f32.mrb[0].mxu0
        %v1762 = vadd.f32 %v804, %v1761
        %v1763 = vpop.f32.mrb[0].mxu0
        %v1764 = vpop.f32.mrb[0].mxu0
        %v1765 = vadd.f32 %v804, %v1764
        %v1766 = vpop.f32.mrb[0].mxu0
        %1767 = vmatprep.mubr.bf16.mxu0 0
        %1768 = vmatmul.mubr.bf16.gmra.mrb[0].mxu0 %v702
        %v1769 = vpop.f32.mrb[0].mxu0
        %v1770 = vadd.f32 %v804, %v1769
        %v1771 = vpop.f32.mrb[0].mxu0
        %v1772 = vpop.f32.mrb[0].mxu0
        %v1773 = vadd.f32 %v804, %v1772
        %v1774 = vpop.f32.mrb[0].mxu0
        %1775 = vmatprep.mubr.bf16.mxu0 0
        %1776 = vmatmul.mubr.bf16.gmra.mrb[0].mxu0 %v703
        %v1777 = vpop.f32.mrb[0].mxu0
        %v1778 = vadd.f32 %v804, %v1777
        %v1779 = vpop.f32.mrb[0].mxu0
        %v1780 = vpop.f32.mrb[0].mxu0
        %v1781 = vadd.f32 %v804, %v1780
        %v1782 = vpop.f32.mrb[0].mxu0
        %1783 = vmatprep.mubr.bf16.mxu0 0
        %1784 = vmatmul.mubr.bf16.gmra.mrb[0].mxu0 %v704
        %v1785 = vpop.f32.mrb[0].mxu0
        %v1786 = vadd.f32 %v804, %v1785
        %v1787 = vpop.f32.mrb[0].mxu0
        %v1788 = vpop.f32.mrb[0].mxu0
        %v1789 = vadd.f32 %v804, %v1788
        %v1790 = vpop.f32.mrb[0].mxu0
        %1791 = vmatprep.mubr.bf16.mxu0 0
        %1792 = vmatmul.mubr.bf16.gmra.mrb[0].mxu0 %v705
        %v1793 = vpop.f32.mrb[0].mxu0
        %v1794 = vadd.f32 %v804, %v1793
        %v1795 = vpop.f32.mrb[0].mxu0
        %v1796 = vpop.f32.mrb[0].mxu0
        %v1797 = vadd.f32 %v804, %v1796
        %v1798 = vpop.f32.mrb[0].mxu0
        %1799 = vmatprep.mubr.bf16.mxu0 0
        %1800 = vmatmul.mubr.bf16.gmra.mrb[0].mxu0 %v706
        %v1801 = vpop.f32.mrb[0].mxu0
        %v1802 = vadd.f32 %v804, %v1801
        %v1803 = vpop.f32.mrb[0].mxu0
        %v1804 = vpop.f32.mrb[0].mxu0
        %v1805 = vadd.f32 %v804, %v1804
        %v1806 = vpop.f32.mrb[0].mxu0
        %1807 = vmatprep.mubr.bf16.mxu0 0
        %1808 = vmatmul.mubr.bf16.gmra.mrb[0].mxu0 %v707
        %v1809 = vpop.f32.mrb[0].mxu0
        %v1810 = vadd.f32 %v804, %v1809
        %v1811 = vpop.f32.mrb[0].mxu0
        %v1812 = vpop.f32.mrb[0].mxu0
        %v1813 = vadd.f32 %v804, %v1812
        %v1814 = vpop.f32.mrb[0].mxu0
        %1815 = vmatprep.mubr.bf16.mxu0 0
        %1816 = vmatmul.mubr.bf16.gmra.mrb[0].mxu0 %v708
        %v1817 = vpop.f32.mrb[0].mxu0
        %v1818 = vadd.f32 %v804, %v1817
        %v1819 = vpop.f32.mrb[0].mxu0
        %v1820 = vpop.f32.mrb[0].mxu0
        %v1821 = vadd.f32 %v804, %v1820
        %v1822 = vpop.f32.mrb[0].mxu0
        %1823 = vmatprep.mubr.bf16.mxu0 0
        %1824 = vmatmul.mubr.bf16.gmra.mrb[0].mxu0 %v709
        %v1825 = vpop.f32.mrb[0].mxu0
        %v1826 = vadd.f32 %v804, %v1825
        %v1827 = vpop.f32.mrb[0].mxu0
        %v1828 = vpop.f32.mrb[0].mxu0
        %v1829 = vadd.f32 %v804, %v1828
        %v1830 = vpop.f32.mrb[0].mxu0
        %1831 = vmatprep.mubr.bf16.mxu0 0
        %1832 = vmatmul.mubr.bf16.gmra.mrb[0].mxu0 %v710
        %v1833 = vpop.f32.mrb[0].mxu0
        %v1834 = vadd.f32 %v804, %v1833
        %v1835 = vpop.f32.mrb[0].mxu0
        %v1836 = vpop.f32.mrb[0].mxu0
        %v1837 = vadd.f32 %v804, %v1836
        %v1838 = vpop.f32.mrb[0].mxu0
        %1839 = vdwg.mxu0
        %v1840 = vpack.c.bf16 %v1139, %v1135
        %v1841 = vpack.c.bf16 %v1141, %v1137
        %v1842 = vpack.c.bf16 %v1332, %v1328
        %v1843 = vpack.c.bf16 %v1334, %v1330
        %v1844 = vpack.c.bf16 %v1525, %v1521
        %v1845 = vpack.c.bf16 %v1527, %v1523
        %v1846 = vpack.c.bf16 %v1717, %v1714
        %v1847 = vpack.c.bf16 %v1149, %v1145
        %v1848 = vpack.c.bf16 %v1151, %v1147
        %v1849 = vpack.c.bf16 %v1342, %v1338
        %v1850 = vpack.c.bf16 %v1344, %v1340
        %v1851 = vpack.c.bf16 %v1535, %v1531
        %v1852 = vpack.c.bf16 %v1537, %v1533
        %v1853 = vpack.c.bf16 %v1725, %v1722
        %v1854 = vpack.c.bf16 %v1159, %v1155
        %v1855 = vpack.c.bf16 %v1161, %v1157
        %v1856 = vpack.c.bf16 %v1352, %v1348
        %v1857 = vpack.c.bf16 %v1354, %v1350
        %v1858 = vpack.c.bf16 %v1545, %v1541
        %v1859 = vpack.c.bf16 %v1547, %v1543
        %v1860 = vpack.c.bf16 %v1733, %v1730
        %v1861 = vpack.c.bf16 %v1169, %v1165
        %v1862 = vpack.c.bf16 %v1171, %v1167
        %v1863 = vpack.c.bf16 %v1362, %v1358
        %v1864 = vpack.c.bf16 %v1364, %v1360
        %v1865 = vpack.c.bf16 %v1555, %v1551
        %v1866 = vpack.c.bf16 %v1557, %v1553
        %v1867 = vpack.c.bf16 %v1741, %v1738
        %v1868 = vpack.c.bf16 %v1179, %v1175
        %v1869 = vpack.c.bf16 %v1181, %v1177
        %v1870 = vpack.c.bf16 %v1372, %v1368
        %v1871 = vpack.c.bf16 %v1374, %v1370
        %v1872 = vpack.c.bf16 %v1565, %v1561
        %v1873 = vpack.c.bf16 %v1567, %v1563
        %v1874 = vpack.c.bf16 %v1749, %v1746
        %v1875 = vpack.c.bf16 %v1189, %v1185
        %v1876 = vpack.c.bf16 %v1191, %v1187
        %v1877 = vpack.c.bf16 %v1382, %v1378
        %v1878 = vpack.c.bf16 %v1384, %v1380
        %v1879 = vpack.c.bf16 %v1575, %v1571
        %v1880 = vpack.c.bf16 %v1577, %v1573
        %v1881 = vpack.c.bf16 %v1757, %v1754
        %v1882 = vpack.c.bf16 %v1199, %v1195
        %v1883 = vpack.c.bf16 %v1201, %v1197
        %v1884 = vpack.c.bf16 %v1392, %v1388
        %v1885 = vpack.c.bf16 %v1394, %v1390
        %v1886 = vpack.c.bf16 %v1585, %v1581
        %v1887 = vpack.c.bf16 %v1587, %v1583
        %v1888 = vpack.c.bf16 %v1765, %v1762
        %v1889 = vpack.c.bf16 %v1209, %v1205
        %v1890 = vpack.c.bf16 %v1211, %v1207
        %v1891 = vpack.c.bf16 %v1402, %v1398
        %v1892 = vpack.c.bf16 %v1404, %v1400
        %v1893 = vpack.c.bf16 %v1595, %v1591
        %v1894 = vpack.c.bf16 %v1597, %v1593
        %v1895 = vpack.c.bf16 %v1773, %v1770
        %v1896 = vpack.c.bf16 %v1219, %v1215
        %v1897 = vpack.c.bf16 %v1221, %v1217
        %v1898 = vpack.c.bf16 %v1412, %v1408
        %v1899 = vpack.c.bf16 %v1414, %v1410
        %v1900 = vpack.c.bf16 %v1605, %v1601
        %v1901 = vpack.c.bf16 %v1607, %v1603
        %v1902 = vpack.c.bf16 %v1781, %v1778
        %v1903 = vpack.c.bf16 %v1229, %v1225
        %v1904 = vpack.c.bf16 %v1231, %v1227
        %v1905 = vpack.c.bf16 %v1422, %v1418
        %v1906 = vpack.c.bf16 %v1424, %v1420
        %v1907 = vpack.c.bf16 %v1615, %v1611
        %v1908 = vpack.c.bf16 %v1617, %v1613
        %v1909 = vpack.c.bf16 %v1789, %v1786
        %v1910 = vpack.c.bf16 %v1239, %v1235
        %v1911 = vpack.c.bf16 %v1241, %v1237
        %v1912 = vpack.c.bf16 %v1432, %v1428
        %v1913 = vpack.c.bf16 %v1434, %v1430
        %v1914 = vpack.c.bf16 %v1625, %v1621
        %v1915 = vpack.c.bf16 %v1627, %v1623
        %v1916 = vpack.c.bf16 %v1797, %v1794
        %v1917 = vpack.c.bf16 %v1249, %v1245
        %v1918 = vpack.c.bf16 %v1251, %v1247
        %v1919 = vpack.c.bf16 %v1442, %v1438
        %v1920 = vpack.c.bf16 %v1444, %v1440
        %v1921 = vpack.c.bf16 %v1635, %v1631
        %v1922 = vpack.c.bf16 %v1637, %v1633
        %v1923 = vpack.c.bf16 %v1805, %v1802
        %v1924 = vpack.c.bf16 %v1259, %v1255
        %v1925 = vpack.c.bf16 %v1261, %v1257
        %v1926 = vpack.c.bf16 %v1452, %v1448
        %v1927 = vpack.c.bf16 %v1454, %v1450
        %v1928 = vpack.c.bf16 %v1645, %v1641
        %v1929 = vpack.c.bf16 %v1647, %v1643
        %v1930 = vpack.c.bf16 %v1813, %v1810
        %v1931 = vpack.c.bf16 %v1269, %v1265
        %v1932 = vpack.c.bf16 %v1271, %v1267
        %v1933 = vpack.c.bf16 %v1462, %v1458
        %v1934 = vpack.c.bf16 %v1464, %v1460
        %v1935 = vpack.c.bf16 %v1655, %v1651
        %v1936 = vpack.c.bf16 %v1657, %v1653
        %v1937 = vpack.c.bf16 %v1821, %v1818
        %v1938 = vpack.c.bf16 %v1279, %v1275
        %v1939 = vpack.c.bf16 %v1281, %v1277
        %v1940 = vpack.c.bf16 %v1472, %v1468
        %v1941 = vpack.c.bf16 %v1474, %v1470
        %v1942 = vpack.c.bf16 %v1665, %v1661
        %v1943 = vpack.c.bf16 %v1667, %v1663
        %v1944 = vpack.c.bf16 %v1829, %v1826
        %v1945 = vpack.c.bf16 %v1289, %v1285
        %v1946 = vpack.c.bf16 %v1291, %v1287
        %v1947 = vpack.c.bf16 %v1482, %v1478
        %v1948 = vpack.c.bf16 %v1484, %v1480
        %v1949 = vpack.c.bf16 %v1675, %v1671
        %v1950 = vpack.c.bf16 %v1677, %v1673
        %v1951 = vpack.c.bf16 %v1837, %v1834
        %v1952 = vmul.bf16 %v677, %v1840
        %v1953 = vmul.bf16 %v677, %v1841
        %v1954 = vmul.bf16 %v677, %v1842
        %v1955 = vmul.bf16 %v677, %v1843
        %v1956 = vmul.bf16 %v677, %v1844
        %v1957 = vmul.bf16 %v677, %v1845
        %v1958 = vmul.bf16 %v677, %v1846
        %v1959 = vmul.bf16 %v677, %v1847
        %v1960 = vmul.bf16 %v677, %v1848
        %v1961 = vmul.bf16 %v677, %v1849
        %v1962 = vmul.bf16 %v677, %v1850
        %v1963 = vmul.bf16 %v677, %v1851
        %v1964 = vmul.bf16 %v677, %v1852
        %v1965 = vmul.bf16 %v677, %v1853
        %v1966 = vmul.bf16 %v677, %v1854
        %v1967 = vmul.bf16 %v677, %v1855
        %v1968 = vmul.bf16 %v677, %v1856
        %v1969 = vmul.bf16 %v677, %v1857
        %v1970 = vmul.bf16 %v677, %v1858
        %v1971 = vmul.bf16 %v677, %v1859
        %v1972 = vmul.bf16 %v677, %v1860
        %v1973 = vmul.bf16 %v677, %v1861
        %v1974 = vmul.bf16 %v677, %v1862
        %v1975 = vmul.bf16 %v677, %v1863
        %v1976 = vmul.bf16 %v677, %v1864
        %v1977 = vmul.bf16 %v677, %v1865
        %v1978 = vmul.bf16 %v677, %v1866
        %v1979 = vmul.bf16 %v677, %v1867
        %v1980 = vmul.bf16 %v677, %v1868
        %v1981 = vmul.bf16 %v677, %v1869
        %v1982 = vmul.bf16 %v677, %v1870
        %v1983 = vmul.bf16 %v677, %v1871
        %v1984 = vmul.bf16 %v677, %v1872
        %v1985 = vmul.bf16 %v677, %v1873
        %v1986 = vmul.bf16 %v677, %v1874
        %v1987 = vmul.bf16 %v677, %v1875
        %v1988 = vmul.bf16 %v677, %v1876
        %v1989 = vmul.bf16 %v677, %v1877
        %v1990 = vmul.bf16 %v677, %v1878
        %v1991 = vmul.bf16 %v677, %v1879
        %v1992 = vmul.bf16 %v677, %v1880
        %v1993 = vmul.bf16 %v677, %v1881
        %v1994 = vmul.bf16 %v677, %v1882
        %v1995 = vmul.bf16 %v677, %v1883
        %v1996 = vmul.bf16 %v677, %v1884
        %v1997 = vmul.bf16 %v677, %v1885
        %v1998 = vmul.bf16 %v677, %v1886
        %v1999 = vmul.bf16 %v677, %v1887
        %v2000 = vmul.bf16 %v677, %v1888
        %v2001 = vmul.bf16 %v677, %v1889
        %v2002 = vmul.bf16 %v677, %v1890
        %v2003 = vmul.bf16 %v677, %v1891
        %v2004 = vmul.bf16 %v677, %v1892
        %v2005 = vmul.bf16 %v677, %v1893
        %v2006 = vmul.bf16 %v677, %v1894
        %v2007 = vmul.bf16 %v677, %v1895
        %v2008 = vmul.bf16 %v677, %v1896
        %v2009 = vmul.bf16 %v677, %v1897
        %v2010 = vmul.bf16 %v677, %v1898
        %v2011 = vmul.bf16 %v677, %v1899
        %v2012 = vmul.bf16 %v677, %v1900
        %v2013 = vmul.bf16 %v677, %v1901
        %v2014 = vmul.bf16 %v677, %v1902
        %v2015 = vmul.bf16 %v677, %v1903
        %v2016 = vmul.bf16 %v677, %v1904
        %v2017 = vmul.bf16 %v677, %v1905
        %v2018 = vmul.bf16 %v677, %v1906
        %v2019 = vmul.bf16 %v677, %v1907
        %v2020 = vmul.bf16 %v677, %v1908
        %v2021 = vmul.bf16 %v677, %v1909
        %v2022 = vmul.bf16 %v677, %v1910
        %v2023 = vmul.bf16 %v677, %v1911
        %v2024 = vmul.bf16 %v677, %v1912
        %v2025 = vmul.bf16 %v677, %v1913
        %v2026 = vmul.bf16 %v677, %v1914
        %v2027 = vmul.bf16 %v677, %v1915
        %v2028 = vmul.bf16 %v677, %v1916
        %v2029 = vmul.bf16 %v677, %v1917
        %v2030 = vmul.bf16 %v677, %v1918
        %v2031 = vmul.bf16 %v677, %v1919
        %v2032 = vmul.bf16 %v677, %v1920
        %v2033 = vmul.bf16 %v677, %v1921
        %v2034 = vmul.bf16 %v677, %v1922
        %v2035 = vmul.bf16 %v677, %v1923
        %v2036 = vmul.bf16 %v677, %v1924
        %v2037 = vmul.bf16 %v677, %v1925
        %v2038 = vmul.bf16 %v677, %v1926
        %v2039 = vmul.bf16 %v677, %v1927
        %v2040 = vmul.bf16 %v677, %v1928
        %v2041 = vmul.bf16 %v677, %v1929
        %v2042 = vmul.bf16 %v677, %v1930
        %v2043 = vmul.bf16 %v677, %v1931
        %v2044 = vmul.bf16 %v677, %v1932
        %v2045 = vmul.bf16 %v677, %v1933
        %v2046 = vmul.bf16 %v677, %v1934
        %v2047 = vmul.bf16 %v677, %v1935
        %v2048 = vmul.bf16 %v677, %v1936
        %v2049 = vmul.bf16 %v677, %v1937
        %v2050 = vmul.bf16 %v677, %v1938
        %v2051 = vmul.bf16 %v677, %v1939
        %v2052 = vmul.bf16 %v677, %v1940
        %v2053 = vmul.bf16 %v677, %v1941
        %v2054 = vmul.bf16 %v677, %v1942
        %v2055 = vmul.bf16 %v677, %v1943
        %v2056 = vmul.bf16 %v677, %v1944
        %v2057 = vmul.bf16 %v677, %v1945
        %v2058 = vmul.bf16 %v677, %v1946
        %v2059 = vmul.bf16 %v677, %v1947
        %v2060 = vmul.bf16 %v677, %v1948
        %v2061 = vmul.bf16 %v677, %v1949
        %v2062 = vmul.bf16 %v677, %v1950
        %v2063 = vmul.bf16 %v677, %v1951
        %v2064 = vmax.bf16 %v1840, %v1952
        %v2065 = vmax.bf16 %v1841, %v1953
        %v2066 = vmax.bf16 %v1842, %v1954
        %v2067 = vmax.bf16 %v1843, %v1955
        %v2068 = vmax.bf16 %v1844, %v1956
        %v2069 = vmax.bf16 %v1845, %v1957
        %v2070 = vmax.bf16 %v1846, %v1958
        %v2071 = vmax.bf16 %v1847, %v1959
        %v2072 = vmax.bf16 %v1848, %v1960
        %v2073 = vmax.bf16 %v1849, %v1961
        %v2074 = vmax.bf16 %v1850, %v1962
        %v2075 = vmax.bf16 %v1851, %v1963
        %v2076 = vmax.bf16 %v1852, %v1964
        %v2077 = vmax.bf16 %v1853, %v1965
        %v2078 = vmax.bf16 %v1854, %v1966
        %v2079 = vmax.bf16 %v1855, %v1967
        %v2080 = vmax.bf16 %v1856, %v1968
        %v2081 = vmax.bf16 %v1857, %v1969
        %v2082 = vmax.bf16 %v1858, %v1970
        %v2083 = vmax.bf16 %v1859, %v1971
        %v2084 = vmax.bf16 %v1860, %v1972
        %v2085 = vmax.bf16 %v1861, %v1973
        %v2086 = vmax.bf16 %v1862, %v1974
        %v2087 = vmax.bf16 %v1863, %v1975
        %v2088 = vmax.bf16 %v1864, %v1976
        %v2089 = vmax.bf16 %v1865, %v1977
        %v2090 = vmax.bf16 %v1866, %v1978
        %v2091 = vmax.bf16 %v1867, %v1979
        %v2092 = vmax.bf16 %v1868, %v1980
        %v2093 = vmax.bf16 %v1869, %v1981
        %v2094 = vmax.bf16 %v1870, %v1982
        %v2095 = vmax.bf16 %v1871, %v1983
        %v2096 = vmax.bf16 %v1872, %v1984
        %v2097 = vmax.bf16 %v1873, %v1985
        %v2098 = vmax.bf16 %v1874, %v1986
        %v2099 = vmax.bf16 %v1875, %v1987
        %v2100 = vmax.bf16 %v1876, %v1988
        %v2101 = vmax.bf16 %v1877, %v1989
        %v2102 = vmax.bf16 %v1878, %v1990
        %v2103 = vmax.bf16 %v1879, %v1991
        %v2104 = vmax.bf16 %v1880, %v1992
        %v2105 = vmax.bf16 %v1881, %v1993
        %v2106 = vmax.bf16 %v1882, %v1994
        %v2107 = vmax.bf16 %v1883, %v1995
        %v2108 = vmax.bf16 %v1884, %v1996
        %v2109 = vmax.bf16 %v1885, %v1997
        %v2110 = vmax.bf16 %v1886, %v1998
        %v2111 = vmax.bf16 %v1887, %v1999
        %v2112 = vmax.bf16 %v1888, %v2000
        %v2113 = vmax.bf16 %v1889, %v2001
        %v2114 = vmax.bf16 %v1890, %v2002
        %v2115 = vmax.bf16 %v1891, %v2003
        %v2116 = vmax.bf16 %v1892, %v2004
        %v2117 = vmax.bf16 %v1893, %v2005
        %v2118 = vmax.bf16 %v1894, %v2006
        %v2119 = vmax.bf16 %v1895, %v2007
        %v2120 = vmax.bf16 %v1896, %v2008
        %v2121 = vmax.bf16 %v1897, %v2009
        %v2122 = vmax.bf16 %v1898, %v2010
        %v2123 = vmax.bf16 %v1899, %v2011
        %v2124 = vmax.bf16 %v1900, %v2012
        %v2125 = vmax.bf16 %v1901, %v2013
        %v2126 = vmax.bf16 %v1902, %v2014
        %v2127 = vmax.bf16 %v1903, %v2015
        %v2128 = vmax.bf16 %v1904, %v2016
        %v2129 = vmax.bf16 %v1905, %v2017
        %v2130 = vmax.bf16 %v1906, %v2018
        %v2131 = vmax.bf16 %v1907, %v2019
        %v2132 = vmax.bf16 %v1908, %v2020
        %v2133 = vmax.bf16 %v1909, %v2021
        %v2134 = vmax.bf16 %v1910, %v2022
        %v2135 = vmax.bf16 %v1911, %v2023
        %v2136 = vmax.bf16 %v1912, %v2024
        %v2137 = vmax.bf16 %v1913, %v2025
        %v2138 = vmax.bf16 %v1914, %v2026
        %v2139 = vmax.bf16 %v1915, %v2027
        %v2140 = vmax.bf16 %v1916, %v2028
        %v2141 = vmax.bf16 %v1917, %v2029
        %v2142 = vmax.bf16 %v1918, %v2030
        %v2143 = vmax.bf16 %v1919, %v2031
        %v2144 = vmax.bf16 %v1920, %v2032
        %v2145 = vmax.bf16 %v1921, %v2033
        %v2146 = vmax.bf16 %v1922, %v2034
        %v2147 = vmax.bf16 %v1923, %v2035
        %v2148 = vmax.bf16 %v1924, %v2036
        %v2149 = vmax.bf16 %v1925, %v2037
        %v2150 = vmax.bf16 %v1926, %v2038
        %v2151 = vmax.bf16 %v1927, %v2039
        %v2152 = vmax.bf16 %v1928, %v2040
        %v2153 = vmax.bf16 %v1929, %v2041
        %v2154 = vmax.bf16 %v1930, %v2042
        %v2155 = vmax.bf16 %v1931, %v2043
        %v2156 = vmax.bf16 %v1932, %v2044
        %v2157 = vmax.bf16 %v1933, %v2045
        %v2158 = vmax.bf16 %v1934, %v2046
        %v2159 = vmax.bf16 %v1935, %v2047
        %v2160 = vmax.bf16 %v1936, %v2048
        %v2161 = vmax.bf16 %v1937, %v2049
        %v2162 = vmax.bf16 %v1938, %v2050
        %v2163 = vmax.bf16 %v1939, %v2051
        %v2164 = vmax.bf16 %v1940, %v2052
        %v2165 = vmax.bf16 %v1941, %v2053
        %v2166 = vmax.bf16 %v1942, %v2054
        %v2167 = vmax.bf16 %v1943, %v2055
        %v2168 = vmax.bf16 %v1944, %v2056
        %v2169 = vmax.bf16 %v1945, %v2057
        %v2170 = vmax.bf16 %v1946, %v2058
        %v2171 = vmax.bf16 %v1947, %v2059
        %v2172 = vmax.bf16 %v1948, %v2060
        %v2173 = vmax.bf16 %v1949, %v2061
        %v2174 = vmax.bf16 %v1950, %v2062
        %v2175 = vmax.bf16 %v1951, %v2063
        %v2176 = vld [vmem:[#allocation2] sm:$0xf]
        %v2177 = vld [vmem:[#allocation2 + $0x4] sm:$0xf]
        %v2178 = vld [vmem:[#allocation2 + $0x8] sm:$0xf]
        %v2179 = vld [vmem:[#allocation2 + $0xc] sm:$0xf]
        %v2180 = vld [vmem:[#allocation2 + $0x10] sm:$0xf]
        %v2181 = vld [vmem:[#allocation2 + $0x14] sm:$0xf]
        %v2182 = vld [vmem:[#allocation2 + $0x18] sm:$0xf]
        %v2183 = vld [vmem:[#allocation2 + $0x1c] sm:$0xf]
        %v2184 = vld [vmem:[#allocation2 + $0x20] sm:$0xf]
        %v2185 = vld [vmem:[#allocation2 + $0x24] sm:$0xf]
        %v2186 = vld [vmem:[#allocation2 + $0x28] sm:$0xf]
        %v2187 = vld [vmem:[#allocation2 + $0x2c] sm:$0xf]
        %v2188 = vld [vmem:[#allocation2 + $0x30] sm:$0xf]
        %v2189 = vld [vmem:[#allocation2 + $0x34] sm:$0xf]
        %v2190 = vld [vmem:[#allocation2 + $0x38] sm:$0xf]
        %v2191 = vld [vmem:[#allocation2 + $0x3c] sm:$0xf]
        %v2192 = vld [vmem:[#allocation2 + $0x40] sm:$0xf]
        %v2193 = vld [vmem:[#allocation2 + $0x44] sm:$0xf]
        %v2194 = vld [vmem:[#allocation2 + $0x48] sm:$0xf]
        %v2195 = vld [vmem:[#allocation2 + $0x4c] sm:$0xf]
        %v2196 = vld [vmem:[#allocation2 + $0x50] sm:$0xf]
        %v2197 = vld [vmem:[#allocation2 + $0x54] sm:$0xf]
        %v2198 = vld [vmem:[#allocation2 + $0x58] sm:$0xf]
        %v2199 = vld [vmem:[#allocation2 + $0x5c] sm:$0xf]
        %v2200 = vld [vmem:[#allocation2 + $0x60] sm:$0xf]
        %v2201 = vld [vmem:[#allocation2 + $0x64] sm:$0xf]
        %v2202 = vld [vmem:[#allocation2 + $0x68] sm:$0xf]
        %v2203 = vld [vmem:[#allocation2 + $0x6c] sm:$0xf]
        %v2204 = vld [vmem:[#allocation2 + $0x70] sm:$0xf]
        %v2205 = vld [vmem:[#allocation2 + $0x74] sm:$0xf]
        %v2206 = vld [vmem:[#allocation2 + $0x78] sm:$0xf]
        %v2207 = vld [vmem:[#allocation2 + $0x7c] sm:$0xf]
        %v2208 = vld [vmem:[#allocation2 + $0x80] sm:$0xf]
        %v2209 = vld [vmem:[#allocation2 + $0x84] sm:$0xf]
        %v2210 = vld [vmem:[#allocation2 + $0x88] sm:$0xf]
        %v2211 = vld [vmem:[#allocation2 + $0x8c] sm:$0xf]
        %v2212 = vld [vmem:[#allocation2 + $0x90] sm:$0xf]
        %v2213 = vld [vmem:[#allocation2 + $0x94] sm:$0xf]
        %v2214 = vld [vmem:[#allocation2 + $0x98] sm:$0xf]
        %v2215 = vld [vmem:[#allocation2 + $0x9c] sm:$0xf]
        %v2216 = vld [vmem:[#allocation2 + $0xa0] sm:$0xf]
        %v2217 = vld [vmem:[#allocation2 + $0xa4] sm:$0xf]
        %v2218 = vld [vmem:[#allocation2 + $0xa8] sm:$0xf]
        %v2219 = vld [vmem:[#allocation2 + $0xac] sm:$0xf]
        %v2220 = vld [vmem:[#allocation2 + $0xb0] sm:$0xf]
        %v2221 = vld [vmem:[#allocation2 + $0xb4] sm:$0xf]
        %v2222 = vld [vmem:[#allocation2 + $0xb8] sm:$0xf]
        %v2223 = vld [vmem:[#allocation2 + $0xbc] sm:$0xf]
        %v2224 = vld [vmem:[#allocation2 + $0xc0] sm:$0xf]
        %v2225 = vld [vmem:[#allocation2 + $0xc4] sm:$0xf]
        %v2226 = vld [vmem:[#allocation2 + $0xc8] sm:$0xf]
        %v2227 = vld [vmem:[#allocation2 + $0xcc] sm:$0xf]
        %v2228 = vld [vmem:[#allocation2 + $0xd0] sm:$0xf]
        %v2229 = vld [vmem:[#allocation2 + $0xd4] sm:$0xf]
        %v2230 = vld [vmem:[#allocation2 + $0xd8] sm:$0xf]
        %v2231 = vld [vmem:[#allocation2 + $0xdc] sm:$0xf]
        %v2232 = vld [vmem:[#allocation2 + $0xe0] sm:$0xf]
        %v2233 = vld [vmem:[#allocation2 + $0xe4] sm:$0xf]
        %v2234 = vld [vmem:[#allocation2 + $0xe8] sm:$0xf]
        %v2235 = vld [vmem:[#allocation2 + $0xec] sm:$0xf]
        %v2236 = vld [vmem:[#allocation2 + $0xf0] sm:$0xf]
        %v2237 = vld [vmem:[#allocation2 + $0xf4] sm:$0xf]
        %v2238 = vld [vmem:[#allocation2 + $0xf8] sm:$0xf]
        %v2239 = vld [vmem:[#allocation2 + $0xfc] sm:$0xf]
        %v2240 = vld [vmem:[#allocation2 + $0x100] sm:$0xf]
        %v2241 = vld [vmem:[#allocation2 + $0x104] sm:$0xf]
        %v2242 = vld [vmem:[#allocation2 + $0x108] sm:$0xf]
        %v2243 = vld [vmem:[#allocation2 + $0x10c] sm:$0xf]
        %v2244 = vld [vmem:[#allocation2 + $0x110] sm:$0xf]
        %v2245 = vld [vmem:[#allocation2 + $0x114] sm:$0xf]
        %v2246 = vld [vmem:[#allocation2 + $0x118] sm:$0xf]
        %v2247 = vld [vmem:[#allocation2 + $0x11c] sm:$0xf]
        %v2248 = vld [vmem:[#allocation2 + $0x120] sm:$0xf]
        %v2249 = vld [vmem:[#allocation2 + $0x124] sm:$0xf]
        %v2250 = vld [vmem:[#allocation2 + $0x128] sm:$0xf]
        %v2251 = vld [vmem:[#allocation2 + $0x12c] sm:$0xf]
        %v2252 = vld [vmem:[#allocation2 + $0x130] sm:$0xf]
        %v2253 = vld [vmem:[#allocation2 + $0x134] sm:$0xf]
        %v2254 = vld [vmem:[#allocation2 + $0x138] sm:$0xf]
        %v2255 = vld [vmem:[#allocation2 + $0x13c] sm:$0xf]
        %v2256 = vld [vmem:[#allocation2 + $0x140] sm:$0xf]
        %v2257 = vld [vmem:[#allocation2 + $0x144] sm:$0xf]
        %v2258 = vld [vmem:[#allocation2 + $0x148] sm:$0xf]
        %v2259 = vld [vmem:[#allocation2 + $0x14c] sm:$0xf]
        %v2260 = vld [vmem:[#allocation2 + $0x150] sm:$0xf]
        %v2261 = vld [vmem:[#allocation2 + $0x154] sm:$0xf]
        %v2262 = vld [vmem:[#allocation2 + $0x158] sm:$0xf]
        %v2263 = vld [vmem:[#allocation2 + $0x15c] sm:$0xf]
        %v2264 = vld [vmem:[#allocation2 + $0x160] sm:$0xf]
        %v2265 = vld [vmem:[#allocation2 + $0x164] sm:$0xf]
        %v2266 = vld [vmem:[#allocation2 + $0x168] sm:$0xf]
        %v2267 = vld [vmem:[#allocation2 + $0x16c] sm:$0xf]
        %v2268 = vld [vmem:[#allocation2 + $0x170] sm:$0xf]
        %v2269 = vld [vmem:[#allocation2 + $0x174] sm:$0xf]
        %v2270 = vld [vmem:[#allocation2 + $0x178] sm:$0xf]
        %v2271 = vld [vmem:[#allocation2 + $0x17c] sm:$0xf]
        %v2272 = vld [vmem:[#allocation2 + $0x180] sm:$0xf]
        %v2273 = vld [vmem:[#allocation2 + $0x184] sm:$0xf]
        %v2274 = vld [vmem:[#allocation2 + $0x188] sm:$0xf]
        %v2275 = vld [vmem:[#allocation2 + $0x18c] sm:$0xf]
        %v2276 = vld [vmem:[#allocation2 + $0x190] sm:$0xf]
        %v2277 = vld [vmem:[#allocation2 + $0x194] sm:$0xf]
        %v2278 = vld [vmem:[#allocation2 + $0x198] sm:$0xf]
        %v2279 = vld [vmem:[#allocation2 + $0x19c] sm:$0xf]
        %v2280 = vld [vmem:[#allocation2 + $0x1a0] sm:$0xf]
        %v2281 = vld [vmem:[#allocation2 + $0x1a4] sm:$0xf]
        %v2282 = vld [vmem:[#allocation2 + $0x1a8] sm:$0xf]
        %v2283 = vld [vmem:[#allocation2 + $0x1ac] sm:$0xf]
        %v2284 = vld [vmem:[#allocation2 + $0x1b0] sm:$0xf]
        %v2285 = vld [vmem:[#allocation2 + $0x1b4] sm:$0xf]
        %v2286 = vld [vmem:[#allocation2 + $0x1b8] sm:$0xf]
        %v2287 = vld [vmem:[#allocation2 + $0x1bc] sm:$0xf]
        %v2288 = vld [vmem:[%s6] sm:$0x1]
        %v2290 = vlaneseq
        %v2291 = vshrl.u32 %v2290, 7
        %v2292 = vsub.s32 0, %v2291
        %v2293 = vrot.slane %v2288, %v2292
        %v2407 = vunpack.c.l.b16 %v2176
        %v2408 = vunpack.c.l.b16 %v2177
        %v2409 = vunpack.c.l.b16 %v2178
        %v2410 = vunpack.c.l.b16 %v2179
        %v2411 = vunpack.c.l.b16 %v2180
        %v2412 = vunpack.c.l.b16 %v2181
        %v2413 = vunpack.c.l.b16 %v2182
        %v2414 = vunpack.c.l.b16 %v2183
        %v2415 = vunpack.c.l.b16 %v2184
        %v2416 = vunpack.c.l.b16 %v2185
        %v2417 = vunpack.c.l.b16 %v2186
        %v2418 = vunpack.c.l.b16 %v2187
        %v2419 = vunpack.c.l.b16 %v2188
        %v2420 = vunpack.c.l.b16 %v2189
        %v2421 = vunpack.c.l.b16 %v2190
        %v2422 = vunpack.c.l.b16 %v2191
        %v2423 = vunpack.c.l.b16 %v2192
        %v2424 = vunpack.c.l.b16 %v2193
        %v2425 = vunpack.c.l.b16 %v2194
        %v2426 = vunpack.c.l.b16 %v2195
        %v2427 = vunpack.c.l.b16 %v2196
        %v2428 = vunpack.c.l.b16 %v2197
        %v2429 = vunpack.c.l.b16 %v2198
        %v2430 = vunpack.c.l.b16 %v2199
        %v2431 = vunpack.c.l.b16 %v2200
        %v2432 = vunpack.c.l.b16 %v2201
        %v2433 = vunpack.c.l.b16 %v2202
        %v2434 = vunpack.c.l.b16 %v2203
        %v2435 = vunpack.c.l.b16 %v2204
        %v2436 = vunpack.c.l.b16 %v2205
        %v2437 = vunpack.c.l.b16 %v2206
        %v2438 = vunpack.c.l.b16 %v2207
        %v2439 = vunpack.c.l.b16 %v2208
        %v2440 = vunpack.c.l.b16 %v2209
        %v2441 = vunpack.c.l.b16 %v2210
        %v2442 = vunpack.c.l.b16 %v2211
        %v2443 = vunpack.c.l.b16 %v2212
        %v2444 = vunpack.c.l.b16 %v2213
        %v2445 = vunpack.c.l.b16 %v2214
        %v2446 = vunpack.c.l.b16 %v2215
        %v2447 = vunpack.c.l.b16 %v2216
        %v2448 = vunpack.c.l.b16 %v2217
        %v2449 = vunpack.c.l.b16 %v2218
        %v2450 = vunpack.c.l.b16 %v2219
        %v2451 = vunpack.c.l.b16 %v2220
        %v2452 = vunpack.c.l.b16 %v2221
        %v2453 = vunpack.c.l.b16 %v2222
        %v2454 = vunpack.c.l.b16 %v2223
        %v2455 = vunpack.c.l.b16 %v2224
        %v2456 = vunpack.c.l.b16 %v2225
        %v2457 = vunpack.c.l.b16 %v2226
        %v2458 = vunpack.c.l.b16 %v2227
        %v2459 = vunpack.c.l.b16 %v2228
        %v2460 = vunpack.c.l.b16 %v2229
        %v2461 = vunpack.c.l.b16 %v2230
        %v2462 = vunpack.c.l.b16 %v2231
        %v2463 = vunpack.c.l.b16 %v2232
        %v2464 = vunpack.c.l.b16 %v2233
        %v2465 = vunpack.c.l.b16 %v2234
        %v2466 = vunpack.c.l.b16 %v2235
        %v2467 = vunpack.c.l.b16 %v2236
        %v2468 = vunpack.c.l.b16 %v2237
        %v2469 = vunpack.c.l.b16 %v2238
        %v2470 = vunpack.c.l.b16 %v2239
        %v2471 = vunpack.c.l.b16 %v2240
        %v2472 = vunpack.c.l.b16 %v2241
        %v2473 = vunpack.c.l.b16 %v2242
        %v2474 = vunpack.c.l.b16 %v2243
        %v2475 = vunpack.c.l.b16 %v2244
        %v2476 = vunpack.c.l.b16 %v2245
        %v2477 = vunpack.c.l.b16 %v2246
        %v2478 = vunpack.c.l.b16 %v2247
        %v2479 = vunpack.c.l.b16 %v2248
        %v2480 = vunpack.c.l.b16 %v2249
        %v2481 = vunpack.c.l.b16 %v2250
        %v2482 = vunpack.c.l.b16 %v2251
        %v2483 = vunpack.c.l.b16 %v2252
        %v2484 = vunpack.c.l.b16 %v2253
        %v2485 = vunpack.c.l.b16 %v2254
        %v2486 = vunpack.c.l.b16 %v2255
        %v2487 = vunpack.c.l.b16 %v2256
        %v2488 = vunpack.c.l.b16 %v2257
        %v2489 = vunpack.c.l.b16 %v2258
        %v2490 = vunpack.c.l.b16 %v2259
        %v2491 = vunpack.c.l.b16 %v2260
        %v2492 = vunpack.c.l.b16 %v2261
        %v2493 = vunpack.c.l.b16 %v2262
        %v2494 = vunpack.c.l.b16 %v2263
        %v2495 = vunpack.c.l.b16 %v2264
        %v2496 = vunpack.c.l.b16 %v2265
        %v2497 = vunpack.c.l.b16 %v2266
        %v2498 = vunpack.c.l.b16 %v2267
        %v2499 = vunpack.c.l.b16 %v2268
        %v2500 = vunpack.c.l.b16 %v2269
        %v2501 = vunpack.c.l.b16 %v2270
        %v2502 = vunpack.c.l.b16 %v2271
        %v2503 = vunpack.c.l.b16 %v2272
        %v2504 = vunpack.c.l.b16 %v2273
        %v2505 = vunpack.c.l.b16 %v2274
        %v2506 = vunpack.c.l.b16 %v2275
        %v2507 = vunpack.c.l.b16 %v2276
        %v2508 = vunpack.c.l.b16 %v2277
        %v2509 = vunpack.c.l.b16 %v2278
        %v2510 = vunpack.c.l.b16 %v2279
        %v2511 = vunpack.c.l.b16 %v2280
        %v2512 = vunpack.c.l.b16 %v2281
        %v2513 = vunpack.c.l.b16 %v2282
        %v2514 = vunpack.c.l.b16 %v2283
        %v2515 = vunpack.c.l.b16 %v2284
        %v2516 = vunpack.c.l.b16 %v2285
        %v2517 = vunpack.c.l.b16 %v2286
        %v2518 = vunpack.c.l.b16 %v2287
        %v2519 = vpack.c.b16 %v2408, %v2407
        %v2520 = vpack.c.b16 %v2410, %v2409
        %v2521 = vpack.c.b16 %v2412, %v2411
        %v2522 = vpack.c.b16 %v2414, %v2413
        %v2523 = vpack.c.b16 %v2416, %v2415
        %v2524 = vpack.c.b16 %v2418, %v2417
        %v2525 = vpack.c.b16 %v2420, %v2419
        %v2526 = vpack.c.b16 %v2422, %v2421
        %v2527 = vpack.c.b16 %v2424, %v2423
        %v2528 = vpack.c.b16 %v2426, %v2425
        %v2529 = vpack.c.b16 %v2428, %v2427
        %v2530 = vpack.c.b16 %v2430, %v2429
        %v2531 = vpack.c.b16 %v2432, %v2431
        %v2532 = vpack.c.b16 %v2434, %v2433
        %v2533 = vpack.c.b16 %v2436, %v2435
        %v2534 = vpack.c.b16 %v2438, %v2437
        %v2535 = vpack.c.b16 %v2440, %v2439
        %v2536 = vpack.c.b16 %v2442, %v2441
        %v2537 = vpack.c.b16 %v2444, %v2443
        %v2538 = vpack.c.b16 %v2446, %v2445
        %v2539 = vpack.c.b16 %v2448, %v2447
        %v2540 = vpack.c.b16 %v2450, %v2449
        %v2541 = vpack.c.b16 %v2452, %v2451
        %v2542 = vpack.c.b16 %v2454, %v2453
        %v2543 = vpack.c.b16 %v2456, %v2455
        %v2544 = vpack.c.b16 %v2458, %v2457
        %v2545 = vpack.c.b16 %v2460, %v2459
        %v2546 = vpack.c.b16 %v2462, %v2461
        %v2547 = vpack.c.b16 %v2464, %v2463
        %v2548 = vpack.c.b16 %v2466, %v2465
        %v2549 = vpack.c.b16 %v2468, %v2467
        %v2550 = vpack.c.b16 %v2470, %v2469
        %v2551 = vpack.c.b16 %v2472, %v2471
        %v2552 = vpack.c.b16 %v2474, %v2473
        %v2553 = vpack.c.b16 %v2476, %v2475
        %v2554 = vpack.c.b16 %v2478, %v2477
        %v2555 = vpack.c.b16 %v2480, %v2479
        %v2556 = vpack.c.b16 %v2482, %v2481
        %v2557 = vpack.c.b16 %v2484, %v2483
        %v2558 = vpack.c.b16 %v2486, %v2485
        %v2559 = vpack.c.b16 %v2488, %v2487
        %v2560 = vpack.c.b16 %v2490, %v2489
        %v2561 = vpack.c.b16 %v2492, %v2491
        %v2562 = vpack.c.b16 %v2494, %v2493
        %v2563 = vpack.c.b16 %v2496, %v2495
        %v2564 = vpack.c.b16 %v2498, %v2497
        %v2565 = vpack.c.b16 %v2500, %v2499
        %v2566 = vpack.c.b16 %v2502, %v2501
        %v2567 = vpack.c.b16 %v2504, %v2503
        %v2568 = vpack.c.b16 %v2506, %v2505
        %v2569 = vpack.c.b16 %v2508, %v2507
        %v2570 = vpack.c.b16 %v2510, %v2509
        %v2571 = vpack.c.b16 %v2512, %v2511
        %v2572 = vpack.c.b16 %v2514, %v2513
        %v2573 = vpack.c.b16 %v2516, %v2515
        %v2574 = vpack.c.b16 %v2518, %v2517
        %2631 = vmatprep.subr.bf16.mxu0 0
        %2632 = vmatpush1.bf16.msra.mxu0 %v2519
        %2633 = vmatprep.subr.bf16.mxu0 0
        %2634 = vmatpush1.bf16.msra.mxu0 %v2520
        %2635 = vmatprep.subr.bf16.mxu0 0
        %2636 = vmatpush1.bf16.msra.mxu0 %v2521
        %2637 = vmatprep.subr.bf16.mxu0 0
        %2638 = vmatpush1.bf16.msra.mxu0 %v2522
        %2639 = vmatprep.subr.bf16.mxu0 0
        %2640 = vmatpush1.bf16.msra.mxu0 %v2523
        %2641 = vmatprep.subr.bf16.mxu0 0
        %2642 = vmatpush1.bf16.msra.mxu0 %v2524
        %2643 = vmatprep.subr.bf16.mxu0 0
        %2644 = vmatpush1.bf16.msra.mxu0 %v2525
        %2645 = vmatprep.subr.bf16.mxu0 0
        %2646 = vmatpush1.bf16.msra.mxu0 %v2526
        %2647 = vmatprep.subr.bf16.mxu0 0
        %2648 = vmatpush1.bf16.msra.mxu0 %v2527
        %2649 = vmatprep.subr.bf16.mxu0 0
        %2650 = vmatpush1.bf16.msra.mxu0 %v2528
        %2651 = vmatprep.subr.bf16.mxu0 0
        %2652 = vmatpush1.bf16.msra.mxu0 %v2529
        %2653 = vmatprep.subr.bf16.mxu0 0
        %2654 = vmatpush1.bf16.msra.mxu0 %v2530
        %2655 = vmatprep.subr.bf16.mxu0 0
        %2656 = vmatpush1.bf16.msra.mxu0 %v2531
        %2657 = vmatprep.subr.bf16.mxu0 0
        %2658 = vmatpush1.bf16.msra.mxu0 %v2532
        %2659 = vmatprep.subr.bf16.mxu0 0
        %2660 = vmatpush1.bf16.msra.mxu0 %v2533
        %2661 = vmatprep.subr.bf16.mxu0 0
        %2662 = vmatpush1.bf16.msra.mxu0 %v2534
        %2663 = vmatprep.mubr.bf16.mxu0 %v2065
        %2664 = vmatmul.mubr.bf16.gmra.mrb[0].mxu0 %v2064
        %v2665 = vpop.f32.mrb[0].mxu0
        %v2666 = vadd.f32 %v2293, %v2665
        %v2667 = vpop.f32.mrb[0].mxu0
        %v2668 = vpop.f32.mrb[0].mxu0
        %v2669 = vadd.f32 %v2293, %v2668
        %v2670 = vpop.f32.mrb[0].mxu0
        %2671 = vmatprep.mubr.bf16.mxu0 %v2072
        %2672 = vmatmul.mubr.bf16.gmra.mrb[0].mxu0 %v2071
        %v2673 = vpop.f32.mrb[0].mxu0
        %v2674 = vadd.f32 %v2293, %v2673
        %v2675 = vpop.f32.mrb[0].mxu0
        %v2676 = vpop.f32.mrb[0].mxu0
        %v2677 = vadd.f32 %v2293, %v2676
        %v2678 = vpop.f32.mrb[0].mxu0
        %2679 = vmatprep.mubr.bf16.mxu0 %v2079
        %2680 = vmatmul.mubr.bf16.gmra.mrb[0].mxu0 %v2078
        %v2681 = vpop.f32.mrb[0].mxu0
        %v2682 = vadd.f32 %v2293, %v2681
        %v2683 = vpop.f32.mrb[0].mxu0
        %v2684 = vpop.f32.mrb[0].mxu0
        %v2685 = vadd.f32 %v2293, %v2684
        %v2686 = vpop.f32.mrb[0].mxu0
        %2687 = vmatprep.mubr.bf16.mxu0 %v2086
        %2688 = vmatmul.mubr.bf16.gmra.mrb[0].mxu0 %v2085
        %v2689 = vpop.f32.mrb[0].mxu0
        %v2690 = vadd.f32 %v2293, %v2689
        %v2691 = vpop.f32.mrb[0].mxu0
        %v2692 = vpop.f32.mrb[0].mxu0
        %v2693 = vadd.f32 %v2293, %v2692
        %v2694 = vpop.f32.mrb[0].mxu0
        %2695 = vmatprep.mubr.bf16.mxu0 %v2093
        %2696 = vmatmul.mubr.bf16.gmra.mrb[0].mxu0 %v2092
        %v2697 = vpop.f32.mrb[0].mxu0
        %v2698 = vadd.f32 %v2293, %v2697
        %v2699 = vpop.f32.mrb[0].mxu0
        %v2700 = vpop.f32.mrb[0].mxu0
        %v2701 = vadd.f32 %v2293, %v2700
        %v2702 = vpop.f32.mrb[0].mxu0
        %2703 = vmatprep.mubr.bf16.mxu0 %v2100
        %2704 = vmatmul.mubr.bf16.gmra.mrb[0].mxu0 %v2099
        %v2705 = vpop.f32.mrb[0].mxu0
        %v2706 = vadd.f32 %v2293, %v2705
        %v2707 = vpop.f32.mrb[0].mxu0
        %v2708 = vpop.f32.mrb[0].mxu0
        %v2709 = vadd.f32 %v2293, %v2708
        %v2710 = vpop.f32.mrb[0].mxu0
        %2711 = vmatprep.mubr.bf16.mxu0 %v2107
        %2712 = vmatmul.mubr.bf16.gmra.mrb[0].mxu0 %v2106
        %v2713 = vpop.f32.mrb[0].mxu0
        %v2714 = vadd.f32 %v2293, %v2713
        %v2715 = vpop.f32.mrb[0].mxu0
        %v2716 = vpop.f32.mrb[0].mxu0
        %v2717 = vadd.f32 %v2293, %v2716
        %v2718 = vpop.f32.mrb[0].mxu0
        %2719 = vmatprep.mubr.bf16.mxu0 %v2114
        %2720 = vmatmul.mubr.bf16.gmra.mrb[0].mxu0 %v2113
        %v2721 = vpop.f32.mrb[0].mxu0
        %v2722 = vadd.f32 %v2293, %v2721
        %v2723 = vpop.f32.mrb[0].mxu0
        %v2724 = vpop.f32.mrb[0].mxu0
        %v2725 = vadd.f32 %v2293, %v2724
        %v2726 = vpop.f32.mrb[0].mxu0
        %2727 = vmatprep.mubr.bf16.mxu0 %v2121
        %2728 = vmatmul.mubr.bf16.gmra.mrb[0].mxu0 %v2120
        %v2729 = vpop.f32.mrb[0].mxu0
        %v2730 = vadd.f32 %v2293, %v2729
        %v2731 = vpop.f32.mrb[0].mxu0
        %v2732 = vpop.f32.mrb[0].mxu0
        %v2733 = vadd.f32 %v2293, %v2732
        %v2734 = vpop.f32.mrb[0].mxu0
        %2735 = vmatprep.mubr.bf16.mxu0 %v2128
        %2736 = vmatmul.mubr.bf16.gmra.mrb[0].mxu0 %v2127
        %v2737 = vpop.f32.mrb[0].mxu0
        %v2738 = vadd.f32 %v2293, %v2737
        %v2739 = vpop.f32.mrb[0].mxu0
        %v2740 = vpop.f32.mrb[0].mxu0
        %v2741 = vadd.f32 %v2293, %v2740
        %v2742 = vpop.f32.mrb[0].mxu0
        %2743 = vmatprep.mubr.bf16.mxu0 %v2135
        %2744 = vmatmul.mubr.bf16.gmra.mrb[0].mxu0 %v2134
        %v2745 = vpop.f32.mrb[0].mxu0
        %v2746 = vadd.f32 %v2293, %v2745
        %v2747 = vpop.f32.mrb[0].mxu0
        %v2748 = vpop.f32.mrb[0].mxu0
        %v2749 = vadd.f32 %v2293, %v2748
        %v2750 = vpop.f32.mrb[0].mxu0
        %2751 = vmatprep.mubr.bf16.mxu0 %v2142
        %2752 = vmatmul.mubr.bf16.gmra.mrb[0].mxu0 %v2141
        %v2753 = vpop.f32.mrb[0].mxu0
        %v2754 = vadd.f32 %v2293, %v2753
        %v2755 = vpop.f32.mrb[0].mxu0
        %v2756 = vpop.f32.mrb[0].mxu0
        %v2757 = vadd.f32 %v2293, %v2756
        %v2758 = vpop.f32.mrb[0].mxu0
        %2759 = vmatprep.mubr.bf16.mxu0 %v2149
        %2760 = vmatmul.mubr.bf16.gmra.mrb[0].mxu0 %v2148
        %v2761 = vpop.f32.mrb[0].mxu0
        %v2762 = vadd.f32 %v2293, %v2761
        %v2763 = vpop.f32.mrb[0].mxu0
        %v2764 = vpop.f32.mrb[0].mxu0
        %v2765 = vadd.f32 %v2293, %v2764
        %v2766 = vpop.f32.mrb[0].mxu0
        %2767 = vmatprep.mubr.bf16.mxu0 %v2156
        %2768 = vmatmul.mubr.bf16.gmra.mrb[0].mxu0 %v2155
        %v2769 = vpop.f32.mrb[0].mxu0
        %v2770 = vadd.f32 %v2293, %v2769
        %v2771 = vpop.f32.mrb[0].mxu0
        %v2772 = vpop.f32.mrb[0].mxu0
        %v2773 = vadd.f32 %v2293, %v2772
        %v2774 = vpop.f32.mrb[0].mxu0
        %2775 = vmatprep.mubr.bf16.mxu0 %v2163
        %2776 = vmatmul.mubr.bf16.gmra.mrb[0].mxu0 %v2162
        %v2777 = vpop.f32.mrb[0].mxu0
        %v2778 = vadd.f32 %v2293, %v2777
        %v2779 = vpop.f32.mrb[0].mxu0
        %v2780 = vpop.f32.mrb[0].mxu0
        %v2781 = vadd.f32 %v2293, %v2780
        %v2782 = vpop.f32.mrb[0].mxu0
        %2783 = vmatprep.mubr.bf16.mxu0 %v2170
        %2784 = vmatmul.mubr.bf16.gmra.mrb[0].mxu0 %v2169
        %v2785 = vpop.f32.mrb[0].mxu0
        %v2786 = vadd.f32 %v2293, %v2785
        %v2787 = vpop.f32.mrb[0].mxu0
        %v2788 = vpop.f32.mrb[0].mxu0
        %v2789 = vadd.f32 %v2293, %v2788
        %v2790 = vpop.f32.mrb[0].mxu0
        %2791 = vdwg.mxu0
        %2792 = vmatprep.subr.bf16.mxu0 0
        %2793 = vmatpush1.bf16.msra.mxu0 %v2535
        %2794 = vmatprep.subr.bf16.mxu0 0
        %2795 = vmatpush1.bf16.msra.mxu0 %v2536
        %2796 = vmatprep.subr.bf16.mxu0 0
        %2797 = vmatpush1.bf16.msra.mxu0 %v2537
        %2798 = vmatprep.subr.bf16.mxu0 0
        %2799 = vmatpush1.bf16.msra.mxu0 %v2538
        %2800 = vmatprep.subr.bf16.mxu0 0
        %2801 = vmatpush1.bf16.msra.mxu0 %v2539
        %2802 = vmatprep.subr.bf16.mxu0 0
        %2803 = vmatpush1.bf16.msra.mxu0 %v2540
        %2804 = vmatprep.subr.bf16.mxu0 0
        %2805 = vmatpush1.bf16.msra.mxu0 %v2541
        %2806 = vmatprep.subr.bf16.mxu0 0
        %2807 = vmatpush1.bf16.msra.mxu0 %v2542
        %2808 = vmatprep.subr.bf16.mxu0 0
        %2809 = vmatpush1.bf16.msra.mxu0 %v2543
        %2810 = vmatprep.subr.bf16.mxu0 0
        %2811 = vmatpush1.bf16.msra.mxu0 %v2544
        %2812 = vmatprep.subr.bf16.mxu0 0
        %2813 = vmatpush1.bf16.msra.mxu0 %v2545
        %2814 = vmatprep.subr.bf16.mxu0 0
        %2815 = vmatpush1.bf16.msra.mxu0 %v2546
        %2816 = vmatprep.subr.bf16.mxu0 0
        %2817 = vmatpush1.bf16.msra.mxu0 %v2547
        %2818 = vmatprep.subr.bf16.mxu0 0
        %2819 = vmatpush1.bf16.msra.mxu0 %v2548
        %2820 = vmatprep.subr.bf16.mxu0 0
        %2821 = vmatpush1.bf16.msra.mxu0 %v2549
        %2822 = vmatprep.subr.bf16.mxu0 0
        %2823 = vmatpush1.bf16.msra.mxu0 %v2550
        %2824 = vmatprep.mubr.bf16.mxu0 %v2067
        %2825 = vmatmul.mubr.bf16.gmra.mrb[0].mxu0 %v2066
        %v2826 = vpop.f32.mrb[0].mxu0
        %v2827 = vadd.f32 %v2666, %v2826
        %v2828 = vpop.f32.mrb[0].mxu0
        %v2829 = vpop.f32.mrb[0].mxu0
        %v2830 = vadd.f32 %v2669, %v2829
        %v2831 = vpop.f32.mrb[0].mxu0
        %2832 = vmatprep.mubr.bf16.mxu0 %v2074
        %2833 = vmatmul.mubr.bf16.gmra.mrb[0].mxu0 %v2073
        %v2834 = vpop.f32.mrb[0].mxu0
        %v2835 = vadd.f32 %v2674, %v2834
        %v2836 = vpop.f32.mrb[0].mxu0
        %v2837 = vpop.f32.mrb[0].mxu0
        %v2838 = vadd.f32 %v2677, %v2837
        %v2839 = vpop.f32.mrb[0].mxu0
        %2840 = vmatprep.mubr.bf16.mxu0 %v2081
        %2841 = vmatmul.mubr.bf16.gmra.mrb[0].mxu0 %v2080
        %v2842 = vpop.f32.mrb[0].mxu0
        %v2843 = vadd.f32 %v2682, %v2842
        %v2844 = vpop.f32.mrb[0].mxu0
        %v2845 = vpop.f32.mrb[0].mxu0
        %v2846 = vadd.f32 %v2685, %v2845
        %v2847 = vpop.f32.mrb[0].mxu0
        %2848 = vmatprep.mubr.bf16.mxu0 %v2088
        %2849 = vmatmul.mubr.bf16.gmra.mrb[0].mxu0 %v2087
        %v2850 = vpop.f32.mrb[0].mxu0
        %v2851 = vadd.f32 %v2690, %v2850
        %v2852 = vpop.f32.mrb[0].mxu0
        %v2853 = vpop.f32.mrb[0].mxu0
        %v2854 = vadd.f32 %v2693, %v2853
        %v2855 = vpop.f32.mrb[0].mxu0
        %2856 = vmatprep.mubr.bf16.mxu0 %v2095
        %2857 = vmatmul.mubr.bf16.gmra.mrb[0].mxu0 %v2094
        %v2858 = vpop.f32.mrb[0].mxu0
        %v2859 = vadd.f32 %v2698, %v2858
        %v2860 = vpop.f32.mrb[0].mxu0
        %v2861 = vpop.f32.mrb[0].mxu0
        %v2862 = vadd.f32 %v2701, %v2861
        %v2863 = vpop.f32.mrb[0].mxu0
        %2864 = vmatprep.mubr.bf16.mxu0 %v2102
        %2865 = vmatmul.mubr.bf16.gmra.mrb[0].mxu0 %v2101
        %v2866 = vpop.f32.mrb[0].mxu0
        %v2867 = vadd.f32 %v2706, %v2866
        %v2868 = vpop.f32.mrb[0].mxu0
        %v2869 = vpop.f32.mrb[0].mxu0
        %v2870 = vadd.f32 %v2709, %v2869
        %v2871 = vpop.f32.mrb[0].mxu0
        %2872 = vmatprep.mubr.bf16.mxu0 %v2109
        %2873 = vmatmul.mubr.bf16.gmra.mrb[0].mxu0 %v2108
        %v2874 = vpop.f32.mrb[0].mxu0
        %v2875 = vadd.f32 %v2714, %v2874
        %v2876 = vpop.f32.mrb[0].mxu0
        %v2877 = vpop.f32.mrb[0].mxu0
        %v2878 = vadd.f32 %v2717, %v2877
        %v2879 = vpop.f32.mrb[0].mxu0
        %2880 = vmatprep.mubr.bf16.mxu0 %v2116
        %2881 = vmatmul.mubr.bf16.gmra.mrb[0].mxu0 %v2115
        %v2882 = vpop.f32.mrb[0].mxu0
        %v2883 = vadd.f32 %v2722, %v2882
        %v2884 = vpop.f32.mrb[0].mxu0
        %v2885 = vpop.f32.mrb[0].mxu0
        %v2886 = vadd.f32 %v2725, %v2885
        %v2887 = vpop.f32.mrb[0].mxu0
        %2888 = vmatprep.mubr.bf16.mxu0 %v2123
        %2889 = vmatmul.mubr.bf16.gmra.mrb[0].mxu0 %v2122
        %v2890 = vpop.f32.mrb[0].mxu0
        %v2891 = vadd.f32 %v2730, %v2890
        %v2892 = vpop.f32.mrb[0].mxu0
        %v2893 = vpop.f32.mrb[0].mxu0
        %v2894 = vadd.f32 %v2733, %v2893
        %v2895 = vpop.f32.mrb[0].mxu0
        %2896 = vmatprep.mubr.bf16.mxu0 %v2130
        %2897 = vmatmul.mubr.bf16.gmra.mrb[0].mxu0 %v2129
        %v2898 = vpop.f32.mrb[0].mxu0
        %v2899 = vadd.f32 %v2738, %v2898
        %v2900 = vpop.f32.mrb[0].mxu0
        %v2901 = vpop.f32.mrb[0].mxu0
        %v2902 = vadd.f32 %v2741, %v2901
        %v2903 = vpop.f32.mrb[0].mxu0
        %2904 = vmatprep.mubr.bf16.mxu0 %v2137
        %2905 = vmatmul.mubr.bf16.gmra.mrb[0].mxu0 %v2136
        %v2906 = vpop.f32.mrb[0].mxu0
        %v2907 = vadd.f32 %v2746, %v2906
        %v2908 = vpop.f32.mrb[0].mxu0
        %v2909 = vpop.f32.mrb[0].mxu0
        %v2910 = vadd.f32 %v2749, %v2909
        %v2911 = vpop.f32.mrb[0].mxu0
        %2912 = vmatprep.mubr.bf16.mxu0 %v2144
        %2913 = vmatmul.mubr.bf16.gmra.mrb[0].mxu0 %v2143
        %v2914 = vpop.f32.mrb[0].mxu0
        %v2915 = vadd.f32 %v2754, %v2914
        %v2916 = vpop.f32.mrb[0].mxu0
        %v2917 = vpop.f32.mrb[0].mxu0
        %v2918 = vadd.f32 %v2757, %v2917
        %v2919 = vpop.f32.mrb[0].mxu0
        %2920 = vmatprep.mubr.bf16.mxu0 %v2151
        %2921 = vmatmul.mubr.bf16.gmra.mrb[0].mxu0 %v2150
        %v2922 = vpop.f32.mrb[0].mxu0
        %v2923 = vadd.f32 %v2762, %v2922
        %v2924 = vpop.f32.mrb[0].mxu0
        %v2925 = vpop.f32.mrb[0].mxu0
        %v2926 = vadd.f32 %v2765, %v2925
        %v2927 = vpop.f32.mrb[0].mxu0
        %2928 = vmatprep.mubr.bf16.mxu0 %v2158
        %2929 = vmatmul.mubr.bf16.gmra.mrb[0].mxu0 %v2157
        %v2930 = vpop.f32.mrb[0].mxu0
        %v2931 = vadd.f32 %v2770, %v2930
        %v2932 = vpop.f32.mrb[0].mxu0
        %v2933 = vpop.f32.mrb[0].mxu0
        %v2934 = vadd.f32 %v2773, %v2933
        %v2935 = vpop.f32.mrb[0].mxu0
        %2936 = vmatprep.mubr.bf16.mxu0 %v2165
        %2937 = vmatmul.mubr.bf16.gmra.mrb[0].mxu0 %v2164
        %v2938 = vpop.f32.mrb[0].mxu0
        %v2939 = vadd.f32 %v2778, %v2938
        %v2940 = vpop.f32.mrb[0].mxu0
        %v2941 = vpop.f32.mrb[0].mxu0
        %v2942 = vadd.f32 %v2781, %v2941
        %v2943 = vpop.f32.mrb[0].mxu0
        %2944 = vmatprep.mubr.bf16.mxu0 %v2172
        %2945 = vmatmul.mubr.bf16.gmra.mrb[0].mxu0 %v2171
        %v2946 = vpop.f32.mrb[0].mxu0
        %v2947 = vadd.f32 %v2786, %v2946
        %v2948 = vpop.f32.mrb[0].mxu0
        %v2949 = vpop.f32.mrb[0].mxu0
        %v2950 = vadd.f32 %v2789, %v2949
        %v2951 = vpop.f32.mrb[0].mxu0
        %2952 = vdwg.mxu0
        %2953 = vmatprep.subr.bf16.mxu0 0
        %2954 = vmatpush1.bf16.msra.mxu0 %v2551
        %2955 = vmatprep.subr.bf16.mxu0 0
        %2956 = vmatpush1.bf16.msra.mxu0 %v2552
        %2957 = vmatprep.subr.bf16.mxu0 0
        %2958 = vmatpush1.bf16.msra.mxu0 %v2553
        %2959 = vmatprep.subr.bf16.mxu0 0
        %2960 = vmatpush1.bf16.msra.mxu0 %v2554
        %2961 = vmatprep.subr.bf16.mxu0 0
        %2962 = vmatpush1.bf16.msra.mxu0 %v2555
        %2963 = vmatprep.subr.bf16.mxu0 0
        %2964 = vmatpush1.bf16.msra.mxu0 %v2556
        %2965 = vmatprep.subr.bf16.mxu0 0
        %2966 = vmatpush1.bf16.msra.mxu0 %v2557
        %2967 = vmatprep.subr.bf16.mxu0 0
        %2968 = vmatpush1.bf16.msra.mxu0 %v2558
        %2969 = vmatprep.subr.bf16.mxu0 0
        %2970 = vmatpush1.bf16.msra.mxu0 %v2559
        %2971 = vmatprep.subr.bf16.mxu0 0
        %2972 = vmatpush1.bf16.msra.mxu0 %v2560
        %2973 = vmatprep.subr.bf16.mxu0 0
        %2974 = vmatpush1.bf16.msra.mxu0 %v2561
        %2975 = vmatprep.subr.bf16.mxu0 0
        %2976 = vmatpush1.bf16.msra.mxu0 %v2562
        %2977 = vmatprep.subr.bf16.mxu0 0
        %2978 = vmatpush1.bf16.msra.mxu0 %v2563
        %2979 = vmatprep.subr.bf16.mxu0 0
        %2980 = vmatpush1.bf16.msra.mxu0 %v2564
        %2981 = vmatprep.subr.bf16.mxu0 0
        %2982 = vmatpush1.bf16.msra.mxu0 %v2565
        %2983 = vmatprep.subr.bf16.mxu0 0
        %2984 = vmatpush1.bf16.msra.mxu0 %v2566
        %2985 = vmatprep.mubr.bf16.mxu0 %v2069
        %2986 = vmatmul.mubr.bf16.gmra.mrb[0].mxu0 %v2068
        %v2987 = vpop.f32.mrb[0].mxu0
        %v2988 = vadd.f32 %v2827, %v2987
        %v2989 = vpop.f32.mrb[0].mxu0
        %v2990 = vpop.f32.mrb[0].mxu0
        %v2991 = vadd.f32 %v2830, %v2990
        %v2992 = vpop.f32.mrb[0].mxu0
        %2993 = vmatprep.mubr.bf16.mxu0 %v2076
        %2994 = vmatmul.mubr.bf16.gmra.mrb[0].mxu0 %v2075
        %v2995 = vpop.f32.mrb[0].mxu0
        %v2996 = vadd.f32 %v2835, %v2995
        %v2997 = vpop.f32.mrb[0].mxu0
        %v2998 = vpop.f32.mrb[0].mxu0
        %v2999 = vadd.f32 %v2838, %v2998
        %v3000 = vpop.f32.mrb[0].mxu0
        %3001 = vmatprep.mubr.bf16.mxu0 %v2083
        %3002 = vmatmul.mubr.bf16.gmra.mrb[0].mxu0 %v2082
        %v3003 = vpop.f32.mrb[0].mxu0
        %v3004 = vadd.f32 %v2843, %v3003
        %v3005 = vpop.f32.mrb[0].mxu0
        %v3006 = vpop.f32.mrb[0].mxu0
        %v3007 = vadd.f32 %v2846, %v3006
        %v3008 = vpop.f32.mrb[0].mxu0
        %3009 = vmatprep.mubr.bf16.mxu0 %v2090
        %3010 = vmatmul.mubr.bf16.gmra.mrb[0].mxu0 %v2089
        %v3011 = vpop.f32.mrb[0].mxu0
        %v3012 = vadd.f32 %v2851, %v3011
        %v3013 = vpop.f32.mrb[0].mxu0
        %v3014 = vpop.f32.mrb[0].mxu0
        %v3015 = vadd.f32 %v2854, %v3014
        %v3016 = vpop.f32.mrb[0].mxu0
        %3017 = vmatprep.mubr.bf16.mxu0 %v2097
        %3018 = vmatmul.mubr.bf16.gmra.mrb[0].mxu0 %v2096
        %v3019 = vpop.f32.mrb[0].mxu0
        %v3020 = vadd.f32 %v2859, %v3019
        %v3021 = vpop.f32.mrb[0].mxu0
        %v3022 = vpop.f32.mrb[0].mxu0
        %v3023 = vadd.f32 %v2862, %v3022
        %v3024 = vpop.f32.mrb[0].mxu0
        %3025 = vmatprep.mubr.bf16.mxu0 %v2104
        %3026 = vmatmul.mubr.bf16.gmra.mrb[0].mxu0 %v2103
        %v3027 = vpop.f32.mrb[0].mxu0
        %v3028 = vadd.f32 %v2867, %v3027
        %v3029 = vpop.f32.mrb[0].mxu0
        %v3030 = vpop.f32.mrb[0].mxu0
        %v3031 = vadd.f32 %v2870, %v3030
        %v3032 = vpop.f32.mrb[0].mxu0
        %3033 = vmatprep.mubr.bf16.mxu0 %v2111
        %3034 = vmatmul.mubr.bf16.gmra.mrb[0].mxu0 %v2110
        %v3035 = vpop.f32.mrb[0].mxu0
        %v3036 = vadd.f32 %v2875, %v3035
        %v3037 = vpop.f32.mrb[0].mxu0
        %v3038 = vpop.f32.mrb[0].mxu0
        %v3039 = vadd.f32 %v2878, %v3038
        %v3040 = vpop.f32.mrb[0].mxu0
        %3041 = vmatprep.mubr.bf16.mxu0 %v2118
        %3042 = vmatmul.mubr.bf16.gmra.mrb[0].mxu0 %v2117
        %v3043 = vpop.f32.mrb[0].mxu0
        %v3044 = vadd.f32 %v2883, %v3043
        %v3045 = vpop.f32.mrb[0].mxu0
        %v3046 = vpop.f32.mrb[0].mxu0
        %v3047 = vadd.f32 %v2886, %v3046
        %v3048 = vpop.f32.mrb[0].mxu0
        %3049 = vmatprep.mubr.bf16.mxu0 %v2125
        %3050 = vmatmul.mubr.bf16.gmra.mrb[0].mxu0 %v2124
        %v3051 = vpop.f32.mrb[0].mxu0
        %v3052 = vadd.f32 %v2891, %v3051
        %v3053 = vpop.f32.mrb[0].mxu0
        %v3054 = vpop.f32.mrb[0].mxu0
        %v3055 = vadd.f32 %v2894, %v3054
        %v3056 = vpop.f32.mrb[0].mxu0
        %3057 = vmatprep.mubr.bf16.mxu0 %v2132
        %3058 = vmatmul.mubr.bf16.gmra.mrb[0].mxu0 %v2131
        %v3059 = vpop.f32.mrb[0].mxu0
        %v3060 = vadd.f32 %v2899, %v3059
        %v3061 = vpop.f32.mrb[0].mxu0
        %v3062 = vpop.f32.mrb[0].mxu0
        %v3063 = vadd.f32 %v2902, %v3062
        %v3064 = vpop.f32.mrb[0].mxu0
        %3065 = vmatprep.mubr.bf16.mxu0 %v2139
        %3066 = vmatmul.mubr.bf16.gmra.mrb[0].mxu0 %v2138
        %v3067 = vpop.f32.mrb[0].mxu0
        %v3068 = vadd.f32 %v2907, %v3067
        %v3069 = vpop.f32.mrb[0].mxu0
        %v3070 = vpop.f32.mrb[0].mxu0
        %v3071 = vadd.f32 %v2910, %v3070
        %v3072 = vpop.f32.mrb[0].mxu0
        %3073 = vmatprep.mubr.bf16.mxu0 %v2146
        %3074 = vmatmul.mubr.bf16.gmra.mrb[0].mxu0 %v2145
        %v3075 = vpop.f32.mrb[0].mxu0
        %v3076 = vadd.f32 %v2915, %v3075
        %v3077 = vpop.f32.mrb[0].mxu0
        %v3078 = vpop.f32.mrb[0].mxu0
        %v3079 = vadd.f32 %v2918, %v3078
        %v3080 = vpop.f32.mrb[0].mxu0
        %3081 = vmatprep.mubr.bf16.mxu0 %v2153
        %3082 = vmatmul.mubr.bf16.gmra.mrb[0].mxu0 %v2152
        %v3083 = vpop.f32.mrb[0].mxu0
        %v3084 = vadd.f32 %v2923, %v3083
        %v3085 = vpop.f32.mrb[0].mxu0
        %v3086 = vpop.f32.mrb[0].mxu0
        %v3087 = vadd.f32 %v2926, %v3086
        %v3088 = vpop.f32.mrb[0].mxu0
        %3089 = vmatprep.mubr.bf16.mxu0 %v2160
        %3090 = vmatmul.mubr.bf16.gmra.mrb[0].mxu0 %v2159
        %v3091 = vpop.f32.mrb[0].mxu0
        %v3092 = vadd.f32 %v2931, %v3091
        %v3093 = vpop.f32.mrb[0].mxu0
        %v3094 = vpop.f32.mrb[0].mxu0
        %v3095 = vadd.f32 %v2934, %v3094
        %v3096 = vpop.f32.mrb[0].mxu0
        %3097 = vmatprep.mubr.bf16.mxu0 %v2167
        %3098 = vmatmul.mubr.bf16.gmra.mrb[0].mxu0 %v2166
        %v3099 = vpop.f32.mrb[0].mxu0
        %v3100 = vadd.f32 %v2939, %v3099
        %v3101 = vpop.f32.mrb[0].mxu0
        %v3102 = vpop.f32.mrb[0].mxu0
        %v3103 = vadd.f32 %v2942, %v3102
        %v3104 = vpop.f32.mrb[0].mxu0
        %3105 = vmatprep.mubr.bf16.mxu0 %v2174
        %3106 = vmatmul.mubr.bf16.gmra.mrb[0].mxu0 %v2173
        %v3107 = vpop.f32.mrb[0].mxu0
        %v3108 = vadd.f32 %v2947, %v3107
        %v3109 = vpop.f32.mrb[0].mxu0
        %v3110 = vpop.f32.mrb[0].mxu0
        %v3111 = vadd.f32 %v2950, %v3110
        %v3112 = vpop.f32.mrb[0].mxu0
        %3113 = vdwg.mxu0
        %3114 = vmatprep.subr.bf16.mxu0 0
        %3115 = vmatpush1.bf16.msra.mxu0 %v2567
        %3116 = vmatprep.subr.bf16.mxu0 0
        %3117 = vmatpush1.bf16.msra.mxu0 %v2568
        %3118 = vmatprep.subr.bf16.mxu0 0
        %3119 = vmatpush1.bf16.msra.mxu0 %v2569
        %3120 = vmatprep.subr.bf16.mxu0 0
        %3121 = vmatpush1.bf16.msra.mxu0 %v2570
        %3122 = vmatprep.subr.bf16.mxu0 0
        %3123 = vmatpush1.bf16.msra.mxu0 %v2571
        %3124 = vmatprep.subr.bf16.mxu0 0
        %3125 = vmatpush1.bf16.msra.mxu0 %v2572
        %3126 = vmatprep.subr.bf16.mxu0 0
        %3127 = vmatpush1.bf16.msra.mxu0 %v2573
        %3128 = vmatprep.subr.bf16.mxu0 0
        %3129 = vmatpush1.bf16.msra.mxu0 %v2574
        %3130 = vmatprep.subr.bf16.mxu0 0
        %3131 = vmatpush1.bf16.msra.mxu0 0
        %3132 = vmatprep.subr.bf16.mxu0 0
        %3133 = vmatpush1.bf16.msra.mxu0 0
        %3134 = vmatprep.subr.bf16.mxu0 0
        %3135 = vmatpush1.bf16.msra.mxu0 0
        %3136 = vmatprep.subr.bf16.mxu0 0
        %3137 = vmatpush1.bf16.msra.mxu0 0
        %3138 = vmatprep.subr.bf16.mxu0 0
        %3139 = vmatpush1.bf16.msra.mxu0 0
        %3140 = vmatprep.subr.bf16.mxu0 0
        %3141 = vmatpush1.bf16.msra.mxu0 0
        %3142 = vmatprep.subr.bf16.mxu0 0
        %3143 = vmatpush1.bf16.msra.mxu0 0
        %3144 = vmatprep.subr.bf16.mxu0 0
        %3145 = vmatpush1.bf16.msra.mxu0 0
        %3146 = vmatprep.mubr.bf16.mxu0 0
        %3147 = vmatmul.mubr.bf16.gmra.mrb[0].mxu0 %v2070
        %v3148 = vpop.f32.mrb[0].mxu0
        %v3149 = vadd.f32 %v2988, %v3148
        %v3150 = vpop.f32.mrb[0].mxu0
        %v3151 = vpop.f32.mrb[0].mxu0
        %v3152 = vadd.f32 %v2991, %v3151
        %v3153 = vpop.f32.mrb[0].mxu0
        %3154 = vmatprep.mubr.bf16.mxu0 0
        %3155 = vmatmul.mubr.bf16.gmra.mrb[0].mxu0 %v2077
        %v3156 = vpop.f32.mrb[0].mxu0
        %v3157 = vadd.f32 %v2996, %v3156
        %v3158 = vpop.f32.mrb[0].mxu0
        %v3159 = vpop.f32.mrb[0].mxu0
        %v3160 = vadd.f32 %v2999, %v3159
        %v3161 = vpop.f32.mrb[0].mxu0
        %3162 = vmatprep.mubr.bf16.mxu0 0
        %3163 = vmatmul.mubr.bf16.gmra.mrb[0].mxu0 %v2084
        %v3164 = vpop.f32.mrb[0].mxu0
        %v3165 = vadd.f32 %v3004, %v3164
        %v3166 = vpop.f32.mrb[0].mxu0
        %v3167 = vpop.f32.mrb[0].mxu0
        %v3168 = vadd.f32 %v3007, %v3167
        %v3169 = vpop.f32.mrb[0].mxu0
        %3170 = vmatprep.mubr.bf16.mxu0 0
        %3171 = vmatmul.mubr.bf16.gmra.mrb[0].mxu0 %v2091
        %v3172 = vpop.f32.mrb[0].mxu0
        %v3173 = vadd.f32 %v3012, %v3172
        %v3174 = vpop.f32.mrb[0].mxu0
        %v3175 = vpop.f32.mrb[0].mxu0
        %v3176 = vadd.f32 %v3015, %v3175
        %v3177 = vpop.f32.mrb[0].mxu0
        %3178 = vmatprep.mubr.bf16.mxu0 0
        %3179 = vmatmul.mubr.bf16.gmra.mrb[0].mxu0 %v2098
        %v3180 = vpop.f32.mrb[0].mxu0
        %v3181 = vadd.f32 %v3020, %v3180
        %v3182 = vpop.f32.mrb[0].mxu0
        %v3183 = vpop.f32.mrb[0].mxu0
        %v3184 = vadd.f32 %v3023, %v3183
        %v3185 = vpop.f32.mrb[0].mxu0
        %3186 = vmatprep.mubr.bf16.mxu0 0
        %3187 = vmatmul.mubr.bf16.gmra.mrb[0].mxu0 %v2105
        %v3188 = vpop.f32.mrb[0].mxu0
        %v3189 = vadd.f32 %v3028, %v3188
        %v3190 = vpop.f32.mrb[0].mxu0
        %v3191 = vpop.f32.mrb[0].mxu0
        %v3192 = vadd.f32 %v3031, %v3191
        %v3193 = vpop.f32.mrb[0].mxu0
        %3194 = vmatprep.mubr.bf16.mxu0 0
        %3195 = vmatmul.mubr.bf16.gmra.mrb[0].mxu0 %v2112
        %v3196 = vpop.f32.mrb[0].mxu0
        %v3197 = vadd.f32 %v3036, %v3196
        %v3198 = vpop.f32.mrb[0].mxu0
        %v3199 = vpop.f32.mrb[0].mxu0
        %v3200 = vadd.f32 %v3039, %v3199
        %v3201 = vpop.f32.mrb[0].mxu0
        %3202 = vmatprep.mubr.bf16.mxu0 0
        %3203 = vmatmul.mubr.bf16.gmra.mrb[0].mxu0 %v2119
        %v3204 = vpop.f32.mrb[0].mxu0
        %v3205 = vadd.f32 %v3044, %v3204
        %v3206 = vpop.f32.mrb[0].mxu0
        %v3207 = vpop.f32.mrb[0].mxu0
        %v3208 = vadd.f32 %v3047, %v3207
        %v3209 = vpop.f32.mrb[0].mxu0
        %3210 = vmatprep.mubr.bf16.mxu0 0
        %3211 = vmatmul.mubr.bf16.gmra.mrb[0].mxu0 %v2126
        %v3212 = vpop.f32.mrb[0].mxu0
        %v3213 = vadd.f32 %v3052, %v3212
        %v3214 = vpop.f32.mrb[0].mxu0
        %v3215 = vpop.f32.mrb[0].mxu0
        %v3216 = vadd.f32 %v3055, %v3215
        %v3217 = vpop.f32.mrb[0].mxu0
        %3218 = vmatprep.mubr.bf16.mxu0 0
        %3219 = vmatmul.mubr.bf16.gmra.mrb[0].mxu0 %v2133
        %v3220 = vpop.f32.mrb[0].mxu0
        %v3221 = vadd.f32 %v3060, %v3220
        %v3222 = vpop.f32.mrb[0].mxu0
        %v3223 = vpop.f32.mrb[0].mxu0
        %v3224 = vadd.f32 %v3063, %v3223
        %v3225 = vpop.f32.mrb[0].mxu0
        %3226 = vmatprep.mubr.bf16.mxu0 0
        %3227 = vmatmul.mubr.bf16.gmra.mrb[0].mxu0 %v2140
        %v3228 = vpop.f32.mrb[0].mxu0
        %v3229 = vadd.f32 %v3068, %v3228
        %v3230 = vpop.f32.mrb[0].mxu0
        %v3231 = vpop.f32.mrb[0].mxu0
        %v3232 = vadd.f32 %v3071, %v3231
        %v3233 = vpop.f32.mrb[0].mxu0
        %3234 = vmatprep.mubr.bf16.mxu0 0
        %3235 = vmatmul.mubr.bf16.gmra.mrb[0].mxu0 %v2147
        %v3236 = vpop.f32.mrb[0].mxu0
        %v3237 = vadd.f32 %v3076, %v3236
        %v3238 = vpop.f32.mrb[0].mxu0
        %v3239 = vpop.f32.mrb[0].mxu0
        %v3240 = vadd.f32 %v3079, %v3239
        %v3241 = vpop.f32.mrb[0].mxu0
        %3242 = vmatprep.mubr.bf16.mxu0 0
        %3243 = vmatmul.mubr.bf16.gmra.mrb[0].mxu0 %v2154
        %v3244 = vpop.f32.mrb[0].mxu0
        %v3245 = vadd.f32 %v3084, %v3244
        %v3246 = vpop.f32.mrb[0].mxu0
        %v3247 = vpop.f32.mrb[0].mxu0
        %v3248 = vadd.f32 %v3087, %v3247
        %v3249 = vpop.f32.mrb[0].mxu0
        %3250 = vmatprep.mubr.bf16.mxu0 0
        %3251 = vmatmul.mubr.bf16.gmra.mrb[0].mxu0 %v2161
        %v3252 = vpop.f32.mrb[0].mxu0
        %v3253 = vadd.f32 %v3092, %v3252
        %v3254 = vpop.f32.mrb[0].mxu0
        %v3255 = vpop.f32.mrb[0].mxu0
        %v3256 = vadd.f32 %v3095, %v3255
        %v3257 = vpop.f32.mrb[0].mxu0
        %3258 = vmatprep.mubr.bf16.mxu0 0
        %3259 = vmatmul.mubr.bf16.gmra.mrb[0].mxu0 %v2168
        %v3260 = vpop.f32.mrb[0].mxu0
        %v3261 = vadd.f32 %v3100, %v3260
        %v3262 = vpop.f32.mrb[0].mxu0
        %v3263 = vpop.f32.mrb[0].mxu0
        %v3264 = vadd.f32 %v3103, %v3263
        %v3265 = vpop.f32.mrb[0].mxu0
        %3266 = vmatprep.mubr.bf16.mxu0 0
        %3267 = vmatmul.mubr.bf16.gmra.mrb[0].mxu0 %v2175
        %v3268 = vpop.f32.mrb[0].mxu0
        %v3269 = vadd.f32 %v3108, %v3268
        %v3270 = vpop.f32.mrb[0].mxu0
        %v3271 = vpop.f32.mrb[0].mxu0
        %v3272 = vadd.f32 %v3111, %v3271
        %v3273 = vpop.f32.mrb[0].mxu0
        %3274 = vdwg.mxu0
        %v3275 = vstv %s366
        %v3276 = vmul.f32 %v3275, %v3149
        %v3277 = vmul.f32 %v3275, %v3152
        %v3278 = vmul.f32 %v3275, %v3157
        %v3279 = vmul.f32 %v3275, %v3160
        %v3280 = vmul.f32 %v3275, %v3165
        %v3281 = vmul.f32 %v3275, %v3168
        %v3282 = vmul.f32 %v3275, %v3173
        %v3283 = vmul.f32 %v3275, %v3176
        %v3284 = vmul.f32 %v3275, %v3181
        %v3285 = vmul.f32 %v3275, %v3184
        %v3286 = vmul.f32 %v3275, %v3189
        %v3287 = vmul.f32 %v3275, %v3192
        %v3288 = vmul.f32 %v3275, %v3197
        %v3289 = vmul.f32 %v3275, %v3200
        %v3290 = vmul.f32 %v3275, %v3205
        %v3291 = vmul.f32 %v3275, %v3208
        %v3292 = vmul.f32 %v3275, %v3213
        %v3293 = vmul.f32 %v3275, %v3216
        %v3294 = vmul.f32 %v3275, %v3221
        %v3295 = vmul.f32 %v3275, %v3224
        %v3296 = vmul.f32 %v3275, %v3229
        %v3297 = vmul.f32 %v3275, %v3232
        %v3298 = vmul.f32 %v3275, %v3237
        %v3299 = vmul.f32 %v3275, %v3240
        %v3300 = vmul.f32 %v3275, %v3245
        %v3301 = vmul.f32 %v3275, %v3248
        %v3302 = vmul.f32 %v3275, %v3253
        %v3303 = vmul.f32 %v3275, %v3256
        %v3304 = vmul.f32 %v3275, %v3261
        %v3305 = vmul.f32 %v3275, %v3264
        %v3306 = vmul.f32 %v3275, %v3269
        %v3307 = vmul.f32 %v3275, %v3272
        %v3308 = vmax.f32 %v3149, %v3276
        %v3309 = vmax.f32 %v3152, %v3277
        %v3310 = vmax.f32 %v3157, %v3278
        %v3311 = vmax.f32 %v3160, %v3279
        %v3312 = vmax.f32 %v3165, %v3280
        %v3313 = vmax.f32 %v3168, %v3281
        %v3314 = vmax.f32 %v3173, %v3282
        %v3315 = vmax.f32 %v3176, %v3283
        %v3316 = vmax.f32 %v3181, %v3284
        %v3317 = vmax.f32 %v3184, %v3285
        %v3318 = vmax.f32 %v3189, %v3286
        %v3319 = vmax.f32 %v3192, %v3287
        %v3320 = vmax.f32 %v3197, %v3288
        %v3321 = vmax.f32 %v3200, %v3289
        %v3322 = vmax.f32 %v3205, %v3290
        %v3323 = vmax.f32 %v3208, %v3291
        %v3324 = vmax.f32 %v3213, %v3292
        %v3325 = vmax.f32 %v3216, %v3293
        %v3326 = vmax.f32 %v3221, %v3294
        %v3327 = vmax.f32 %v3224, %v3295
        %v3328 = vmax.f32 %v3229, %v3296
        %v3329 = vmax.f32 %v3232, %v3297
        %v3330 = vmax.f32 %v3237, %v3298
        %v3331 = vmax.f32 %v3240, %v3299
        %v3332 = vmax.f32 %v3245, %v3300
        %v3333 = vmax.f32 %v3248, %v3301
        %v3334 = vmax.f32 %v3253, %v3302
        %v3335 = vmax.f32 %v3256, %v3303
        %v3336 = vmax.f32 %v3261, %v3304
        %v3337 = vmax.f32 %v3264, %v3305
        %v3338 = vmax.f32 %v3269, %v3306
        %v3339 = vmax.f32 %v3272, %v3307
        %v3340 = vld [vmem:[%s7] sm:$0x1]
        %v3342 = vlaneseq
        %v3343 = vshrl.u32 %v3342, 7
        %v3344 = vsub.s32 0, %v3343
        %v3345 = vrot.slane %v3340, %v3344
        %v3347 = vmul.f32 %v3308, %v3345
        %v3348 = vmul.f32 %v3309, %v3345
        %v3349 = vmul.f32 %v3310, %v3345
        %v3350 = vmul.f32 %v3311, %v3345
        %v3351 = vmul.f32 %v3312, %v3345
        %v3352 = vmul.f32 %v3313, %v3345
        %v3353 = vmul.f32 %v3314, %v3345
        %v3354 = vmul.f32 %v3315, %v3345
        %v3355 = vmul.f32 %v3316, %v3345
        %v3356 = vmul.f32 %v3317, %v3345
        %v3357 = vmul.f32 %v3318, %v3345
        %v3358 = vmul.f32 %v3319, %v3345
        %v3359 = vmul.f32 %v3320, %v3345
        %v3360 = vmul.f32 %v3321, %v3345
        %v3361 = vmul.f32 %v3322, %v3345
        %v3362 = vmul.f32 %v3323, %v3345
        %v3363 = vmul.f32 %v3324, %v3345
        %v3364 = vmul.f32 %v3325, %v3345
        %v3365 = vmul.f32 %v3326, %v3345
        %v3366 = vmul.f32 %v3327, %v3345
        %v3367 = vmul.f32 %v3328, %v3345
        %v3368 = vmul.f32 %v3329, %v3345
        %v3369 = vmul.f32 %v3330, %v3345
        %v3370 = vmul.f32 %v3331, %v3345
        %v3371 = vmul.f32 %v3332, %v3345
        %v3372 = vmul.f32 %v3333, %v3345
        %v3373 = vmul.f32 %v3334, %v3345
        %v3374 = vmul.f32 %v3335, %v3345
        %v3375 = vmul.f32 %v3336, %v3345
        %v3376 = vmul.f32 %v3337, %v3345
        %v3377 = vmul.f32 %v3338, %v3345
        %v3378 = vmul.f32 %v3339, %v3345
        %3379 = vadd.xlane.f32.xlu0 %v3347
        %v3380 = vpop.xlane.xlu0 %3379
        %3381 = vadd.xlane.f32.xlu0 %v3348
        %v3382 = vpop.xlane.xlu0 %3381
        %3383 = vadd.xlane.f32.xlu0 %v3349
        %v3384 = vpop.xlane.xlu0 %3383
        %3385 = vadd.xlane.f32.xlu0 %v3350
        %v3386 = vpop.xlane.xlu0 %3385
        %3387 = vadd.xlane.f32.xlu0 %v3351
        %v3388 = vpop.xlane.xlu0 %3387
        %3389 = vadd.xlane.f32.xlu0 %v3352
        %v3390 = vpop.xlane.xlu0 %3389
        %3391 = vadd.xlane.f32.xlu0 %v3353
        %v3392 = vpop.xlane.xlu0 %3391
        %3393 = vadd.xlane.f32.xlu0 %v3354
        %v3394 = vpop.xlane.xlu0 %3393
        %3395 = vadd.xlane.f32.xlu0 %v3355
        %v3396 = vpop.xlane.xlu0 %3395
        %3397 = vadd.xlane.f32.xlu0 %v3356
        %v3398 = vpop.xlane.xlu0 %3397
        %3399 = vadd.xlane.f32.xlu0 %v3357
        %v3400 = vpop.xlane.xlu0 %3399
        %3401 = vadd.xlane.f32.xlu0 %v3358
        %v3402 = vpop.xlane.xlu0 %3401
        %3403 = vadd.xlane.f32.xlu0 %v3359
        %v3404 = vpop.xlane.xlu0 %3403
        %3405 = vadd.xlane.f32.xlu0 %v3360
        %v3406 = vpop.xlane.xlu0 %3405
        %3407 = vadd.xlane.f32.xlu0 %v3361
        %v3408 = vpop.xlane.xlu0 %3407
        %3409 = vadd.xlane.f32.xlu0 %v3362
        %v3410 = vpop.xlane.xlu0 %3409
        %3411 = vadd.xlane.f32.xlu0 %v3363
        %v3412 = vpop.xlane.xlu0 %3411
        %3413 = vadd.xlane.f32.xlu0 %v3364
        %v3414 = vpop.xlane.xlu0 %3413
        %3415 = vadd.xlane.f32.xlu0 %v3365
        %v3416 = vpop.xlane.xlu0 %3415
        %3417 = vadd.xlane.f32.xlu0 %v3366
        %v3418 = vpop.xlane.xlu0 %3417
        %3419 = vadd.xlane.f32.xlu0 %v3367
        %v3420 = vpop.xlane.xlu0 %3419
        %3421 = vadd.xlane.f32.xlu0 %v3368
        %v3422 = vpop.xlane.xlu0 %3421
        %3423 = vadd.xlane.f32.xlu0 %v3369
        %v3424 = vpop.xlane.xlu0 %3423
        %3425 = vadd.xlane.f32.xlu0 %v3370
        %v3426 = vpop.xlane.xlu0 %3425
        %3427 = vadd.xlane.f32.xlu0 %v3371
        %v3428 = vpop.xlane.xlu0 %3427
        %3429 = vadd.xlane.f32.xlu0 %v3372
        %v3430 = vpop.xlane.xlu0 %3429
        %3431 = vadd.xlane.f32.xlu0 %v3373
        %v3432 = vpop.xlane.xlu0 %3431
        %3433 = vadd.xlane.f32.xlu0 %v3374
        %v3434 = vpop.xlane.xlu0 %3433
        %3435 = vadd.xlane.f32.xlu0 %v3375
        %v3436 = vpop.xlane.xlu0 %3435
        %3437 = vadd.xlane.f32.xlu0 %v3376
        %v3438 = vpop.xlane.xlu0 %3437
        %3439 = vadd.xlane.f32.xlu0 %v3377
        %v3440 = vpop.xlane.xlu0 %3439
        %3441 = vadd.xlane.f32.xlu0 %v3378
        %v3442 = vpop.xlane.xlu0 %3441
        %v3443 = vstv %s367
        %v3444 = vadd.f32 %v3380, %v3443
        %v3445 = vadd.f32 %v3382, %v3443
        %v3446 = vadd.f32 %v3384, %v3443
        %v3447 = vadd.f32 %v3386, %v3443
        %v3448 = vadd.f32 %v3388, %v3443
        %v3449 = vadd.f32 %v3390, %v3443
        %v3450 = vadd.f32 %v3392, %v3443
        %v3451 = vadd.f32 %v3394, %v3443
        %v3452 = vadd.f32 %v3396, %v3443
        %v3453 = vadd.f32 %v3398, %v3443
        %v3454 = vadd.f32 %v3400, %v3443
        %v3455 = vadd.f32 %v3402, %v3443
        %v3456 = vadd.f32 %v3404, %v3443
        %v3457 = vadd.f32 %v3406, %v3443
        %v3458 = vadd.f32 %v3408, %v3443
        %v3459 = vadd.f32 %v3410, %v3443
        %v3460 = vadd.f32 %v3412, %v3443
        %v3461 = vadd.f32 %v3414, %v3443
        %v3462 = vadd.f32 %v3416, %v3443
        %v3463 = vadd.f32 %v3418, %v3443
        %v3464 = vadd.f32 %v3420, %v3443
        %v3465 = vadd.f32 %v3422, %v3443
        %v3466 = vadd.f32 %v3424, %v3443
        %v3467 = vadd.f32 %v3426, %v3443
        %v3468 = vadd.f32 %v3428, %v3443
        %v3469 = vadd.f32 %v3430, %v3443
        %v3470 = vadd.f32 %v3432, %v3443
        %v3471 = vadd.f32 %v3434, %v3443
        %v3472 = vadd.f32 %v3436, %v3443
        %v3473 = vadd.f32 %v3438, %v3443
        %v3474 = vadd.f32 %v3440, %v3443
        %v3475 = vadd.f32 %v3442, %v3443
        %vm3476 = vcmask 7168
        %3477 = vst.msk [vmem:[%s363] sm:$0xff] %vm3476, %v3444
        %3478 = vst.msk [vmem:[%s363 + $0x8] sm:$0xff] %vm3476, %v3445
        %3479 = vst.msk [vmem:[%s363 + $0x10] sm:$0xff] %vm3476, %v3446
        %3480 = vst.msk [vmem:[%s363 + $0x18] sm:$0xff] %vm3476, %v3447
        %3481 = vst.msk [vmem:[%s363 + $0x20] sm:$0xff] %vm3476, %v3448
        %3482 = vst.msk [vmem:[%s363 + $0x28] sm:$0xff] %vm3476, %v3449
        %3483 = vst.msk [vmem:[%s363 + $0x30] sm:$0xff] %vm3476, %v3450
        %3484 = vst.msk [vmem:[%s363 + $0x38] sm:$0xff] %vm3476, %v3451
        %3485 = vst.msk [vmem:[%s363 + $0x40] sm:$0xff] %vm3476, %v3452
        %3486 = vst.msk [vmem:[%s363 + $0x48] sm:$0xff] %vm3476, %v3453
        %3487 = vst.msk [vmem:[%s363 + $0x50] sm:$0xff] %vm3476, %v3454
        %3488 = vst.msk [vmem:[%s363 + $0x58] sm:$0xff] %vm3476, %v3455
        %3489 = vst.msk [vmem:[%s363 + $0x60] sm:$0xff] %vm3476, %v3456
        %3490 = vst.msk [vmem:[%s363 + $0x68] sm:$0xff] %vm3476, %v3457
        %3491 = vst.msk [vmem:[%s363 + $0x70] sm:$0xff] %vm3476, %v3458
        %3492 = vst.msk [vmem:[%s363 + $0x78] sm:$0xff] %vm3476, %v3459
        %3493 = vst.msk [vmem:[%s363 + $0x80] sm:$0xff] %vm3476, %v3460
        %3494 = vst.msk [vmem:[%s363 + $0x88] sm:$0xff] %vm3476, %v3461
        %3495 = vst.msk [vmem:[%s363 + $0x90] sm:$0xff] %vm3476, %v3462
        %3496 = vst.msk [vmem:[%s363 + $0x98] sm:$0xff] %vm3476, %v3463
        %3497 = vst.msk [vmem:[%s363 + $0xa0] sm:$0xff] %vm3476, %v3464
        %3498 = vst.msk [vmem:[%s363 + $0xa8] sm:$0xff] %vm3476, %v3465
        %3499 = vst.msk [vmem:[%s363 + $0xb0] sm:$0xff] %vm3476, %v3466
        %3500 = vst.msk [vmem:[%s363 + $0xb8] sm:$0xff] %vm3476, %v3467
        %3501 = vst.msk [vmem:[%s363 + $0xc0] sm:$0xff] %vm3476, %v3468
        %3502 = vst.msk [vmem:[%s363 + $0xc8] sm:$0xff] %vm3476, %v3469
        %3503 = vst.msk [vmem:[%s363 + $0xd0] sm:$0xff] %vm3476, %v3470
        %3504 = vst.msk [vmem:[%s363 + $0xd8] sm:$0xff] %vm3476, %v3471
        %3505 = vst.msk [vmem:[%s363 + $0xe0] sm:$0xff] %vm3476, %v3472
        %3506 = vst.msk [vmem:[%s363 + $0xe8] sm:$0xff] %vm3476, %v3473
        %3507 = vst.msk [vmem:[%s363 + $0xf0] sm:$0xff] %vm3476, %v3474
        %3508 = vst.msk [vmem:[%s363 + $0xf8] sm:$0xff] %vm3476, %v3475
        %s3509 = smul.u32 32, %s22
        %p3510 = scmp.lt.s32.totalorder %s3509, 63
        %s3511 = scalar_select %p3510, %s3509, 63
        %s3512 = smul.addr %s3511, 8
        %s3513 = scalar_lea.vmem %s9, %s3512
        // Predicated region
        $region65: #{tpu_custom_call.1} parent=55 // pred_check
          %p3514 = pneg %p234
        $region66: #{tpu_custom_call.1} parent=55 // pred_check_branch
          %3516 = sbr.rel (%p3514) target = $region68
        $region67: #{tpu_custom_call.1} parent=55 // pred_region
          %s3517 = smul.u32 32, %s22
        $region68: #{tpu_custom_call.1} parent=55 // pred_fallthru
          _
      $region56: #{tpu_custom_call.1} parent=5 // pred_fallthru
        _
      %p3518 = scmp.le.s32.totalorder 2, %s17
      // Predicated region
      $region69: #{tpu_custom_call.1} parent=5 // pred_check
        %p3519 = pneg %p3518
      $region70: #{tpu_custom_call.1} parent=5 // pred_check_branch
        %3521 = sbr.rel (%p3519) target = $region72
      $region71: #{tpu_custom_call.1} parent=5 // pred_region
        %s3522 = ssub.s32 %s17, 2
        // Predicated region
        $region73: #{tpu_custom_call.1} parent=71 // pred_check
          %p3523 = pneg %p240
        $region74: #{tpu_custom_call.1} parent=71 // pred_check_branch
          %3525 = sbr.rel (%p3523) target = $region76
        $region75: #{tpu_custom_call.1} parent=71 // pred_region
          %s3526 = smul.u32 32, %s23
          %p3527 = scmp.lt.s32.totalorder %s3526, 63
          %s3528 = scalar_select %p3527, %s3526, 63
          %s3529 = smul.addr %s3528, 8
          %s3530 = scalar_lea.vmem %s9, %s3529
        $region76: #{tpu_custom_call.1} parent=71 // pred_fallthru
          _
      $region72: #{tpu_custom_call.1} parent=5 // pred_fallthru
        _
    $region6: #{tpu_custom_call.1} parent=1 // loop_footer
      %s21 = sadd.s32 1, %s17
    $region7: #{tpu_custom_call.1} parent=1 // loop_footer_branch
      %16 = sbr.rel target = $region3
    $region8: #{tpu_custom_call.1} parent=1 // loop_exit
      _
    %3531 = vsyncpa [#allocation3], 1
    %s3532 = scalar_lea.sflag [#allocation3], 1
    %3533 = vsyncpa %s3532, 1
    %3534 = vsyncpa [#allocation4], 1
    %s3535 = scalar_lea.sflag [#allocation4], 1
    %3536 = vsyncpa %s3535, 1

</llo_original>
